<compile_context>
chip_gen: v7x
topology: tpu7x:2x2x1
jax: 0.10.0
libtpu: 0.0.40
codegen_flags: <defaults>
</compile_context>

<pallas_src>
import functools

import jax
import jax.numpy as jnp
from jax.experimental import pallas as pl
from jax.experimental.pallas import tpu as pltpu

EPS = 1e-5  # nn.InstanceNorm2d default


def _fill_shifted_rows(f_ref, img, H, W):
    """Build the reflection-padded, column-shifted row buffer.

    img:   (C, H*W) value, spatial flattened row-major.
    f_ref: (3, C, (H+2)*W) VMEM scratch.  After this call:
        f_ref[dx, c, r*W + w] == xpad[c, r, w + dx]
    where xpad is the 1-pixel reflection-padded (C, H+2, W+2) image.
    Only plain static slice loads/stores are used (no reshapes/transposes).
    """
    for r in range(H + 2):
        src = r - 1
        if src < 0:
            src = 1                      # ReflectionPad2d(1): row -1 -> row 1
        elif src > H - 1:
            src = H - 2                  # row H -> row H-2
        row = img[:, src * W:(src + 1) * W]                  # (C, W)
        base = r * W
        # dx = 1: padded cols 1..W  == the row itself
        f_ref[1, :, base:base + W] = row
        # dx = 0: padded cols 0..W-1 == [row[1], row[0..W-2]]
        f_ref[0, :, base:base + 1] = row[:, 1:2]
        f_ref[0, :, base + 1:base + W] = row[:, 0:W - 1]
        # dx = 2: padded cols 2..W+1 == [row[1..W-1], row[W-2]]
        f_ref[2, :, base:base + W - 1] = row[:, 1:W]
        f_ref[2, :, base + W - 1:base + W] = row[:, W - 2:W - 1]


def _conv3x3_instnorm(f_ref, w_ref, H, W, C):
    """3x3 conv on the shifted-row buffer + InstanceNorm2d(affine=False).

    f_ref: (3, C, (H+2)*W) shifted/padded rows;  w_ref: (3, 3, Cout, Cin).
    Returns (C, H*W) float32 normalized activations (lane-dense spatial axis).
    """
    HW = H * W
    acc = jnp.zeros((C, HW), jnp.float32)
    # 9-tap shift-and-matmul conv: every patch is a contiguous lane slice.
    for dy in range(3):
        for dx in range(3):
            patch = f_ref[dx, :, dy * W:dy * W + HW]         # (Cin, HW)
            acc = acc + jnp.dot(w_ref[dy, dx], patch,
                                preferred_element_type=jnp.float32)
    # Single-pass InstanceNorm statistics over the spatial (lane) axis.
    inv_hw = jnp.float32(1.0 / HW)
    mean = jnp.sum(acc, axis=1, keepdims=True) * inv_hw      # (C, 1)
    ex2 = jnp.sum(acc * acc, axis=1, keepdims=True) * inv_hw
    var = ex2 - mean * mean
    return (acc - mean) * jax.lax.rsqrt(var + EPS)


def _resnet_block_kernel(x_ref, w1_ref, w2_ref, o_ref, f_ref, *, H, W):
    C = x_ref.shape[1]
    x = x_ref[0]                                             # (C, H*W) f32

    # ---- stage 1: reflect-pad -> conv3x3 -> InstanceNorm -> ReLU ----------
    _fill_shifted_rows(f_ref, x, H, W)
    h = jnp.maximum(_conv3x3_instnorm(f_ref, w1_ref, H, W, C), 0.0)
    # (use_dropout=False -> no dropout layer)

    # ---- stage 2: reflect-pad -> conv3x3 -> InstanceNorm -> residual ------
    # `h` never leaves VMEM; the scratch buffer is simply reused.
    _fill_shifted_rows(f_ref, h, H, W)
    y = _conv3x3_instnorm(f_ref, w2_ref, H, W, C)
    o_ref[0] = (x + y).astype(o_ref.dtype)                   # dense store


def resnet_block_forward(x_nchw, w1, b1, w2, b2):
    """x_nchw: (N, C, H, W).  w1/w2: (Cout, Cin, 3, 3) PyTorch OIHW.  b: (C,)."""
    N, C, H, W = x_nchw.shape
    HW = H * W
    # Bias is mathematically cancelled by InstanceNorm(affine=False) -> drop it.
    del b1, b2

    # Channel-major flattened layout: (N, C, H*W) -- a free row-major reshape,
    # no NCHW<->NHWC transpose.  H*W (=256 here) is the lane axis.
    x_flat = x_nchw.reshape(N, C, HW).astype(jnp.float32)
    # OIHW -> (ky, kx, Cout, Cin): each tap w[dy, dx] is a ready MXU operand.
    w1k = jnp.transpose(w1, (2, 3, 0, 1)).astype(jnp.float32)
    w2k = jnp.transpose(w2, (2, 3, 0, 1)).astype(jnp.float32)

    kernel = functools.partial(_resnet_block_kernel, H=H, W=W)
    out_flat = pl.pallas_call(
        kernel,
        out_shape=jax.ShapeDtypeStruct((N, C, HW), jnp.float32),
        grid=(N,),
        in_specs=[
            pl.BlockSpec((1, C, HW), lambda n: (n, 0, 0)),
            pl.BlockSpec((3, 3, C, C), lambda n: (0, 0, 0, 0)),
            pl.BlockSpec((3, 3, C, C), lambda n: (0, 0, 0, 0)),
        ],
        out_specs=pl.BlockSpec((1, C, HW), lambda n: (n, 0, 0)),
        scratch_shapes=[pltpu.VMEM((3, C, (H + 2) * W), jnp.float32)],
        compiler_params=pltpu.CompilerParams(
            dimension_semantics=("parallel",)),
    )(x_flat, w1k, w2k)
    return out_flat.reshape(N, C, H, W)


def ref_forward(x, w1, b1, w2, b2):
    """Pure-JAX reference matching the PyTorch module semantics (NCHW)."""
    def conv(xn, w, b):
        xp = jnp.pad(xn, ((0, 0), (0, 0), (1, 1), (1, 1)), mode="reflect")
        y = jax.lax.conv_general_dilated(
            xp, w, window_strides=(1, 1), padding="VALID",
            dimension_numbers=("NCHW", "OIHW", "NCHW"))
        return y + b[None, :, None, None]

    def inorm(y):
        m = jnp.mean(y, axis=(2, 3), keepdims=True)
        v = jnp.mean((y - m) ** 2, axis=(2, 3), keepdims=True)
        return (y - m) * jax.lax.rsqrt(v + EPS)

    h = jnp.maximum(inorm(conv(x, w1, b1)), 0.0)
    return x + inorm(conv(h, w2, b2))


if __name__ == "__main__":
    N, C, H, W = 2, 4, 16, 16

    key = jax.random.PRNGKey(0)
    kx, kw1, kb1, kw2, kb2 = jax.random.split(key, 5)

    x = jax.random.normal(kx, (N, C, H, W), dtype=jnp.float32)
    w1 = 0.1 * jax.random.normal(kw1, (C, C, 3, 3), dtype=jnp.float32)
    b1 = 0.1 * jax.random.normal(kb1, (C,), dtype=jnp.float32)
    w2 = 0.1 * jax.random.normal(kw2, (C, C, 3, 3), dtype=jnp.float32)
    b2 = 0.1 * jax.random.normal(kb2, (C,), dtype=jnp.float32)

    out = jax.block_until_ready(resnet_block_forward(x, w1, b1, w2, b2))
    ref = jax.block_until_ready(ref_forward(x, w1, b1, w2, b2))

    assert out.shape == (N, C, H, W)
    assert jnp.allclose(out, ref, atol=2e-3, rtol=2e-3), "mismatch vs reference"
    print("KERNEL_OK")
</pallas_src>

<mosaic_0001>
module attributes {stable_mosaic.version = 11 : i64} {
  func.func @_resnet_block_kernel(%arg0: i32, %arg1: memref<1x4x256xf32, #tpu.memory_space<vmem>>, %arg2: memref<3x3x4x4xf32, #tpu.memory_space<vmem>>, %arg3: memref<3x3x4x4xf32, #tpu.memory_space<vmem>>, %arg4: memref<1x4x256xf32, #tpu.memory_space<vmem>>, %arg5: memref<3x4x288xf32, #tpu.memory_space<vmem>>) attributes {dimension_semantics = [#tpu.dimension_semantics<parallel>], iteration_bounds = array<i64: 2>, scalar_prefetch = 0 : i64, scratch_operands = 1 : i64, tpu.core_type = #tpu.core_type<tc>, window_params = [{transform_indices = @transform_0, window_bounds = array<i64: 1, 4, 256>}, {pipeline_mode = #tpu.pipeline_mode<synchronous>, transform_indices = @transform_1, window_bounds = array<i64: 3, 3, 4, 4>}, {pipeline_mode = #tpu.pipeline_mode<synchronous>, transform_indices = @transform_2, window_bounds = array<i64: 3, 3, 4, 4>}, {transform_indices = @transform_3, window_bounds = array<i64: 1, 4, 256>}]} {
    %c0 = arith.constant 0 : index
    %c0_0 = arith.constant 0 : index
    %c0_1 = arith.constant 0 : index
    %0 = vector.load %arg1[%c0, %c0_0, %c0_1] : memref<1x4x256xf32, #tpu.memory_space<vmem>>, vector<1x4x256xf32>
    %1 = vector.shape_cast %0 : vector<1x4x256xf32> to vector<4x256xf32>
    %2 = vector.extract_strided_slice %1 {offsets = [0, 16], sizes = [4, 16], strides = [1, 1]} : vector<4x256xf32> to vector<4x16xf32>
    %c1 = arith.constant 1 : index
    %c0_2 = arith.constant 0 : index
    %c0_3 = arith.constant 0 : index
    %3 = vector.load %arg5[%c1, %c0_2, %c0_3] : memref<3x4x288xf32, #tpu.memory_space<vmem>>, vector<1x4x16xf32>
    %4 = vector.shape_cast %3 : vector<1x4x16xf32> to vector<4x16xf32>
    %5 = vector.shape_cast %2 : vector<4x16xf32> to vector<1x4x16xf32>
    tpu.vector_store %arg5[%c1, %c0_2, %c0_3], %5 {strides = array<i32>} : memref<3x4x288xf32, #tpu.memory_space<vmem>>, vector<1x4x16xf32>,
    %6 = vector.extract_strided_slice %2 {offsets = [0, 1], sizes = [4, 1], strides = [1, 1]} : vector<4x16xf32> to vector<4x1xf32>
    %c0_4 = arith.constant 0 : index
    %c0_5 = arith.constant 0 : index
    %c0_6 = arith.constant 0 : index
    %7 = vector.load %arg5[%c0_4, %c0_5, %c0_6] : memref<3x4x288xf32, #tpu.memory_space<vmem>>, vector<1x4x1xf32>
    %8 = vector.shape_cast %7 : vector<1x4x1xf32> to vector<4x1xf32>
    %9 = vector.shape_cast %6 : vector<4x1xf32> to vector<1x4x1xf32>
    tpu.vector_store %arg5[%c0_4, %c0_5, %c0_6], %9 {strides = array<i32>} : memref<3x4x288xf32, #tpu.memory_space<vmem>>, vector<1x4x1xf32>,
    %10 = vector.extract_strided_slice %2 {offsets = [0, 0], sizes = [4, 15], strides = [1, 1]} : vector<4x16xf32> to vector<4x15xf32>
    %c0_7 = arith.constant 0 : index
    %c0_8 = arith.constant 0 : index
    %c1_9 = arith.constant 1 : index
    %11 = vector.load %arg5[%c0_7, %c0_8, %c1_9] : memref<3x4x288xf32, #tpu.memory_space<vmem>>, vector<1x4x15xf32>
    %12 = vector.shape_cast %11 : vector<1x4x15xf32> to vector<4x15xf32>
    %13 = vector.shape_cast %10 : vector<4x15xf32> to vector<1x4x15xf32>
    tpu.vector_store %arg5[%c0_7, %c0_8, %c1_9], %13 {strides = array<i32>} : memref<3x4x288xf32, #tpu.memory_space<vmem>>, vector<1x4x15xf32>,
    %14 = vector.extract_strided_slice %2 {offsets = [0, 1], sizes = [4, 15], strides = [1, 1]} : vector<4x16xf32> to vector<4x15xf32>
    %c2 = arith.constant 2 : index
    %c0_10 = arith.constant 0 : index
    %c0_11 = arith.constant 0 : index
    %15 = vector.load %arg5[%c2, %c0_10, %c0_11] : memref<3x4x288xf32, #tpu.memory_space<vmem>>, vector<1x4x15xf32>
    %16 = vector.shape_cast %15 : vector<1x4x15xf32> to vector<4x15xf32>
    %17 = vector.shape_cast %14 : vector<4x15xf32> to vector<1x4x15xf32>
    tpu.vector_store %arg5[%c2, %c0_10, %c0_11], %17 {strides = array<i32>} : memref<3x4x288xf32, #tpu.memory_space<vmem>>, vector<1x4x15xf32>,
    %18 = vector.extract_strided_slice %2 {offsets = [0, 14], sizes = [4, 1], strides = [1, 1]} : vector<4x16xf32> to vector<4x1xf32>
    %c2_12 = arith.constant 2 : index
    %c0_13 = arith.constant 0 : index
    %c15 = arith.constant 15 : index
    %19 = vector.load %arg5[%c2_12, %c0_13, %c15] : memref<3x4x288xf32, #tpu.memory_space<vmem>>, vector<1x4x1xf32>
    %20 = vector.shape_cast %19 : vector<1x4x1xf32> to vector<4x1xf32>
    %21 = vector.shape_cast %18 : vector<4x1xf32> to vector<1x4x1xf32>
    tpu.vector_store %arg5[%c2_12, %c0_13, %c15], %21 {strides = array<i32>} : memref<3x4x288xf32, #tpu.memory_space<vmem>>, vector<1x4x1xf32>,
    %22 = vector.extract_strided_slice %1 {offsets = [0, 0], sizes = [4, 16], strides = [1, 1]} : vector<4x256xf32> to vector<4x16xf32>
    %c1_14 = arith.constant 1 : index
    %c0_15 = arith.constant 0 : index
    %c16 = arith.constant 16 : index
    %23 = vector.load %arg5[%c1_14, %c0_15, %c16] : memref<3x4x288xf32, #tpu.memory_space<vmem>>, vector<1x4x16xf32>
    %24 = vector.shape_cast %23 : vector<1x4x16xf32> to vector<4x16xf32>
    %25 = vector.shape_cast %22 : vector<4x16xf32> to vector<1x4x16xf32>
    tpu.vector_store %arg5[%c1_14, %c0_15, %c16], %25 {strides = array<i32>} : memref<3x4x288xf32, #tpu.memory_space<vmem>>, vector<1x4x16xf32>,
    %26 = vector.extract_strided_slice %22 {offsets = [0, 1], sizes = [4, 1], strides = [1, 1]} : vector<4x16xf32> to vector<4x1xf32>
    %c0_16 = arith.constant 0 : index
    %c0_17 = arith.constant 0 : index
    %c16_18 = arith.constant 16 : index
    %27 = vector.load %arg5[%c0_16, %c0_17, %c16_18] : memref<3x4x288xf32, #tpu.memory_space<vmem>>, vector<1x4x1xf32>
    %28 = vector.shape_cast %27 : vector<1x4x1xf32> to vector<4x1xf32>
    %29 = vector.shape_cast %26 : vector<4x1xf32> to vector<1x4x1xf32>
    tpu.vector_store %arg5[%c0_16, %c0_17, %c16_18], %29 {strides = array<i32>} : memref<3x4x288xf32, #tpu.memory_space<vmem>>, vector<1x4x1xf32>,
    %30 = vector.extract_strided_slice %22 {offsets = [0, 0], sizes = [4, 15], strides = [1, 1]} : vector<4x16xf32> to vector<4x15xf32>
    %c0_19 = arith.constant 0 : index
    %c0_20 = arith.constant 0 : index
    %c17 = arith.constant 17 : index
    %31 = vector.load %arg5[%c0_19, %c0_20, %c17] : memref<3x4x288xf32, #tpu.memory_space<vmem>>, vector<1x4x15xf32>
    %32 = vector.shape_cast %31 : vector<1x4x15xf32> to vector<4x15xf32>
    %33 = vector.shape_cast %30 : vector<4x15xf32> to vector<1x4x15xf32>
    tpu.vector_store %arg5[%c0_19, %c0_20, %c17], %33 {strides = array<i32>} : memref<3x4x288xf32, #tpu.memory_space<vmem>>, vector<1x4x15xf32>,
    %34 = vector.extract_strided_slice %22 {offsets = [0, 1], sizes = [4, 15], strides = [1, 1]} : vector<4x16xf32> to vector<4x15xf32>
    %c2_21 = arith.constant 2 : index
    %c0_22 = arith.constant 0 : index
    %c16_23 = arith.constant 16 : index
    %35 = vector.load %arg5[%c2_21, %c0_22, %c16_23] : memref<3x4x288xf32, #tpu.memory_space<vmem>>, vector<1x4x15xf32>
    %36 = vector.shape_cast %35 : vector<1x4x15xf32> to vector<4x15xf32>
    %37 = vector.shape_cast %34 : vector<4x15xf32> to vector<1x4x15xf32>
    tpu.vector_store %arg5[%c2_21, %c0_22, %c16_23], %37 {strides = array<i32>} : memref<3x4x288xf32, #tpu.memory_space<vmem>>, vector<1x4x15xf32>,
    %38 = vector.extract_strided_slice %22 {offsets = [0, 14], sizes = [4, 1], strides = [1, 1]} : vector<4x16xf32> to vector<4x1xf32>
    %c2_24 = arith.constant 2 : index
    %c0_25 = arith.constant 0 : index
    %c31 = arith.constant 31 : index
    %39 = vector.load %arg5[%c2_24, %c0_25, %c31] : memref<3x4x288xf32, #tpu.memory_space<vmem>>, vector<1x4x1xf32>
    %40 = vector.shape_cast %39 : vector<1x4x1xf32> to vector<4x1xf32>
    %41 = vector.shape_cast %38 : vector<4x1xf32> to vector<1x4x1xf32>
    tpu.vector_store %arg5[%c2_24, %c0_25, %c31], %41 {strides = array<i32>} : memref<3x4x288xf32, #tpu.memory_space<vmem>>, vector<1x4x1xf32>,
    %42 = vector.extract_strided_slice %1 {offsets = [0, 16], sizes = [4, 16], strides = [1, 1]} : vector<4x256xf32> to vector<4x16xf32>
    %c1_26 = arith.constant 1 : index
    %c0_27 = arith.constant 0 : index
    %c32 = arith.constant 32 : index
    %43 = vector.load %arg5[%c1_26, %c0_27, %c32] : memref<3x4x288xf32, #tpu.memory_space<vmem>>, vector<1x4x16xf32>
    %44 = vector.shape_cast %43 : vector<1x4x16xf32> to vector<4x16xf32>
    %45 = vector.shape_cast %42 : vector<4x16xf32> to vector<1x4x16xf32>
    tpu.vector_store %arg5[%c1_26, %c0_27, %c32], %45 {strides = array<i32>} : memref<3x4x288xf32, #tpu.memory_space<vmem>>, vector<1x4x16xf32>,
    %46 = vector.extract_strided_slice %42 {offsets = [0, 1], sizes = [4, 1], strides = [1, 1]} : vector<4x16xf32> to vector<4x1xf32>
    %c0_28 = arith.constant 0 : index
    %c0_29 = arith.constant 0 : index
    %c32_30 = arith.constant 32 : index
    %47 = vector.load %arg5[%c0_28, %c0_29, %c32_30] : memref<3x4x288xf32, #tpu.memory_space<vmem>>, vector<1x4x1xf32>
    %48 = vector.shape_cast %47 : vector<1x4x1xf32> to vector<4x1xf32>
    %49 = vector.shape_cast %46 : vector<4x1xf32> to vector<1x4x1xf32>
    tpu.vector_store %arg5[%c0_28, %c0_29, %c32_30], %49 {strides = array<i32>} : memref<3x4x288xf32, #tpu.memory_space<vmem>>, vector<1x4x1xf32>,
    %50 = vector.extract_strided_slice %42 {offsets = [0, 0], sizes = [4, 15], strides = [1, 1]} : vector<4x16xf32> to vector<4x15xf32>
    %c0_31 = arith.constant 0 : index
    %c0_32 = arith.constant 0 : index
    %c33 = arith.constant 33 : index
    %51 = vector.load %arg5[%c0_31, %c0_32, %c33] : memref<3x4x288xf32, #tpu.memory_space<vmem>>, vector<1x4x15xf32>
    %52 = vector.shape_cast %51 : vector<1x4x15xf32> to vector<4x15xf32>
    %53 = vector.shape_cast %50 : vector<4x15xf32> to vector<1x4x15xf32>
    tpu.vector_store %arg5[%c0_31, %c0_32, %c33], %53 {strides = array<i32>} : memref<3x4x288xf32, #tpu.memory_space<vmem>>, vector<1x4x15xf32>,
    %54 = vector.extract_strided_slice %42 {offsets = [0, 1], sizes = [4, 15], strides = [1, 1]} : vector<4x16xf32> to vector<4x15xf32>
    %c2_33 = arith.constant 2 : index
    %c0_34 = arith.constant 0 : index
    %c32_35 = arith.constant 32 : index
    %55 = vector.load %arg5[%c2_33, %c0_34, %c32_35] : memref<3x4x288xf32, #tpu.memory_space<vmem>>, vector<1x4x15xf32>
    %56 = vector.shape_cast %55 : vector<1x4x15xf32> to vector<4x15xf32>
    %57 = vector.shape_cast %54 : vector<4x15xf32> to vector<1x4x15xf32>
    tpu.vector_store %arg5[%c2_33, %c0_34, %c32_35], %57 {strides = array<i32>} : memref<3x4x288xf32, #tpu.memory_space<vmem>>, vector<1x4x15xf32>,
    %58 = vector.extract_strided_slice %42 {offsets = [0, 14], sizes = [4, 1], strides = [1, 1]} : vector<4x16xf32> to vector<4x1xf32>
    %c2_36 = arith.constant 2 : index
    %c0_37 = arith.constant 0 : index
    %c47 = arith.constant 47 : index
    %59 = vector.load %arg5[%c2_36, %c0_37, %c47] : memref<3x4x288xf32, #tpu.memory_space<vmem>>, vector<1x4x1xf32>
    %60 = vector.shape_cast %59 : vector<1x4x1xf32> to vector<4x1xf32>
    %61 = vector.shape_cast %58 : vector<4x1xf32> to vector<1x4x1xf32>
    tpu.vector_store %arg5[%c2_36, %c0_37, %c47], %61 {strides = array<i32>} : memref<3x4x288xf32, #tpu.memory_space<vmem>>, vector<1x4x1xf32>,
    %62 = vector.extract_strided_slice %1 {offsets = [0, 32], sizes = [4, 16], strides = [1, 1]} : vector<4x256xf32> to vector<4x16xf32>
    %c1_38 = arith.constant 1 : index
    %c0_39 = arith.constant 0 : index
    %c48 = arith.constant 48 : index
    %63 = vector.load %arg5[%c1_38, %c0_39, %c48] : memref<3x4x288xf32, #tpu.memory_space<vmem>>, vector<1x4x16xf32>
    %64 = vector.shape_cast %63 : vector<1x4x16xf32> to vector<4x16xf32>
    %65 = vector.shape_cast %62 : vector<4x16xf32> to vector<1x4x16xf32>
    tpu.vector_store %arg5[%c1_38, %c0_39, %c48], %65 {strides = array<i32>} : memref<3x4x288xf32, #tpu.memory_space<vmem>>, vector<1x4x16xf32>,
    %66 = vector.extract_strided_slice %62 {offsets = [0, 1], sizes = [4, 1], strides = [1, 1]} : vector<4x16xf32> to vector<4x1xf32>
    %c0_40 = arith.constant 0 : index
    %c0_41 = arith.constant 0 : index
    %c48_42 = arith.constant 48 : index
    %67 = vector.load %arg5[%c0_40, %c0_41, %c48_42] : memref<3x4x288xf32, #tpu.memory_space<vmem>>, vector<1x4x1xf32>
    %68 = vector.shape_cast %67 : vector<1x4x1xf32> to vector<4x1xf32>
    %69 = vector.shape_cast %66 : vector<4x1xf32> to vector<1x4x1xf32>
    tpu.vector_store %arg5[%c0_40, %c0_41, %c48_42], %69 {strides = array<i32>} : memref<3x4x288xf32, #tpu.memory_space<vmem>>, vector<1x4x1xf32>,
    %70 = vector.extract_strided_slice %62 {offsets = [0, 0], sizes = [4, 15], strides = [1, 1]} : vector<4x16xf32> to vector<4x15xf32>
    %c0_43 = arith.constant 0 : index
    %c0_44 = arith.constant 0 : index
    %c49 = arith.constant 49 : index
    %71 = vector.load %arg5[%c0_43, %c0_44, %c49] : memref<3x4x288xf32, #tpu.memory_space<vmem>>, vector<1x4x15xf32>
    %72 = vector.shape_cast %71 : vector<1x4x15xf32> to vector<4x15xf32>
    %73 = vector.shape_cast %70 : vector<4x15xf32> to vector<1x4x15xf32>
    tpu.vector_store %arg5[%c0_43, %c0_44, %c49], %73 {strides = array<i32>} : memref<3x4x288xf32, #tpu.memory_space<vmem>>, vector<1x4x15xf32>,
    %74 = vector.extract_strided_slice %62 {offsets = [0, 1], sizes = [4, 15], strides = [1, 1]} : vector<4x16xf32> to vector<4x15xf32>
    %c2_45 = arith.constant 2 : index
    %c0_46 = arith.constant 0 : index
    %c48_47 = arith.constant 48 : index
    %75 = vector.load %arg5[%c2_45, %c0_46, %c48_47] : memref<3x4x288xf32, #tpu.memory_space<vmem>>, vector<1x4x15xf32>
    %76 = vector.shape_cast %75 : vector<1x4x15xf32> to vector<4x15xf32>
    %77 = vector.shape_cast %74 : vector<4x15xf32> to vector<1x4x15xf32>
    tpu.vector_store %arg5[%c2_45, %c0_46, %c48_47], %77 {strides = array<i32>} : memref<3x4x288xf32, #tpu.memory_space<vmem>>, vector<1x4x15xf32>,
    %78 = vector.extract_strided_slice %62 {offsets = [0, 14], sizes = [4, 1], strides = [1, 1]} : vector<4x16xf32> to vector<4x1xf32>
    %c2_48 = arith.constant 2 : index
    %c0_49 = arith.constant 0 : index
    %c63 = arith.constant 63 : index
    %79 = vector.load %arg5[%c2_48, %c0_49, %c63] : memref<3x4x288xf32, #tpu.memory_space<vmem>>, vector<1x4x1xf32>
    %80 = vector.shape_cast %79 : vector<1x4x1xf32> to vector<4x1xf32>
    %81 = vector.shape_cast %78 : vector<4x1xf32> to vector<1x4x1xf32>
    tpu.vector_store %arg5[%c2_48, %c0_49, %c63], %81 {strides = array<i32>} : memref<3x4x288xf32, #tpu.memory_space<vmem>>, vector<1x4x1xf32>,
    %82 = vector.extract_strided_slice %1 {offsets = [0, 48], sizes = [4, 16], strides = [1, 1]} : vector<4x256xf32> to vector<4x16xf32>
    %c1_50 = arith.constant 1 : index
    %c0_51 = arith.constant 0 : index
    %c64 = arith.constant 64 : index
    %83 = vector.load %arg5[%c1_50, %c0_51, %c64] : memref<3x4x288xf32, #tpu.memory_space<vmem>>, vector<1x4x16xf32>
    %84 = vector.shape_cast %83 : vector<1x4x16xf32> to vector<4x16xf32>
    %85 = vector.shape_cast %82 : vector<4x16xf32> to vector<1x4x16xf32>
    tpu.vector_store %arg5[%c1_50, %c0_51, %c64], %85 {strides = array<i32>} : memref<3x4x288xf32, #tpu.memory_space<vmem>>, vector<1x4x16xf32>,
    %86 = vector.extract_strided_slice %82 {offsets = [0, 1], sizes = [4, 1], strides = [1, 1]} : vector<4x16xf32> to vector<4x1xf32>
    %c0_52 = arith.constant 0 : index
    %c0_53 = arith.constant 0 : index
    %c64_54 = arith.constant 64 : index
    %87 = vector.load %arg5[%c0_52, %c0_53, %c64_54] : memref<3x4x288xf32, #tpu.memory_space<vmem>>, vector<1x4x1xf32>
    %88 = vector.shape_cast %87 : vector<1x4x1xf32> to vector<4x1xf32>
    %89 = vector.shape_cast %86 : vector<4x1xf32> to vector<1x4x1xf32>
    tpu.vector_store %arg5[%c0_52, %c0_53, %c64_54], %89 {strides = array<i32>} : memref<3x4x288xf32, #tpu.memory_space<vmem>>, vector<1x4x1xf32>,
    %90 = vector.extract_strided_slice %82 {offsets = [0, 0], sizes = [4, 15], strides = [1, 1]} : vector<4x16xf32> to vector<4x15xf32>
    %c0_55 = arith.constant 0 : index
    %c0_56 = arith.constant 0 : index
    %c65 = arith.constant 65 : index
    %91 = vector.load %arg5[%c0_55, %c0_56, %c65] : memref<3x4x288xf32, #tpu.memory_space<vmem>>, vector<1x4x15xf32>
    %92 = vector.shape_cast %91 : vector<1x4x15xf32> to vector<4x15xf32>
    %93 = vector.shape_cast %90 : vector<4x15xf32> to vector<1x4x15xf32>
    tpu.vector_store %arg5[%c0_55, %c0_56, %c65], %93 {strides = array<i32>} : memref<3x4x288xf32, #tpu.memory_space<vmem>>, vector<1x4x15xf32>,
    %94 = vector.extract_strided_slice %82 {offsets = [0, 1], sizes = [4, 15], strides = [1, 1]} : vector<4x16xf32> to vector<4x15xf32>
    %c2_57 = arith.constant 2 : index
    %c0_58 = arith.constant 0 : index
    %c64_59 = arith.constant 64 : index
    %95 = vector.load %arg5[%c2_57, %c0_58, %c64_59] : memref<3x4x288xf32, #tpu.memory_space<vmem>>, vector<1x4x15xf32>
    %96 = vector.shape_cast %95 : vector<1x4x15xf32> to vector<4x15xf32>
    %97 = vector.shape_cast %94 : vector<4x15xf32> to vector<1x4x15xf32>
    tpu.vector_store %arg5[%c2_57, %c0_58, %c64_59], %97 {strides = array<i32>} : memref<3x4x288xf32, #tpu.memory_space<vmem>>, vector<1x4x15xf32>,
    %98 = vector.extract_strided_slice %82 {offsets = [0, 14], sizes = [4, 1], strides = [1, 1]} : vector<4x16xf32> to vector<4x1xf32>
    %c2_60 = arith.constant 2 : index
    %c0_61 = arith.constant 0 : index
    %c79 = arith.constant 79 : index
    %99 = vector.load %arg5[%c2_60, %c0_61, %c79] : memref<3x4x288xf32, #tpu.memory_space<vmem>>, vector<1x4x1xf32>
    %100 = vector.shape_cast %99 : vector<1x4x1xf32> to vector<4x1xf32>
    %101 = vector.shape_cast %98 : vector<4x1xf32> to vector<1x4x1xf32>
    tpu.vector_store %arg5[%c2_60, %c0_61, %c79], %101 {strides = array<i32>} : memref<3x4x288xf32, #tpu.memory_space<vmem>>, vector<1x4x1xf32>,
    %102 = vector.extract_strided_slice %1 {offsets = [0, 64], sizes = [4, 16], strides = [1, 1]} : vector<4x256xf32> to vector<4x16xf32>
    %c1_62 = arith.constant 1 : index
    %c0_63 = arith.constant 0 : index
    %c80 = arith.constant 80 : index
    %103 = vector.load %arg5[%c1_62, %c0_63, %c80] : memref<3x4x288xf32, #tpu.memory_space<vmem>>, vector<1x4x16xf32>
    %104 = vector.shape_cast %103 : vector<1x4x16xf32> to vector<4x16xf32>
    %105 = vector.shape_cast %102 : vector<4x16xf32> to vector<1x4x16xf32>
    tpu.vector_store %arg5[%c1_62, %c0_63, %c80], %105 {strides = array<i32>} : memref<3x4x288xf32, #tpu.memory_space<vmem>>, vector<1x4x16xf32>,
    %106 = vector.extract_strided_slice %102 {offsets = [0, 1], sizes = [4, 1], strides = [1, 1]} : vector<4x16xf32> to vector<4x1xf32>
    %c0_64 = arith.constant 0 : index
    %c0_65 = arith.constant 0 : index
    %c80_66 = arith.constant 80 : index
    %107 = vector.load %arg5[%c0_64, %c0_65, %c80_66] : memref<3x4x288xf32, #tpu.memory_space<vmem>>, vector<1x4x1xf32>
    %108 = vector.shape_cast %107 : vector<1x4x1xf32> to vector<4x1xf32>
    %109 = vector.shape_cast %106 : vector<4x1xf32> to vector<1x4x1xf32>
    tpu.vector_store %arg5[%c0_64, %c0_65, %c80_66], %109 {strides = array<i32>} : memref<3x4x288xf32, #tpu.memory_space<vmem>>, vector<1x4x1xf32>,
    %110 = vector.extract_strided_slice %102 {offsets = [0, 0], sizes = [4, 15], strides = [1, 1]} : vector<4x16xf32> to vector<4x15xf32>
    %c0_67 = arith.constant 0 : index
    %c0_68 = arith.constant 0 : index
    %c81 = arith.constant 81 : index
    %111 = vector.load %arg5[%c0_67, %c0_68, %c81] : memref<3x4x288xf32, #tpu.memory_space<vmem>>, vector<1x4x15xf32>
    %112 = vector.shape_cast %111 : vector<1x4x15xf32> to vector<4x15xf32>
    %113 = vector.shape_cast %110 : vector<4x15xf32> to vector<1x4x15xf32>
    tpu.vector_store %arg5[%c0_67, %c0_68, %c81], %113 {strides = array<i32>} : memref<3x4x288xf32, #tpu.memory_space<vmem>>, vector<1x4x15xf32>,
    %114 = vector.extract_strided_slice %102 {offsets = [0, 1], sizes = [4, 15], strides = [1, 1]} : vector<4x16xf32> to vector<4x15xf32>
    %c2_69 = arith.constant 2 : index
    %c0_70 = arith.constant 0 : index
    %c80_71 = arith.constant 80 : index
    %115 = vector.load %arg5[%c2_69, %c0_70, %c80_71] : memref<3x4x288xf32, #tpu.memory_space<vmem>>, vector<1x4x15xf32>
    %116 = vector.shape_cast %115 : vector<1x4x15xf32> to vector<4x15xf32>
    %117 = vector.shape_cast %114 : vector<4x15xf32> to vector<1x4x15xf32>
    tpu.vector_store %arg5[%c2_69, %c0_70, %c80_71], %117 {strides = array<i32>} : memref<3x4x288xf32, #tpu.memory_space<vmem>>, vector<1x4x15xf32>,
    %118 = vector.extract_strided_slice %102 {offsets = [0, 14], sizes = [4, 1], strides = [1, 1]} : vector<4x16xf32> to vector<4x1xf32>
    %c2_72 = arith.constant 2 : index
    %c0_73 = arith.constant 0 : index
    %c95 = arith.constant 95 : index
    %119 = vector.load %arg5[%c2_72, %c0_73, %c95] : memref<3x4x288xf32, #tpu.memory_space<vmem>>, vector<1x4x1xf32>
    %120 = vector.shape_cast %119 : vector<1x4x1xf32> to vector<4x1xf32>
    %121 = vector.shape_cast %118 : vector<4x1xf32> to vector<1x4x1xf32>
    tpu.vector_store %arg5[%c2_72, %c0_73, %c95], %121 {strides = array<i32>} : memref<3x4x288xf32, #tpu.memory_space<vmem>>, vector<1x4x1xf32>,
    %122 = vector.extract_strided_slice %1 {offsets = [0, 80], sizes = [4, 16], strides = [1, 1]} : vector<4x256xf32> to vector<4x16xf32>
    %c1_74 = arith.constant 1 : index
    %c0_75 = arith.constant 0 : index
    %c96 = arith.constant 96 : index
    %123 = vector.load %arg5[%c1_74, %c0_75, %c96] : memref<3x4x288xf32, #tpu.memory_space<vmem>>, vector<1x4x16xf32>
    %124 = vector.shape_cast %123 : vector<1x4x16xf32> to vector<4x16xf32>
    %125 = vector.shape_cast %122 : vector<4x16xf32> to vector<1x4x16xf32>
    tpu.vector_store %arg5[%c1_74, %c0_75, %c96], %125 {strides = array<i32>} : memref<3x4x288xf32, #tpu.memory_space<vmem>>, vector<1x4x16xf32>,
    %126 = vector.extract_strided_slice %122 {offsets = [0, 1], sizes = [4, 1], strides = [1, 1]} : vector<4x16xf32> to vector<4x1xf32>
    %c0_76 = arith.constant 0 : index
    %c0_77 = arith.constant 0 : index
    %c96_78 = arith.constant 96 : index
    %127 = vector.load %arg5[%c0_76, %c0_77, %c96_78] : memref<3x4x288xf32, #tpu.memory_space<vmem>>, vector<1x4x1xf32>
    %128 = vector.shape_cast %127 : vector<1x4x1xf32> to vector<4x1xf32>
    %129 = vector.shape_cast %126 : vector<4x1xf32> to vector<1x4x1xf32>
    tpu.vector_store %arg5[%c0_76, %c0_77, %c96_78], %129 {strides = array<i32>} : memref<3x4x288xf32, #tpu.memory_space<vmem>>, vector<1x4x1xf32>,
    %130 = vector.extract_strided_slice %122 {offsets = [0, 0], sizes = [4, 15], strides = [1, 1]} : vector<4x16xf32> to vector<4x15xf32>
    %c0_79 = arith.constant 0 : index
    %c0_80 = arith.constant 0 : index
    %c97 = arith.constant 97 : index
    %131 = vector.load %arg5[%c0_79, %c0_80, %c97] : memref<3x4x288xf32, #tpu.memory_space<vmem>>, vector<1x4x15xf32>
    %132 = vector.shape_cast %131 : vector<1x4x15xf32> to vector<4x15xf32>
    %133 = vector.shape_cast %130 : vector<4x15xf32> to vector<1x4x15xf32>
    tpu.vector_store %arg5[%c0_79, %c0_80, %c97], %133 {strides = array<i32>} : memref<3x4x288xf32, #tpu.memory_space<vmem>>, vector<1x4x15xf32>,
    %134 = vector.extract_strided_slice %122 {offsets = [0, 1], sizes = [4, 15], strides = [1, 1]} : vector<4x16xf32> to vector<4x15xf32>
    %c2_81 = arith.constant 2 : index
    %c0_82 = arith.constant 0 : index
    %c96_83 = arith.constant 96 : index
    %135 = vector.load %arg5[%c2_81, %c0_82, %c96_83] : memref<3x4x288xf32, #tpu.memory_space<vmem>>, vector<1x4x15xf32>
    %136 = vector.shape_cast %135 : vector<1x4x15xf32> to vector<4x15xf32>
    %137 = vector.shape_cast %134 : vector<4x15xf32> to vector<1x4x15xf32>
    tpu.vector_store %arg5[%c2_81, %c0_82, %c96_83], %137 {strides = array<i32>} : memref<3x4x288xf32, #tpu.memory_space<vmem>>, vector<1x4x15xf32>,
    %138 = vector.extract_strided_slice %122 {offsets = [0, 14], sizes = [4, 1], strides = [1, 1]} : vector<4x16xf32> to vector<4x1xf32>
    %c2_84 = arith.constant 2 : index
    %c0_85 = arith.constant 0 : index
    %c111 = arith.constant 111 : index
    %139 = vector.load %arg5[%c2_84, %c0_85, %c111] : memref<3x4x288xf32, #tpu.memory_space<vmem>>, vector<1x4x1xf32>
    %140 = vector.shape_cast %139 : vector<1x4x1xf32> to vector<4x1xf32>
    %141 = vector.shape_cast %138 : vector<4x1xf32> to vector<1x4x1xf32>
    tpu.vector_store %arg5[%c2_84, %c0_85, %c111], %141 {strides = array<i32>} : memref<3x4x288xf32, #tpu.memory_space<vmem>>, vector<1x4x1xf32>,
    %142 = vector.extract_strided_slice %1 {offsets = [0, 96], sizes = [4, 16], strides = [1, 1]} : vector<4x256xf32> to vector<4x16xf32>
    %c1_86 = arith.constant 1 : index
    %c0_87 = arith.constant 0 : index
    %c112 = arith.constant 112 : index
    %143 = vector.load %arg5[%c1_86, %c0_87, %c112] : memref<3x4x288xf32, #tpu.memory_space<vmem>>, vector<1x4x16xf32>
    %144 = vector.shape_cast %143 : vector<1x4x16xf32> to vector<4x16xf32>
    %145 = vector.shape_cast %142 : vector<4x16xf32> to vector<1x4x16xf32>
    tpu.vector_store %arg5[%c1_86, %c0_87, %c112], %145 {strides = array<i32>} : memref<3x4x288xf32, #tpu.memory_space<vmem>>, vector<1x4x16xf32>,
    %146 = vector.extract_strided_slice %142 {offsets = [0, 1], sizes = [4, 1], strides = [1, 1]} : vector<4x16xf32> to vector<4x1xf32>
    %c0_88 = arith.constant 0 : index
    %c0_89 = arith.constant 0 : index
    %c112_90 = arith.constant 112 : index
    %147 = vector.load %arg5[%c0_88, %c0_89, %c112_90] : memref<3x4x288xf32, #tpu.memory_space<vmem>>, vector<1x4x1xf32>
    %148 = vector.shape_cast %147 : vector<1x4x1xf32> to vector<4x1xf32>
    %149 = vector.shape_cast %146 : vector<4x1xf32> to vector<1x4x1xf32>
    tpu.vector_store %arg5[%c0_88, %c0_89, %c112_90], %149 {strides = array<i32>} : memref<3x4x288xf32, #tpu.memory_space<vmem>>, vector<1x4x1xf32>,
    %150 = vector.extract_strided_slice %142 {offsets = [0, 0], sizes = [4, 15], strides = [1, 1]} : vector<4x16xf32> to vector<4x15xf32>
    %c0_91 = arith.constant 0 : index
    %c0_92 = arith.constant 0 : index
    %c113 = arith.constant 113 : index
    %151 = vector.load %arg5[%c0_91, %c0_92, %c113] : memref<3x4x288xf32, #tpu.memory_space<vmem>>, vector<1x4x15xf32>
    %152 = vector.shape_cast %151 : vector<1x4x15xf32> to vector<4x15xf32>
    %153 = vector.shape_cast %150 : vector<4x15xf32> to vector<1x4x15xf32>
    tpu.vector_store %arg5[%c0_91, %c0_92, %c113], %153 {strides = array<i32>} : memref<3x4x288xf32, #tpu.memory_space<vmem>>, vector<1x4x15xf32>,
    %154 = vector.extract_strided_slice %142 {offsets = [0, 1], sizes = [4, 15], strides = [1, 1]} : vector<4x16xf32> to vector<4x15xf32>
    %c2_93 = arith.constant 2 : index
    %c0_94 = arith.constant 0 : index
    %c112_95 = arith.constant 112 : index
    %155 = vector.load %arg5[%c2_93, %c0_94, %c112_95] : memref<3x4x288xf32, #tpu.memory_space<vmem>>, vector<1x4x15xf32>
    %156 = vector.shape_cast %155 : vector<1x4x15xf32> to vector<4x15xf32>
    %157 = vector.shape_cast %154 : vector<4x15xf32> to vector<1x4x15xf32>
    tpu.vector_store %arg5[%c2_93, %c0_94, %c112_95], %157 {strides = array<i32>} : memref<3x4x288xf32, #tpu.memory_space<vmem>>, vector<1x4x15xf32>,
    %158 = vector.extract_strided_slice %142 {offsets = [0, 14], sizes = [4, 1], strides = [1, 1]} : vector<4x16xf32> to vector<4x1xf32>
    %c2_96 = arith.constant 2 : index
    %c0_97 = arith.constant 0 : index
    %c127 = arith.constant 127 : index
    %159 = vector.load %arg5[%c2_96, %c0_97, %c127] : memref<3x4x288xf32, #tpu.memory_space<vmem>>, vector<1x4x1xf32>
    %160 = vector.shape_cast %159 : vector<1x4x1xf32> to vector<4x1xf32>
    %161 = vector.shape_cast %158 : vector<4x1xf32> to vector<1x4x1xf32>
    tpu.vector_store %arg5[%c2_96, %c0_97, %c127], %161 {strides = array<i32>} : memref<3x4x288xf32, #tpu.memory_space<vmem>>, vector<1x4x1xf32>,
    %162 = vector.extract_strided_slice %1 {offsets = [0, 112], sizes = [4, 16], strides = [1, 1]} : vector<4x256xf32> to vector<4x16xf32>
    %c1_98 = arith.constant 1 : index
    %c0_99 = arith.constant 0 : index
    %c128 = arith.constant 128 : index
    %163 = vector.load %arg5[%c1_98, %c0_99, %c128] : memref<3x4x288xf32, #tpu.memory_space<vmem>>, vector<1x4x16xf32>
    %164 = vector.shape_cast %163 : vector<1x4x16xf32> to vector<4x16xf32>
    %165 = vector.shape_cast %162 : vector<4x16xf32> to vector<1x4x16xf32>
    tpu.vector_store %arg5[%c1_98, %c0_99, %c128], %165 {strides = array<i32>} : memref<3x4x288xf32, #tpu.memory_space<vmem>>, vector<1x4x16xf32>,
    %166 = vector.extract_strided_slice %162 {offsets = [0, 1], sizes = [4, 1], strides = [1, 1]} : vector<4x16xf32> to vector<4x1xf32>
    %c0_100 = arith.constant 0 : index
    %c0_101 = arith.constant 0 : index
    %c128_102 = arith.constant 128 : index
    %167 = vector.load %arg5[%c0_100, %c0_101, %c128_102] : memref<3x4x288xf32, #tpu.memory_space<vmem>>, vector<1x4x1xf32>
    %168 = vector.shape_cast %167 : vector<1x4x1xf32> to vector<4x1xf32>
    %169 = vector.shape_cast %166 : vector<4x1xf32> to vector<1x4x1xf32>
    tpu.vector_store %arg5[%c0_100, %c0_101, %c128_102], %169 {strides = array<i32>} : memref<3x4x288xf32, #tpu.memory_space<vmem>>, vector<1x4x1xf32>,
    %170 = vector.extract_strided_slice %162 {offsets = [0, 0], sizes = [4, 15], strides = [1, 1]} : vector<4x16xf32> to vector<4x15xf32>
    %c0_103 = arith.constant 0 : index
    %c0_104 = arith.constant 0 : index
    %c129 = arith.constant 129 : index
    %171 = vector.load %arg5[%c0_103, %c0_104, %c129] : memref<3x4x288xf32, #tpu.memory_space<vmem>>, vector<1x4x15xf32>
    %172 = vector.shape_cast %171 : vector<1x4x15xf32> to vector<4x15xf32>
    %173 = vector.shape_cast %170 : vector<4x15xf32> to vector<1x4x15xf32>
    tpu.vector_store %arg5[%c0_103, %c0_104, %c129], %173 {strides = array<i32>} : memref<3x4x288xf32, #tpu.memory_space<vmem>>, vector<1x4x15xf32>,
    %174 = vector.extract_strided_slice %162 {offsets = [0, 1], sizes = [4, 15], strides = [1, 1]} : vector<4x16xf32> to vector<4x15xf32>
    %c2_105 = arith.constant 2 : index
    %c0_106 = arith.constant 0 : index
    %c128_107 = arith.constant 128 : index
    %175 = vector.load %arg5[%c2_105, %c0_106, %c128_107] : memref<3x4x288xf32, #tpu.memory_space<vmem>>, vector<1x4x15xf32>
    %176 = vector.shape_cast %175 : vector<1x4x15xf32> to vector<4x15xf32>
    %177 = vector.shape_cast %174 : vector<4x15xf32> to vector<1x4x15xf32>
    tpu.vector_store %arg5[%c2_105, %c0_106, %c128_107], %177 {strides = array<i32>} : memref<3x4x288xf32, #tpu.memory_space<vmem>>, vector<1x4x15xf32>,
    %178 = vector.extract_strided_slice %162 {offsets = [0, 14], sizes = [4, 1], strides = [1, 1]} : vector<4x16xf32> to vector<4x1xf32>
    %c2_108 = arith.constant 2 : index
    %c0_109 = arith.constant 0 : index
    %c143 = arith.constant 143 : index
    %179 = vector.load %arg5[%c2_108, %c0_109, %c143] : memref<3x4x288xf32, #tpu.memory_space<vmem>>, vector<1x4x1xf32>
    %180 = vector.shape_cast %179 : vector<1x4x1xf32> to vector<4x1xf32>
    %181 = vector.shape_cast %178 : vector<4x1xf32> to vector<1x4x1xf32>
    tpu.vector_store %arg5[%c2_108, %c0_109, %c143], %181 {strides = array<i32>} : memref<3x4x288xf32, #tpu.memory_space<vmem>>, vector<1x4x1xf32>,
    %182 = vector.extract_strided_slice %1 {offsets = [0, 128], sizes = [4, 16], strides = [1, 1]} : vector<4x256xf32> to vector<4x16xf32>
    %c1_110 = arith.constant 1 : index
    %c0_111 = arith.constant 0 : index
    %c144 = arith.constant 144 : index
    %183 = vector.load %arg5[%c1_110, %c0_111, %c144] : memref<3x4x288xf32, #tpu.memory_space<vmem>>, vector<1x4x16xf32>
    %184 = vector.shape_cast %183 : vector<1x4x16xf32> to vector<4x16xf32>
    %185 = vector.shape_cast %182 : vector<4x16xf32> to vector<1x4x16xf32>
    tpu.vector_store %arg5[%c1_110, %c0_111, %c144], %185 {strides = array<i32>} : memref<3x4x288xf32, #tpu.memory_space<vmem>>, vector<1x4x16xf32>,
    %186 = vector.extract_strided_slice %182 {offsets = [0, 1], sizes = [4, 1], strides = [1, 1]} : vector<4x16xf32> to vector<4x1xf32>
    %c0_112 = arith.constant 0 : index
    %c0_113 = arith.constant 0 : index
    %c144_114 = arith.constant 144 : index
    %187 = vector.load %arg5[%c0_112, %c0_113, %c144_114] : memref<3x4x288xf32, #tpu.memory_space<vmem>>, vector<1x4x1xf32>
    %188 = vector.shape_cast %187 : vector<1x4x1xf32> to vector<4x1xf32>
    %189 = vector.shape_cast %186 : vector<4x1xf32> to vector<1x4x1xf32>
    tpu.vector_store %arg5[%c0_112, %c0_113, %c144_114], %189 {strides = array<i32>} : memref<3x4x288xf32, #tpu.memory_space<vmem>>, vector<1x4x1xf32>,
    %190 = vector.extract_strided_slice %182 {offsets = [0, 0], sizes = [4, 15], strides = [1, 1]} : vector<4x16xf32> to vector<4x15xf32>
    %c0_115 = arith.constant 0 : index
    %c0_116 = arith.constant 0 : index
    %c145 = arith.constant 145 : index
    %191 = vector.load %arg5[%c0_115, %c0_116, %c145] : memref<3x4x288xf32, #tpu.memory_space<vmem>>, vector<1x4x15xf32>
    %192 = vector.shape_cast %191 : vector<1x4x15xf32> to vector<4x15xf32>
    %193 = vector.shape_cast %190 : vector<4x15xf32> to vector<1x4x15xf32>
    tpu.vector_store %arg5[%c0_115, %c0_116, %c145], %193 {strides = array<i32>} : memref<3x4x288xf32, #tpu.memory_space<vmem>>, vector<1x4x15xf32>,
    %194 = vector.extract_strided_slice %182 {offsets = [0, 1], sizes = [4, 15], strides = [1, 1]} : vector<4x16xf32> to vector<4x15xf32>
    %c2_117 = arith.constant 2 : index
    %c0_118 = arith.constant 0 : index
    %c144_119 = arith.constant 144 : index
    %195 = vector.load %arg5[%c2_117, %c0_118, %c144_119] : memref<3x4x288xf32, #tpu.memory_space<vmem>>, vector<1x4x15xf32>
    %196 = vector.shape_cast %195 : vector<1x4x15xf32> to vector<4x15xf32>
    %197 = vector.shape_cast %194 : vector<4x15xf32> to vector<1x4x15xf32>
    tpu.vector_store %arg5[%c2_117, %c0_118, %c144_119], %197 {strides = array<i32>} : memref<3x4x288xf32, #tpu.memory_space<vmem>>, vector<1x4x15xf32>,
    %198 = vector.extract_strided_slice %182 {offsets = [0, 14], sizes = [4, 1], strides = [1, 1]} : vector<4x16xf32> to vector<4x1xf32>
    %c2_120 = arith.constant 2 : index
    %c0_121 = arith.constant 0 : index
    %c159 = arith.constant 159 : index
    %199 = vector.load %arg5[%c2_120, %c0_121, %c159] : memref<3x4x288xf32, #tpu.memory_space<vmem>>, vector<1x4x1xf32>
    %200 = vector.shape_cast %199 : vector<1x4x1xf32> to vector<4x1xf32>
    %201 = vector.shape_cast %198 : vector<4x1xf32> to vector<1x4x1xf32>
    tpu.vector_store %arg5[%c2_120, %c0_121, %c159], %201 {strides = array<i32>} : memref<3x4x288xf32, #tpu.memory_space<vmem>>, vector<1x4x1xf32>,
    %202 = vector.extract_strided_slice %1 {offsets = [0, 144], sizes = [4, 16], strides = [1, 1]} : vector<4x256xf32> to vector<4x16xf32>
    %c1_122 = arith.constant 1 : index
    %c0_123 = arith.constant 0 : index
    %c160 = arith.constant 160 : index
    %203 = vector.load %arg5[%c1_122, %c0_123, %c160] : memref<3x4x288xf32, #tpu.memory_space<vmem>>, vector<1x4x16xf32>
    %204 = vector.shape_cast %203 : vector<1x4x16xf32> to vector<4x16xf32>
    %205 = vector.shape_cast %202 : vector<4x16xf32> to vector<1x4x16xf32>
    tpu.vector_store %arg5[%c1_122, %c0_123, %c160], %205 {strides = array<i32>} : memref<3x4x288xf32, #tpu.memory_space<vmem>>, vector<1x4x16xf32>,
    %206 = vector.extract_strided_slice %202 {offsets = [0, 1], sizes = [4, 1], strides = [1, 1]} : vector<4x16xf32> to vector<4x1xf32>
    %c0_124 = arith.constant 0 : index
    %c0_125 = arith.constant 0 : index
    %c160_126 = arith.constant 160 : index
    %207 = vector.load %arg5[%c0_124, %c0_125, %c160_126] : memref<3x4x288xf32, #tpu.memory_space<vmem>>, vector<1x4x1xf32>
    %208 = vector.shape_cast %207 : vector<1x4x1xf32> to vector<4x1xf32>
    %209 = vector.shape_cast %206 : vector<4x1xf32> to vector<1x4x1xf32>
    tpu.vector_store %arg5[%c0_124, %c0_125, %c160_126], %209 {strides = array<i32>} : memref<3x4x288xf32, #tpu.memory_space<vmem>>, vector<1x4x1xf32>,
    %210 = vector.extract_strided_slice %202 {offsets = [0, 0], sizes = [4, 15], strides = [1, 1]} : vector<4x16xf32> to vector<4x15xf32>
    %c0_127 = arith.constant 0 : index
    %c0_128 = arith.constant 0 : index
    %c161 = arith.constant 161 : index
    %211 = vector.load %arg5[%c0_127, %c0_128, %c161] : memref<3x4x288xf32, #tpu.memory_space<vmem>>, vector<1x4x15xf32>
    %212 = vector.shape_cast %211 : vector<1x4x15xf32> to vector<4x15xf32>
    %213 = vector.shape_cast %210 : vector<4x15xf32> to vector<1x4x15xf32>
    tpu.vector_store %arg5[%c0_127, %c0_128, %c161], %213 {strides = array<i32>} : memref<3x4x288xf32, #tpu.memory_space<vmem>>, vector<1x4x15xf32>,
    %214 = vector.extract_strided_slice %202 {offsets = [0, 1], sizes = [4, 15], strides = [1, 1]} : vector<4x16xf32> to vector<4x15xf32>
    %c2_129 = arith.constant 2 : index
    %c0_130 = arith.constant 0 : index
    %c160_131 = arith.constant 160 : index
    %215 = vector.load %arg5[%c2_129, %c0_130, %c160_131] : memref<3x4x288xf32, #tpu.memory_space<vmem>>, vector<1x4x15xf32>
    %216 = vector.shape_cast %215 : vector<1x4x15xf32> to vector<4x15xf32>
    %217 = vector.shape_cast %214 : vector<4x15xf32> to vector<1x4x15xf32>
    tpu.vector_store %arg5[%c2_129, %c0_130, %c160_131], %217 {strides = array<i32>} : memref<3x4x288xf32, #tpu.memory_space<vmem>>, vector<1x4x15xf32>,
    %218 = vector.extract_strided_slice %202 {offsets = [0, 14], sizes = [4, 1], strides = [1, 1]} : vector<4x16xf32> to vector<4x1xf32>
    %c2_132 = arith.constant 2 : index
    %c0_133 = arith.constant 0 : index
    %c175 = arith.constant 175 : index
    %219 = vector.load %arg5[%c2_132, %c0_133, %c175] : memref<3x4x288xf32, #tpu.memory_space<vmem>>, vector<1x4x1xf32>
    %220 = vector.shape_cast %219 : vector<1x4x1xf32> to vector<4x1xf32>
    %221 = vector.shape_cast %218 : vector<4x1xf32> to vector<1x4x1xf32>
    tpu.vector_store %arg5[%c2_132, %c0_133, %c175], %221 {strides = array<i32>} : memref<3x4x288xf32, #tpu.memory_space<vmem>>, vector<1x4x1xf32>,
    %222 = vector.extract_strided_slice %1 {offsets = [0, 160], sizes = [4, 16], strides = [1, 1]} : vector<4x256xf32> to vector<4x16xf32>
    %c1_134 = arith.constant 1 : index
    %c0_135 = arith.constant 0 : index
    %c176 = arith.constant 176 : index
    %223 = vector.load %arg5[%c1_134, %c0_135, %c176] : memref<3x4x288xf32, #tpu.memory_space<vmem>>, vector<1x4x16xf32>
    %224 = vector.shape_cast %223 : vector<1x4x16xf32> to vector<4x16xf32>
    %225 = vector.shape_cast %222 : vector<4x16xf32> to vector<1x4x16xf32>
    tpu.vector_store %arg5[%c1_134, %c0_135, %c176], %225 {strides = array<i32>} : memref<3x4x288xf32, #tpu.memory_space<vmem>>, vector<1x4x16xf32>,
    %226 = vector.extract_strided_slice %222 {offsets = [0, 1], sizes = [4, 1], strides = [1, 1]} : vector<4x16xf32> to vector<4x1xf32>
    %c0_136 = arith.constant 0 : index
    %c0_137 = arith.constant 0 : index
    %c176_138 = arith.constant 176 : index
    %227 = vector.load %arg5[%c0_136, %c0_137, %c176_138] : memref<3x4x288xf32, #tpu.memory_space<vmem>>, vector<1x4x1xf32>
    %228 = vector.shape_cast %227 : vector<1x4x1xf32> to vector<4x1xf32>
    %229 = vector.shape_cast %226 : vector<4x1xf32> to vector<1x4x1xf32>
    tpu.vector_store %arg5[%c0_136, %c0_137, %c176_138], %229 {strides = array<i32>} : memref<3x4x288xf32, #tpu.memory_space<vmem>>, vector<1x4x1xf32>,
    %230 = vector.extract_strided_slice %222 {offsets = [0, 0], sizes = [4, 15], strides = [1, 1]} : vector<4x16xf32> to vector<4x15xf32>
    %c0_139 = arith.constant 0 : index
    %c0_140 = arith.constant 0 : index
    %c177 = arith.constant 177 : index
    %231 = vector.load %arg5[%c0_139, %c0_140, %c177] : memref<3x4x288xf32, #tpu.memory_space<vmem>>, vector<1x4x15xf32>
    %232 = vector.shape_cast %231 : vector<1x4x15xf32> to vector<4x15xf32>
    %233 = vector.shape_cast %230 : vector<4x15xf32> to vector<1x4x15xf32>
    tpu.vector_store %arg5[%c0_139, %c0_140, %c177], %233 {strides = array<i32>} : memref<3x4x288xf32, #tpu.memory_space<vmem>>, vector<1x4x15xf32>,
    %234 = vector.extract_strided_slice %222 {offsets = [0, 1], sizes = [4, 15], strides = [1, 1]} : vector<4x16xf32> to vector<4x15xf32>
    %c2_141 = arith.constant 2 : index
    %c0_142 = arith.constant 0 : index
    %c176_143 = arith.constant 176 : index
    %235 = vector.load %arg5[%c2_141, %c0_142, %c176_143] : memref<3x4x288xf32, #tpu.memory_space<vmem>>, vector<1x4x15xf32>
    %236 = vector.shape_cast %235 : vector<1x4x15xf32> to vector<4x15xf32>
    %237 = vector.shape_cast %234 : vector<4x15xf32> to vector<1x4x15xf32>
    tpu.vector_store %arg5[%c2_141, %c0_142, %c176_143], %237 {strides = array<i32>} : memref<3x4x288xf32, #tpu.memory_space<vmem>>, vector<1x4x15xf32>,
    %238 = vector.extract_strided_slice %222 {offsets = [0, 14], sizes = [4, 1], strides = [1, 1]} : vector<4x16xf32> to vector<4x1xf32>
    %c2_144 = arith.constant 2 : index
    %c0_145 = arith.constant 0 : index
    %c191 = arith.constant 191 : index
    %239 = vector.load %arg5[%c2_144, %c0_145, %c191] : memref<3x4x288xf32, #tpu.memory_space<vmem>>, vector<1x4x1xf32>
    %240 = vector.shape_cast %239 : vector<1x4x1xf32> to vector<4x1xf32>
    %241 = vector.shape_cast %238 : vector<4x1xf32> to vector<1x4x1xf32>
    tpu.vector_store %arg5[%c2_144, %c0_145, %c191], %241 {strides = array<i32>} : memref<3x4x288xf32, #tpu.memory_space<vmem>>, vector<1x4x1xf32>,
    %242 = vector.extract_strided_slice %1 {offsets = [0, 176], sizes = [4, 16], strides = [1, 1]} : vector<4x256xf32> to vector<4x16xf32>
    %c1_146 = arith.constant 1 : index
    %c0_147 = arith.constant 0 : index
    %c192 = arith.constant 192 : index
    %243 = vector.load %arg5[%c1_146, %c0_147, %c192] : memref<3x4x288xf32, #tpu.memory_space<vmem>>, vector<1x4x16xf32>
    %244 = vector.shape_cast %243 : vector<1x4x16xf32> to vector<4x16xf32>
    %245 = vector.shape_cast %242 : vector<4x16xf32> to vector<1x4x16xf32>
    tpu.vector_store %arg5[%c1_146, %c0_147, %c192], %245 {strides = array<i32>} : memref<3x4x288xf32, #tpu.memory_space<vmem>>, vector<1x4x16xf32>,
    %246 = vector.extract_strided_slice %242 {offsets = [0, 1], sizes = [4, 1], strides = [1, 1]} : vector<4x16xf32> to vector<4x1xf32>
    %c0_148 = arith.constant 0 : index
    %c0_149 = arith.constant 0 : index
    %c192_150 = arith.constant 192 : index
    %247 = vector.load %arg5[%c0_148, %c0_149, %c192_150] : memref<3x4x288xf32, #tpu.memory_space<vmem>>, vector<1x4x1xf32>
    %248 = vector.shape_cast %247 : vector<1x4x1xf32> to vector<4x1xf32>
    %249 = vector.shape_cast %246 : vector<4x1xf32> to vector<1x4x1xf32>
    tpu.vector_store %arg5[%c0_148, %c0_149, %c192_150], %249 {strides = array<i32>} : memref<3x4x288xf32, #tpu.memory_space<vmem>>, vector<1x4x1xf32>,
    %250 = vector.extract_strided_slice %242 {offsets = [0, 0], sizes = [4, 15], strides = [1, 1]} : vector<4x16xf32> to vector<4x15xf32>
    %c0_151 = arith.constant 0 : index
    %c0_152 = arith.constant 0 : index
    %c193 = arith.constant 193 : index
    %251 = vector.load %arg5[%c0_151, %c0_152, %c193] : memref<3x4x288xf32, #tpu.memory_space<vmem>>, vector<1x4x15xf32>
    %252 = vector.shape_cast %251 : vector<1x4x15xf32> to vector<4x15xf32>
    %253 = vector.shape_cast %250 : vector<4x15xf32> to vector<1x4x15xf32>
    tpu.vector_store %arg5[%c0_151, %c0_152, %c193], %253 {strides = array<i32>} : memref<3x4x288xf32, #tpu.memory_space<vmem>>, vector<1x4x15xf32>,
    %254 = vector.extract_strided_slice %242 {offsets = [0, 1], sizes = [4, 15], strides = [1, 1]} : vector<4x16xf32> to vector<4x15xf32>
    %c2_153 = arith.constant 2 : index
    %c0_154 = arith.constant 0 : index
    %c192_155 = arith.constant 192 : index
    %255 = vector.load %arg5[%c2_153, %c0_154, %c192_155] : memref<3x4x288xf32, #tpu.memory_space<vmem>>, vector<1x4x15xf32>
    %256 = vector.shape_cast %255 : vector<1x4x15xf32> to vector<4x15xf32>
    %257 = vector.shape_cast %254 : vector<4x15xf32> to vector<1x4x15xf32>
    tpu.vector_store %arg5[%c2_153, %c0_154, %c192_155], %257 {strides = array<i32>} : memref<3x4x288xf32, #tpu.memory_space<vmem>>, vector<1x4x15xf32>,
    %258 = vector.extract_strided_slice %242 {offsets = [0, 14], sizes = [4, 1], strides = [1, 1]} : vector<4x16xf32> to vector<4x1xf32>
    %c2_156 = arith.constant 2 : index
    %c0_157 = arith.constant 0 : index
    %c207 = arith.constant 207 : index
    %259 = vector.load %arg5[%c2_156, %c0_157, %c207] : memref<3x4x288xf32, #tpu.memory_space<vmem>>, vector<1x4x1xf32>
    %260 = vector.shape_cast %259 : vector<1x4x1xf32> to vector<4x1xf32>
    %261 = vector.shape_cast %258 : vector<4x1xf32> to vector<1x4x1xf32>
    tpu.vector_store %arg5[%c2_156, %c0_157, %c207], %261 {strides = array<i32>} : memref<3x4x288xf32, #tpu.memory_space<vmem>>, vector<1x4x1xf32>,
    %262 = vector.extract_strided_slice %1 {offsets = [0, 192], sizes = [4, 16], strides = [1, 1]} : vector<4x256xf32> to vector<4x16xf32>
    %c1_158 = arith.constant 1 : index
    %c0_159 = arith.constant 0 : index
    %c208 = arith.constant 208 : index
    %263 = vector.load %arg5[%c1_158, %c0_159, %c208] : memref<3x4x288xf32, #tpu.memory_space<vmem>>, vector<1x4x16xf32>
    %264 = vector.shape_cast %263 : vector<1x4x16xf32> to vector<4x16xf32>
    %265 = vector.shape_cast %262 : vector<4x16xf32> to vector<1x4x16xf32>
    tpu.vector_store %arg5[%c1_158, %c0_159, %c208], %265 {strides = array<i32>} : memref<3x4x288xf32, #tpu.memory_space<vmem>>, vector<1x4x16xf32>,
    %266 = vector.extract_strided_slice %262 {offsets = [0, 1], sizes = [4, 1], strides = [1, 1]} : vector<4x16xf32> to vector<4x1xf32>
    %c0_160 = arith.constant 0 : index
    %c0_161 = arith.constant 0 : index
    %c208_162 = arith.constant 208 : index
    %267 = vector.load %arg5[%c0_160, %c0_161, %c208_162] : memref<3x4x288xf32, #tpu.memory_space<vmem>>, vector<1x4x1xf32>
    %268 = vector.shape_cast %267 : vector<1x4x1xf32> to vector<4x1xf32>
    %269 = vector.shape_cast %266 : vector<4x1xf32> to vector<1x4x1xf32>
    tpu.vector_store %arg5[%c0_160, %c0_161, %c208_162], %269 {strides = array<i32>} : memref<3x4x288xf32, #tpu.memory_space<vmem>>, vector<1x4x1xf32>,
    %270 = vector.extract_strided_slice %262 {offsets = [0, 0], sizes = [4, 15], strides = [1, 1]} : vector<4x16xf32> to vector<4x15xf32>
    %c0_163 = arith.constant 0 : index
    %c0_164 = arith.constant 0 : index
    %c209 = arith.constant 209 : index
    %271 = vector.load %arg5[%c0_163, %c0_164, %c209] : memref<3x4x288xf32, #tpu.memory_space<vmem>>, vector<1x4x15xf32>
    %272 = vector.shape_cast %271 : vector<1x4x15xf32> to vector<4x15xf32>
    %273 = vector.shape_cast %270 : vector<4x15xf32> to vector<1x4x15xf32>
    tpu.vector_store %arg5[%c0_163, %c0_164, %c209], %273 {strides = array<i32>} : memref<3x4x288xf32, #tpu.memory_space<vmem>>, vector<1x4x15xf32>,
    %274 = vector.extract_strided_slice %262 {offsets = [0, 1], sizes = [4, 15], strides = [1, 1]} : vector<4x16xf32> to vector<4x15xf32>
    %c2_165 = arith.constant 2 : index
    %c0_166 = arith.constant 0 : index
    %c208_167 = arith.constant 208 : index
    %275 = vector.load %arg5[%c2_165, %c0_166, %c208_167] : memref<3x4x288xf32, #tpu.memory_space<vmem>>, vector<1x4x15xf32>
    %276 = vector.shape_cast %275 : vector<1x4x15xf32> to vector<4x15xf32>
    %277 = vector.shape_cast %274 : vector<4x15xf32> to vector<1x4x15xf32>
    tpu.vector_store %arg5[%c2_165, %c0_166, %c208_167], %277 {strides = array<i32>} : memref<3x4x288xf32, #tpu.memory_space<vmem>>, vector<1x4x15xf32>,
    %278 = vector.extract_strided_slice %262 {offsets = [0, 14], sizes = [4, 1], strides = [1, 1]} : vector<4x16xf32> to vector<4x1xf32>
    %c2_168 = arith.constant 2 : index
    %c0_169 = arith.constant 0 : index
    %c223 = arith.constant 223 : index
    %279 = vector.load %arg5[%c2_168, %c0_169, %c223] : memref<3x4x288xf32, #tpu.memory_space<vmem>>, vector<1x4x1xf32>
    %280 = vector.shape_cast %279 : vector<1x4x1xf32> to vector<4x1xf32>
    %281 = vector.shape_cast %278 : vector<4x1xf32> to vector<1x4x1xf32>
    tpu.vector_store %arg5[%c2_168, %c0_169, %c223], %281 {strides = array<i32>} : memref<3x4x288xf32, #tpu.memory_space<vmem>>, vector<1x4x1xf32>,
    %282 = vector.extract_strided_slice %1 {offsets = [0, 208], sizes = [4, 16], strides = [1, 1]} : vector<4x256xf32> to vector<4x16xf32>
    %c1_170 = arith.constant 1 : index
    %c0_171 = arith.constant 0 : index
    %c224 = arith.constant 224 : index
    %283 = vector.load %arg5[%c1_170, %c0_171, %c224] : memref<3x4x288xf32, #tpu.memory_space<vmem>>, vector<1x4x16xf32>
    %284 = vector.shape_cast %283 : vector<1x4x16xf32> to vector<4x16xf32>
    %285 = vector.shape_cast %282 : vector<4x16xf32> to vector<1x4x16xf32>
    tpu.vector_store %arg5[%c1_170, %c0_171, %c224], %285 {strides = array<i32>} : memref<3x4x288xf32, #tpu.memory_space<vmem>>, vector<1x4x16xf32>,
    %286 = vector.extract_strided_slice %282 {offsets = [0, 1], sizes = [4, 1], strides = [1, 1]} : vector<4x16xf32> to vector<4x1xf32>
    %c0_172 = arith.constant 0 : index
    %c0_173 = arith.constant 0 : index
    %c224_174 = arith.constant 224 : index
    %287 = vector.load %arg5[%c0_172, %c0_173, %c224_174] : memref<3x4x288xf32, #tpu.memory_space<vmem>>, vector<1x4x1xf32>
    %288 = vector.shape_cast %287 : vector<1x4x1xf32> to vector<4x1xf32>
    %289 = vector.shape_cast %286 : vector<4x1xf32> to vector<1x4x1xf32>
    tpu.vector_store %arg5[%c0_172, %c0_173, %c224_174], %289 {strides = array<i32>} : memref<3x4x288xf32, #tpu.memory_space<vmem>>, vector<1x4x1xf32>,
    %290 = vector.extract_strided_slice %282 {offsets = [0, 0], sizes = [4, 15], strides = [1, 1]} : vector<4x16xf32> to vector<4x15xf32>
    %c0_175 = arith.constant 0 : index
    %c0_176 = arith.constant 0 : index
    %c225 = arith.constant 225 : index
    %291 = vector.load %arg5[%c0_175, %c0_176, %c225] : memref<3x4x288xf32, #tpu.memory_space<vmem>>, vector<1x4x15xf32>
    %292 = vector.shape_cast %291 : vector<1x4x15xf32> to vector<4x15xf32>
    %293 = vector.shape_cast %290 : vector<4x15xf32> to vector<1x4x15xf32>
    tpu.vector_store %arg5[%c0_175, %c0_176, %c225], %293 {strides = array<i32>} : memref<3x4x288xf32, #tpu.memory_space<vmem>>, vector<1x4x15xf32>,
    %294 = vector.extract_strided_slice %282 {offsets = [0, 1], sizes = [4, 15], strides = [1, 1]} : vector<4x16xf32> to vector<4x15xf32>
    %c2_177 = arith.constant 2 : index
    %c0_178 = arith.constant 0 : index
    %c224_179 = arith.constant 224 : index
    %295 = vector.load %arg5[%c2_177, %c0_178, %c224_179] : memref<3x4x288xf32, #tpu.memory_space<vmem>>, vector<1x4x15xf32>
    %296 = vector.shape_cast %295 : vector<1x4x15xf32> to vector<4x15xf32>
    %297 = vector.shape_cast %294 : vector<4x15xf32> to vector<1x4x15xf32>
    tpu.vector_store %arg5[%c2_177, %c0_178, %c224_179], %297 {strides = array<i32>} : memref<3x4x288xf32, #tpu.memory_space<vmem>>, vector<1x4x15xf32>,
    %298 = vector.extract_strided_slice %282 {offsets = [0, 14], sizes = [4, 1], strides = [1, 1]} : vector<4x16xf32> to vector<4x1xf32>
    %c2_180 = arith.constant 2 : index
    %c0_181 = arith.constant 0 : index
    %c239 = arith.constant 239 : index
    %299 = vector.load %arg5[%c2_180, %c0_181, %c239] : memref<3x4x288xf32, #tpu.memory_space<vmem>>, vector<1x4x1xf32>
    %300 = vector.shape_cast %299 : vector<1x4x1xf32> to vector<4x1xf32>
    %301 = vector.shape_cast %298 : vector<4x1xf32> to vector<1x4x1xf32>
    tpu.vector_store %arg5[%c2_180, %c0_181, %c239], %301 {strides = array<i32>} : memref<3x4x288xf32, #tpu.memory_space<vmem>>, vector<1x4x1xf32>,
    %302 = vector.extract_strided_slice %1 {offsets = [0, 224], sizes = [4, 16], strides = [1, 1]} : vector<4x256xf32> to vector<4x16xf32>
    %c1_182 = arith.constant 1 : index
    %c0_183 = arith.constant 0 : index
    %c240 = arith.constant 240 : index
    %303 = vector.load %arg5[%c1_182, %c0_183, %c240] : memref<3x4x288xf32, #tpu.memory_space<vmem>>, vector<1x4x16xf32>
    %304 = vector.shape_cast %303 : vector<1x4x16xf32> to vector<4x16xf32>
    %305 = vector.shape_cast %302 : vector<4x16xf32> to vector<1x4x16xf32>
    tpu.vector_store %arg5[%c1_182, %c0_183, %c240], %305 {strides = array<i32>} : memref<3x4x288xf32, #tpu.memory_space<vmem>>, vector<1x4x16xf32>,
    %306 = vector.extract_strided_slice %302 {offsets = [0, 1], sizes = [4, 1], strides = [1, 1]} : vector<4x16xf32> to vector<4x1xf32>
    %c0_184 = arith.constant 0 : index
    %c0_185 = arith.constant 0 : index
    %c240_186 = arith.constant 240 : index
    %307 = vector.load %arg5[%c0_184, %c0_185, %c240_186] : memref<3x4x288xf32, #tpu.memory_space<vmem>>, vector<1x4x1xf32>
    %308 = vector.shape_cast %307 : vector<1x4x1xf32> to vector<4x1xf32>
    %309 = vector.shape_cast %306 : vector<4x1xf32> to vector<1x4x1xf32>
    tpu.vector_store %arg5[%c0_184, %c0_185, %c240_186], %309 {strides = array<i32>} : memref<3x4x288xf32, #tpu.memory_space<vmem>>, vector<1x4x1xf32>,
    %310 = vector.extract_strided_slice %302 {offsets = [0, 0], sizes = [4, 15], strides = [1, 1]} : vector<4x16xf32> to vector<4x15xf32>
    %c0_187 = arith.constant 0 : index
    %c0_188 = arith.constant 0 : index
    %c241 = arith.constant 241 : index
    %311 = vector.load %arg5[%c0_187, %c0_188, %c241] : memref<3x4x288xf32, #tpu.memory_space<vmem>>, vector<1x4x15xf32>
    %312 = vector.shape_cast %311 : vector<1x4x15xf32> to vector<4x15xf32>
    %313 = vector.shape_cast %310 : vector<4x15xf32> to vector<1x4x15xf32>
    tpu.vector_store %arg5[%c0_187, %c0_188, %c241], %313 {strides = array<i32>} : memref<3x4x288xf32, #tpu.memory_space<vmem>>, vector<1x4x15xf32>,
    %314 = vector.extract_strided_slice %302 {offsets = [0, 1], sizes = [4, 15], strides = [1, 1]} : vector<4x16xf32> to vector<4x15xf32>
    %c2_189 = arith.constant 2 : index
    %c0_190 = arith.constant 0 : index
    %c240_191 = arith.constant 240 : index
    %315 = vector.load %arg5[%c2_189, %c0_190, %c240_191] : memref<3x4x288xf32, #tpu.memory_space<vmem>>, vector<1x4x15xf32>
    %316 = vector.shape_cast %315 : vector<1x4x15xf32> to vector<4x15xf32>
    %317 = vector.shape_cast %314 : vector<4x15xf32> to vector<1x4x15xf32>
    tpu.vector_store %arg5[%c2_189, %c0_190, %c240_191], %317 {strides = array<i32>} : memref<3x4x288xf32, #tpu.memory_space<vmem>>, vector<1x4x15xf32>,
    %318 = vector.extract_strided_slice %302 {offsets = [0, 14], sizes = [4, 1], strides = [1, 1]} : vector<4x16xf32> to vector<4x1xf32>
    %c2_192 = arith.constant 2 : index
    %c0_193 = arith.constant 0 : index
    %c255 = arith.constant 255 : index
    %319 = vector.load %arg5[%c2_192, %c0_193, %c255] : memref<3x4x288xf32, #tpu.memory_space<vmem>>, vector<1x4x1xf32>
    %320 = vector.shape_cast %319 : vector<1x4x1xf32> to vector<4x1xf32>
    %321 = vector.shape_cast %318 : vector<4x1xf32> to vector<1x4x1xf32>
    tpu.vector_store %arg5[%c2_192, %c0_193, %c255], %321 {strides = array<i32>} : memref<3x4x288xf32, #tpu.memory_space<vmem>>, vector<1x4x1xf32>,
    %322 = vector.extract_strided_slice %1 {offsets = [0, 240], sizes = [4, 16], strides = [1, 1]} : vector<4x256xf32> to vector<4x16xf32>
    %c1_194 = arith.constant 1 : index
    %c0_195 = arith.constant 0 : index
    %c256 = arith.constant 256 : index
    %323 = vector.load %arg5[%c1_194, %c0_195, %c256] : memref<3x4x288xf32, #tpu.memory_space<vmem>>, vector<1x4x16xf32>
    %324 = vector.shape_cast %323 : vector<1x4x16xf32> to vector<4x16xf32>
    %325 = vector.shape_cast %322 : vector<4x16xf32> to vector<1x4x16xf32>
    tpu.vector_store %arg5[%c1_194, %c0_195, %c256], %325 {strides = array<i32>} : memref<3x4x288xf32, #tpu.memory_space<vmem>>, vector<1x4x16xf32>,
    %326 = vector.extract_strided_slice %322 {offsets = [0, 1], sizes = [4, 1], strides = [1, 1]} : vector<4x16xf32> to vector<4x1xf32>
    %c0_196 = arith.constant 0 : index
    %c0_197 = arith.constant 0 : index
    %c256_198 = arith.constant 256 : index
    %327 = vector.load %arg5[%c0_196, %c0_197, %c256_198] : memref<3x4x288xf32, #tpu.memory_space<vmem>>, vector<1x4x1xf32>
    %328 = vector.shape_cast %327 : vector<1x4x1xf32> to vector<4x1xf32>
    %329 = vector.shape_cast %326 : vector<4x1xf32> to vector<1x4x1xf32>
    tpu.vector_store %arg5[%c0_196, %c0_197, %c256_198], %329 {strides = array<i32>} : memref<3x4x288xf32, #tpu.memory_space<vmem>>, vector<1x4x1xf32>,
    %330 = vector.extract_strided_slice %322 {offsets = [0, 0], sizes = [4, 15], strides = [1, 1]} : vector<4x16xf32> to vector<4x15xf32>
    %c0_199 = arith.constant 0 : index
    %c0_200 = arith.constant 0 : index
    %c257 = arith.constant 257 : index
    %331 = vector.load %arg5[%c0_199, %c0_200, %c257] : memref<3x4x288xf32, #tpu.memory_space<vmem>>, vector<1x4x15xf32>
    %332 = vector.shape_cast %331 : vector<1x4x15xf32> to vector<4x15xf32>
    %333 = vector.shape_cast %330 : vector<4x15xf32> to vector<1x4x15xf32>
    tpu.vector_store %arg5[%c0_199, %c0_200, %c257], %333 {strides = array<i32>} : memref<3x4x288xf32, #tpu.memory_space<vmem>>, vector<1x4x15xf32>,
    %334 = vector.extract_strided_slice %322 {offsets = [0, 1], sizes = [4, 15], strides = [1, 1]} : vector<4x16xf32> to vector<4x15xf32>
    %c2_201 = arith.constant 2 : index
    %c0_202 = arith.constant 0 : index
    %c256_203 = arith.constant 256 : index
    %335 = vector.load %arg5[%c2_201, %c0_202, %c256_203] : memref<3x4x288xf32, #tpu.memory_space<vmem>>, vector<1x4x15xf32>
    %336 = vector.shape_cast %335 : vector<1x4x15xf32> to vector<4x15xf32>
    %337 = vector.shape_cast %334 : vector<4x15xf32> to vector<1x4x15xf32>
    tpu.vector_store %arg5[%c2_201, %c0_202, %c256_203], %337 {strides = array<i32>} : memref<3x4x288xf32, #tpu.memory_space<vmem>>, vector<1x4x15xf32>,
    %338 = vector.extract_strided_slice %322 {offsets = [0, 14], sizes = [4, 1], strides = [1, 1]} : vector<4x16xf32> to vector<4x1xf32>
    %c2_204 = arith.constant 2 : index
    %c0_205 = arith.constant 0 : index
    %c271 = arith.constant 271 : index
    %339 = vector.load %arg5[%c2_204, %c0_205, %c271] : memref<3x4x288xf32, #tpu.memory_space<vmem>>, vector<1x4x1xf32>
    %340 = vector.shape_cast %339 : vector<1x4x1xf32> to vector<4x1xf32>
    %341 = vector.shape_cast %338 : vector<4x1xf32> to vector<1x4x1xf32>
    tpu.vector_store %arg5[%c2_204, %c0_205, %c271], %341 {strides = array<i32>} : memref<3x4x288xf32, #tpu.memory_space<vmem>>, vector<1x4x1xf32>,
    %342 = vector.extract_strided_slice %1 {offsets = [0, 224], sizes = [4, 16], strides = [1, 1]} : vector<4x256xf32> to vector<4x16xf32>
    %c1_206 = arith.constant 1 : index
    %c0_207 = arith.constant 0 : index
    %c272 = arith.constant 272 : index
    %343 = vector.load %arg5[%c1_206, %c0_207, %c272] : memref<3x4x288xf32, #tpu.memory_space<vmem>>, vector<1x4x16xf32>
    %344 = vector.shape_cast %343 : vector<1x4x16xf32> to vector<4x16xf32>
    %345 = vector.shape_cast %342 : vector<4x16xf32> to vector<1x4x16xf32>
    tpu.vector_store %arg5[%c1_206, %c0_207, %c272], %345 {strides = array<i32>} : memref<3x4x288xf32, #tpu.memory_space<vmem>>, vector<1x4x16xf32>,
    %346 = vector.extract_strided_slice %342 {offsets = [0, 1], sizes = [4, 1], strides = [1, 1]} : vector<4x16xf32> to vector<4x1xf32>
    %c0_208 = arith.constant 0 : index
    %c0_209 = arith.constant 0 : index
    %c272_210 = arith.constant 272 : index
    %347 = vector.load %arg5[%c0_208, %c0_209, %c272_210] : memref<3x4x288xf32, #tpu.memory_space<vmem>>, vector<1x4x1xf32>
    %348 = vector.shape_cast %347 : vector<1x4x1xf32> to vector<4x1xf32>
    %349 = vector.shape_cast %346 : vector<4x1xf32> to vector<1x4x1xf32>
    tpu.vector_store %arg5[%c0_208, %c0_209, %c272_210], %349 {strides = array<i32>} : memref<3x4x288xf32, #tpu.memory_space<vmem>>, vector<1x4x1xf32>,
    %350 = vector.extract_strided_slice %342 {offsets = [0, 0], sizes = [4, 15], strides = [1, 1]} : vector<4x16xf32> to vector<4x15xf32>
    %c0_211 = arith.constant 0 : index
    %c0_212 = arith.constant 0 : index
    %c273 = arith.constant 273 : index
    %351 = vector.load %arg5[%c0_211, %c0_212, %c273] : memref<3x4x288xf32, #tpu.memory_space<vmem>>, vector<1x4x15xf32>
    %352 = vector.shape_cast %351 : vector<1x4x15xf32> to vector<4x15xf32>
    %353 = vector.shape_cast %350 : vector<4x15xf32> to vector<1x4x15xf32>
    tpu.vector_store %arg5[%c0_211, %c0_212, %c273], %353 {strides = array<i32>} : memref<3x4x288xf32, #tpu.memory_space<vmem>>, vector<1x4x15xf32>,
    %354 = vector.extract_strided_slice %342 {offsets = [0, 1], sizes = [4, 15], strides = [1, 1]} : vector<4x16xf32> to vector<4x15xf32>
    %c2_213 = arith.constant 2 : index
    %c0_214 = arith.constant 0 : index
    %c272_215 = arith.constant 272 : index
    %355 = vector.load %arg5[%c2_213, %c0_214, %c272_215] : memref<3x4x288xf32, #tpu.memory_space<vmem>>, vector<1x4x15xf32>
    %356 = vector.shape_cast %355 : vector<1x4x15xf32> to vector<4x15xf32>
    %357 = vector.shape_cast %354 : vector<4x15xf32> to vector<1x4x15xf32>
    tpu.vector_store %arg5[%c2_213, %c0_214, %c272_215], %357 {strides = array<i32>} : memref<3x4x288xf32, #tpu.memory_space<vmem>>, vector<1x4x15xf32>,
    %358 = vector.extract_strided_slice %342 {offsets = [0, 14], sizes = [4, 1], strides = [1, 1]} : vector<4x16xf32> to vector<4x1xf32>
    %c2_216 = arith.constant 2 : index
    %c0_217 = arith.constant 0 : index
    %c287 = arith.constant 287 : index
    %359 = vector.load %arg5[%c2_216, %c0_217, %c287] : memref<3x4x288xf32, #tpu.memory_space<vmem>>, vector<1x4x1xf32>
    %360 = vector.shape_cast %359 : vector<1x4x1xf32> to vector<4x1xf32>
    %361 = vector.shape_cast %358 : vector<4x1xf32> to vector<1x4x1xf32>
    tpu.vector_store %arg5[%c2_216, %c0_217, %c287], %361 {strides = array<i32>} : memref<3x4x288xf32, #tpu.memory_space<vmem>>, vector<1x4x1xf32>,
    %cst = arith.constant 0.000000e+00 : f32
    %362 = vector.broadcast %cst : f32 to vector<4x256xf32>
    %c0_218 = arith.constant 0 : index
    %c0_219 = arith.constant 0 : index
    %c0_220 = arith.constant 0 : index
    %363 = vector.load %arg5[%c0_218, %c0_219, %c0_220] : memref<3x4x288xf32, #tpu.memory_space<vmem>>, vector<1x4x256xf32>
    %364 = vector.shape_cast %363 : vector<1x4x256xf32> to vector<4x256xf32>
    %c0_221 = arith.constant 0 : index
    %c0_222 = arith.constant 0 : index
    %c0_223 = arith.constant 0 : index
    %c0_224 = arith.constant 0 : index
    %365 = vector.load %arg2[%c0_221, %c0_222, %c0_223, %c0_224] : memref<3x3x4x4xf32, #tpu.memory_space<vmem>>, vector<1x1x4x4xf32>
    %366 = vector.shape_cast %365 : vector<1x1x4x4xf32> to vector<4x4xf32>
    %cst_225 = arith.constant dense<0.000000e+00> : vector<4x256xf32>
    %367 = tpu.matmul %366, %364, %cst_225 {dimension_numbers = #tpu.dot_dimension_numbers<[1], [0], [0], [1], [0, 0, 1, 1], [], []>} : vector<4x4xf32>, vector<4x256xf32>, vector<4x256xf32> -> vector<4x256xf32>
    %368 = arith.addf %362, %367 : vector<4x256xf32>
    %c1_226 = arith.constant 1 : index
    %c0_227 = arith.constant 0 : index
    %c0_228 = arith.constant 0 : index
    %369 = vector.load %arg5[%c1_226, %c0_227, %c0_228] : memref<3x4x288xf32, #tpu.memory_space<vmem>>, vector<1x4x256xf32>
    %370 = vector.shape_cast %369 : vector<1x4x256xf32> to vector<4x256xf32>
    %c0_229 = arith.constant 0 : index
    %c1_230 = arith.constant 1 : index
    %c0_231 = arith.constant 0 : index
    %c0_232 = arith.constant 0 : index
    %371 = vector.load %arg2[%c0_229, %c1_230, %c0_231, %c0_232] : memref<3x3x4x4xf32, #tpu.memory_space<vmem>>, vector<1x1x4x4xf32>
    %372 = vector.shape_cast %371 : vector<1x1x4x4xf32> to vector<4x4xf32>
    %cst_233 = arith.constant dense<0.000000e+00> : vector<4x256xf32>
    %373 = tpu.matmul %372, %370, %cst_233 {dimension_numbers = #tpu.dot_dimension_numbers<[1], [0], [0], [1], [0, 0, 1, 1], [], []>} : vector<4x4xf32>, vector<4x256xf32>, vector<4x256xf32> -> vector<4x256xf32>
    %374 = arith.addf %368, %373 : vector<4x256xf32>
    %c2_234 = arith.constant 2 : index
    %c0_235 = arith.constant 0 : index
    %c0_236 = arith.constant 0 : index
    %375 = vector.load %arg5[%c2_234, %c0_235, %c0_236] : memref<3x4x288xf32, #tpu.memory_space<vmem>>, vector<1x4x256xf32>
    %376 = vector.shape_cast %375 : vector<1x4x256xf32> to vector<4x256xf32>
    %c0_237 = arith.constant 0 : index
    %c2_238 = arith.constant 2 : index
    %c0_239 = arith.constant 0 : index
    %c0_240 = arith.constant 0 : index
    %377 = vector.load %arg2[%c0_237, %c2_238, %c0_239, %c0_240] : memref<3x3x4x4xf32, #tpu.memory_space<vmem>>, vector<1x1x4x4xf32>
    %378 = vector.shape_cast %377 : vector<1x1x4x4xf32> to vector<4x4xf32>
    %cst_241 = arith.constant dense<0.000000e+00> : vector<4x256xf32>
    %379 = tpu.matmul %378, %376, %cst_241 {dimension_numbers = #tpu.dot_dimension_numbers<[1], [0], [0], [1], [0, 0, 1, 1], [], []>} : vector<4x4xf32>, vector<4x256xf32>, vector<4x256xf32> -> vector<4x256xf32>
    %380 = arith.addf %374, %379 : vector<4x256xf32>
    %c0_242 = arith.constant 0 : index
    %c0_243 = arith.constant 0 : index
    %c16_244 = arith.constant 16 : index
    %381 = vector.load %arg5[%c0_242, %c0_243, %c16_244] : memref<3x4x288xf32, #tpu.memory_space<vmem>>, vector<1x4x256xf32>
    %382 = vector.shape_cast %381 : vector<1x4x256xf32> to vector<4x256xf32>
    %c1_245 = arith.constant 1 : index
    %c0_246 = arith.constant 0 : index
    %c0_247 = arith.constant 0 : index
    %c0_248 = arith.constant 0 : index
    %383 = vector.load %arg2[%c1_245, %c0_246, %c0_247, %c0_248] : memref<3x3x4x4xf32, #tpu.memory_space<vmem>>, vector<1x1x4x4xf32>
    %384 = vector.shape_cast %383 : vector<1x1x4x4xf32> to vector<4x4xf32>
    %cst_249 = arith.constant dense<0.000000e+00> : vector<4x256xf32>
    %385 = tpu.matmul %384, %382, %cst_249 {dimension_numbers = #tpu.dot_dimension_numbers<[1], [0], [0], [1], [0, 0, 1, 1], [], []>} : vector<4x4xf32>, vector<4x256xf32>, vector<4x256xf32> -> vector<4x256xf32>
    %386 = arith.addf %380, %385 : vector<4x256xf32>
    %c1_250 = arith.constant 1 : index
    %c0_251 = arith.constant 0 : index
    %c16_252 = arith.constant 16 : index
    %387 = vector.load %arg5[%c1_250, %c0_251, %c16_252] : memref<3x4x288xf32, #tpu.memory_space<vmem>>, vector<1x4x256xf32>
    %388 = vector.shape_cast %387 : vector<1x4x256xf32> to vector<4x256xf32>
    %c1_253 = arith.constant 1 : index
    %c1_254 = arith.constant 1 : index
    %c0_255 = arith.constant 0 : index
    %c0_256 = arith.constant 0 : index
    %389 = vector.load %arg2[%c1_253, %c1_254, %c0_255, %c0_256] : memref<3x3x4x4xf32, #tpu.memory_space<vmem>>, vector<1x1x4x4xf32>
    %390 = vector.shape_cast %389 : vector<1x1x4x4xf32> to vector<4x4xf32>
    %cst_257 = arith.constant dense<0.000000e+00> : vector<4x256xf32>
    %391 = tpu.matmul %390, %388, %cst_257 {dimension_numbers = #tpu.dot_dimension_numbers<[1], [0], [0], [1], [0, 0, 1, 1], [], []>} : vector<4x4xf32>, vector<4x256xf32>, vector<4x256xf32> -> vector<4x256xf32>
    %392 = arith.addf %386, %391 : vector<4x256xf32>
    %c2_258 = arith.constant 2 : index
    %c0_259 = arith.constant 0 : index
    %c16_260 = arith.constant 16 : index
    %393 = vector.load %arg5[%c2_258, %c0_259, %c16_260] : memref<3x4x288xf32, #tpu.memory_space<vmem>>, vector<1x4x256xf32>
    %394 = vector.shape_cast %393 : vector<1x4x256xf32> to vector<4x256xf32>
    %c1_261 = arith.constant 1 : index
    %c2_262 = arith.constant 2 : index
    %c0_263 = arith.constant 0 : index
    %c0_264 = arith.constant 0 : index
    %395 = vector.load %arg2[%c1_261, %c2_262, %c0_263, %c0_264] : memref<3x3x4x4xf32, #tpu.memory_space<vmem>>, vector<1x1x4x4xf32>
    %396 = vector.shape_cast %395 : vector<1x1x4x4xf32> to vector<4x4xf32>
    %cst_265 = arith.constant dense<0.000000e+00> : vector<4x256xf32>
    %397 = tpu.matmul %396, %394, %cst_265 {dimension_numbers = #tpu.dot_dimension_numbers<[1], [0], [0], [1], [0, 0, 1, 1], [], []>} : vector<4x4xf32>, vector<4x256xf32>, vector<4x256xf32> -> vector<4x256xf32>
    %398 = arith.addf %392, %397 : vector<4x256xf32>
    %c0_266 = arith.constant 0 : index
    %c0_267 = arith.constant 0 : index
    %c32_268 = arith.constant 32 : index
    %399 = vector.load %arg5[%c0_266, %c0_267, %c32_268] : memref<3x4x288xf32, #tpu.memory_space<vmem>>, vector<1x4x256xf32>
    %400 = vector.shape_cast %399 : vector<1x4x256xf32> to vector<4x256xf32>
    %c2_269 = arith.constant 2 : index
    %c0_270 = arith.constant 0 : index
    %c0_271 = arith.constant 0 : index
    %c0_272 = arith.constant 0 : index
    %401 = vector.load %arg2[%c2_269, %c0_270, %c0_271, %c0_272] : memref<3x3x4x4xf32, #tpu.memory_space<vmem>>, vector<1x1x4x4xf32>
    %402 = vector.shape_cast %401 : vector<1x1x4x4xf32> to vector<4x4xf32>
    %cst_273 = arith.constant dense<0.000000e+00> : vector<4x256xf32>
    %403 = tpu.matmul %402, %400, %cst_273 {dimension_numbers = #tpu.dot_dimension_numbers<[1], [0], [0], [1], [0, 0, 1, 1], [], []>} : vector<4x4xf32>, vector<4x256xf32>, vector<4x256xf32> -> vector<4x256xf32>
    %404 = arith.addf %398, %403 : vector<4x256xf32>
    %c1_274 = arith.constant 1 : index
    %c0_275 = arith.constant 0 : index
    %c32_276 = arith.constant 32 : index
    %405 = vector.load %arg5[%c1_274, %c0_275, %c32_276] : memref<3x4x288xf32, #tpu.memory_space<vmem>>, vector<1x4x256xf32>
    %406 = vector.shape_cast %405 : vector<1x4x256xf32> to vector<4x256xf32>
    %c2_277 = arith.constant 2 : index
    %c1_278 = arith.constant 1 : index
    %c0_279 = arith.constant 0 : index
    %c0_280 = arith.constant 0 : index
    %407 = vector.load %arg2[%c2_277, %c1_278, %c0_279, %c0_280] : memref<3x3x4x4xf32, #tpu.memory_space<vmem>>, vector<1x1x4x4xf32>
    %408 = vector.shape_cast %407 : vector<1x1x4x4xf32> to vector<4x4xf32>
    %cst_281 = arith.constant dense<0.000000e+00> : vector<4x256xf32>
    %409 = tpu.matmul %408, %406, %cst_281 {dimension_numbers = #tpu.dot_dimension_numbers<[1], [0], [0], [1], [0, 0, 1, 1], [], []>} : vector<4x4xf32>, vector<4x256xf32>, vector<4x256xf32> -> vector<4x256xf32>
    %410 = arith.addf %404, %409 : vector<4x256xf32>
    %c2_282 = arith.constant 2 : index
    %c0_283 = arith.constant 0 : index
    %c32_284 = arith.constant 32 : index
    %411 = vector.load %arg5[%c2_282, %c0_283, %c32_284] : memref<3x4x288xf32, #tpu.memory_space<vmem>>, vector<1x4x256xf32>
    %412 = vector.shape_cast %411 : vector<1x4x256xf32> to vector<4x256xf32>
    %c2_285 = arith.constant 2 : index
    %c2_286 = arith.constant 2 : index
    %c0_287 = arith.constant 0 : index
    %c0_288 = arith.constant 0 : index
    %413 = vector.load %arg2[%c2_285, %c2_286, %c0_287, %c0_288] : memref<3x3x4x4xf32, #tpu.memory_space<vmem>>, vector<1x1x4x4xf32>
    %414 = vector.shape_cast %413 : vector<1x1x4x4xf32> to vector<4x4xf32>
    %cst_289 = arith.constant dense<0.000000e+00> : vector<4x256xf32>
    %415 = tpu.matmul %414, %412, %cst_289 {dimension_numbers = #tpu.dot_dimension_numbers<[1], [0], [0], [1], [0, 0, 1, 1], [], []>} : vector<4x4xf32>, vector<4x256xf32>, vector<4x256xf32> -> vector<4x256xf32>
    %416 = arith.addf %410, %415 : vector<4x256xf32>
    %cst_290 = arith.constant dense<0.000000e+00> : vector<4xf32>
    %417 = vector.multi_reduction <add>, %416, %cst_290 [1] : vector<4x256xf32> to vector<4xf32>
    %418 = vector.shape_cast %417 : vector<4xf32> to vector<4x1xf32>
    %cst_291 = arith.constant 3.906250e-03 : f32
    %419 = vector.broadcast %cst_291 : f32 to vector<4x1xf32>
    %420 = arith.mulf %418, %419 : vector<4x1xf32>
    %421 = arith.mulf %416, %416 : vector<4x256xf32>
    %cst_292 = arith.constant dense<0.000000e+00> : vector<4xf32>
    %422 = vector.multi_reduction <add>, %421, %cst_292 [1] : vector<4x256xf32> to vector<4xf32>
    %423 = vector.shape_cast %422 : vector<4xf32> to vector<4x1xf32>
    %cst_293 = arith.constant 3.906250e-03 : f32
    %424 = vector.broadcast %cst_293 : f32 to vector<4x1xf32>
    %425 = arith.mulf %423, %424 : vector<4x1xf32>
    %426 = arith.mulf %420, %420 : vector<4x1xf32>
    %427 = arith.subf %425, %426 : vector<4x1xf32>
    %428 = vector.broadcast %420 : vector<4x1xf32> to vector<4x256xf32>
    %429 = arith.subf %416, %428 : vector<4x256xf32>
    %cst_294 = arith.constant 9.99999974E-6 : f32
    %430 = vector.broadcast %cst_294 : f32 to vector<4x1xf32>
    %431 = arith.addf %427, %430 : vector<4x1xf32>
    %432 = math.rsqrt %431 : vector<4x1xf32>
    %433 = vector.broadcast %432 : vector<4x1xf32> to vector<4x256xf32>
    %434 = arith.mulf %429, %433 : vector<4x256xf32>
    %cst_295 = arith.constant 0.000000e+00 : f32
    %435 = vector.broadcast %cst_295 : f32 to vector<4x256xf32>
    %436 = arith.maximumf %434, %435 : vector<4x256xf32>
    %437 = vector.extract_strided_slice %436 {offsets = [0, 16], sizes = [4, 16], strides = [1, 1]} : vector<4x256xf32> to vector<4x16xf32>
    %c1_296 = arith.constant 1 : index
    %c0_297 = arith.constant 0 : index
    %c0_298 = arith.constant 0 : index
    %438 = vector.load %arg5[%c1_296, %c0_297, %c0_298] : memref<3x4x288xf32, #tpu.memory_space<vmem>>, vector<1x4x16xf32>
    %439 = vector.shape_cast %438 : vector<1x4x16xf32> to vector<4x16xf32>
    %440 = vector.shape_cast %437 : vector<4x16xf32> to vector<1x4x16xf32>
    tpu.vector_store %arg5[%c1_296, %c0_297, %c0_298], %440 {strides = array<i32>} : memref<3x4x288xf32, #tpu.memory_space<vmem>>, vector<1x4x16xf32>,
    %441 = vector.extract_strided_slice %437 {offsets = [0, 1], sizes = [4, 1], strides = [1, 1]} : vector<4x16xf32> to vector<4x1xf32>
    %c0_299 = arith.constant 0 : index
    %c0_300 = arith.constant 0 : index
    %c0_301 = arith.constant 0 : index
    %442 = vector.load %arg5[%c0_299, %c0_300, %c0_301] : memref<3x4x288xf32, #tpu.memory_space<vmem>>, vector<1x4x1xf32>
    %443 = vector.shape_cast %442 : vector<1x4x1xf32> to vector<4x1xf32>
    %444 = vector.shape_cast %441 : vector<4x1xf32> to vector<1x4x1xf32>
    tpu.vector_store %arg5[%c0_299, %c0_300, %c0_301], %444 {strides = array<i32>} : memref<3x4x288xf32, #tpu.memory_space<vmem>>, vector<1x4x1xf32>,
    %445 = vector.extract_strided_slice %437 {offsets = [0, 0], sizes = [4, 15], strides = [1, 1]} : vector<4x16xf32> to vector<4x15xf32>
    %c0_302 = arith.constant 0 : index
    %c0_303 = arith.constant 0 : index
    %c1_304 = arith.constant 1 : index
    %446 = vector.load %arg5[%c0_302, %c0_303, %c1_304] : memref<3x4x288xf32, #tpu.memory_space<vmem>>, vector<1x4x15xf32>
    %447 = vector.shape_cast %446 : vector<1x4x15xf32> to vector<4x15xf32>
    %448 = vector.shape_cast %445 : vector<4x15xf32> to vector<1x4x15xf32>
    tpu.vector_store %arg5[%c0_302, %c0_303, %c1_304], %448 {strides = array<i32>} : memref<3x4x288xf32, #tpu.memory_space<vmem>>, vector<1x4x15xf32>,
    %449 = vector.extract_strided_slice %437 {offsets = [0, 1], sizes = [4, 15], strides = [1, 1]} : vector<4x16xf32> to vector<4x15xf32>
    %c2_305 = arith.constant 2 : index
    %c0_306 = arith.constant 0 : index
    %c0_307 = arith.constant 0 : index
    %450 = vector.load %arg5[%c2_305, %c0_306, %c0_307] : memref<3x4x288xf32, #tpu.memory_space<vmem>>, vector<1x4x15xf32>
    %451 = vector.shape_cast %450 : vector<1x4x15xf32> to vector<4x15xf32>
    %452 = vector.shape_cast %449 : vector<4x15xf32> to vector<1x4x15xf32>
    tpu.vector_store %arg5[%c2_305, %c0_306, %c0_307], %452 {strides = array<i32>} : memref<3x4x288xf32, #tpu.memory_space<vmem>>, vector<1x4x15xf32>,
    %453 = vector.extract_strided_slice %437 {offsets = [0, 14], sizes = [4, 1], strides = [1, 1]} : vector<4x16xf32> to vector<4x1xf32>
    %c2_308 = arith.constant 2 : index
    %c0_309 = arith.constant 0 : index
    %c15_310 = arith.constant 15 : index
    %454 = vector.load %arg5[%c2_308, %c0_309, %c15_310] : memref<3x4x288xf32, #tpu.memory_space<vmem>>, vector<1x4x1xf32>
    %455 = vector.shape_cast %454 : vector<1x4x1xf32> to vector<4x1xf32>
    %456 = vector.shape_cast %453 : vector<4x1xf32> to vector<1x4x1xf32>
    tpu.vector_store %arg5[%c2_308, %c0_309, %c15_310], %456 {strides = array<i32>} : memref<3x4x288xf32, #tpu.memory_space<vmem>>, vector<1x4x1xf32>,
    %457 = vector.extract_strided_slice %436 {offsets = [0, 0], sizes = [4, 16], strides = [1, 1]} : vector<4x256xf32> to vector<4x16xf32>
    %c1_311 = arith.constant 1 : index
    %c0_312 = arith.constant 0 : index
    %c16_313 = arith.constant 16 : index
    %458 = vector.load %arg5[%c1_311, %c0_312, %c16_313] : memref<3x4x288xf32, #tpu.memory_space<vmem>>, vector<1x4x16xf32>
    %459 = vector.shape_cast %458 : vector<1x4x16xf32> to vector<4x16xf32>
    %460 = vector.shape_cast %457 : vector<4x16xf32> to vector<1x4x16xf32>
    tpu.vector_store %arg5[%c1_311, %c0_312, %c16_313], %460 {strides = array<i32>} : memref<3x4x288xf32, #tpu.memory_space<vmem>>, vector<1x4x16xf32>,
    %461 = vector.extract_strided_slice %457 {offsets = [0, 1], sizes = [4, 1], strides = [1, 1]} : vector<4x16xf32> to vector<4x1xf32>
    %c0_314 = arith.constant 0 : index
    %c0_315 = arith.constant 0 : index
    %c16_316 = arith.constant 16 : index
    %462 = vector.load %arg5[%c0_314, %c0_315, %c16_316] : memref<3x4x288xf32, #tpu.memory_space<vmem>>, vector<1x4x1xf32>
    %463 = vector.shape_cast %462 : vector<1x4x1xf32> to vector<4x1xf32>
    %464 = vector.shape_cast %461 : vector<4x1xf32> to vector<1x4x1xf32>
    tpu.vector_store %arg5[%c0_314, %c0_315, %c16_316], %464 {strides = array<i32>} : memref<3x4x288xf32, #tpu.memory_space<vmem>>, vector<1x4x1xf32>,
    %465 = vector.extract_strided_slice %457 {offsets = [0, 0], sizes = [4, 15], strides = [1, 1]} : vector<4x16xf32> to vector<4x15xf32>
    %c0_317 = arith.constant 0 : index
    %c0_318 = arith.constant 0 : index
    %c17_319 = arith.constant 17 : index
    %466 = vector.load %arg5[%c0_317, %c0_318, %c17_319] : memref<3x4x288xf32, #tpu.memory_space<vmem>>, vector<1x4x15xf32>
    %467 = vector.shape_cast %466 : vector<1x4x15xf32> to vector<4x15xf32>
    %468 = vector.shape_cast %465 : vector<4x15xf32> to vector<1x4x15xf32>
    tpu.vector_store %arg5[%c0_317, %c0_318, %c17_319], %468 {strides = array<i32>} : memref<3x4x288xf32, #tpu.memory_space<vmem>>, vector<1x4x15xf32>,
    %469 = vector.extract_strided_slice %457 {offsets = [0, 1], sizes = [4, 15], strides = [1, 1]} : vector<4x16xf32> to vector<4x15xf32>
    %c2_320 = arith.constant 2 : index
    %c0_321 = arith.constant 0 : index
    %c16_322 = arith.constant 16 : index
    %470 = vector.load %arg5[%c2_320, %c0_321, %c16_322] : memref<3x4x288xf32, #tpu.memory_space<vmem>>, vector<1x4x15xf32>
    %471 = vector.shape_cast %470 : vector<1x4x15xf32> to vector<4x15xf32>
    %472 = vector.shape_cast %469 : vector<4x15xf32> to vector<1x4x15xf32>
    tpu.vector_store %arg5[%c2_320, %c0_321, %c16_322], %472 {strides = array<i32>} : memref<3x4x288xf32, #tpu.memory_space<vmem>>, vector<1x4x15xf32>,
    %473 = vector.extract_strided_slice %457 {offsets = [0, 14], sizes = [4, 1], strides = [1, 1]} : vector<4x16xf32> to vector<4x1xf32>
    %c2_323 = arith.constant 2 : index
    %c0_324 = arith.constant 0 : index
    %c31_325 = arith.constant 31 : index
    %474 = vector.load %arg5[%c2_323, %c0_324, %c31_325] : memref<3x4x288xf32, #tpu.memory_space<vmem>>, vector<1x4x1xf32>
    %475 = vector.shape_cast %474 : vector<1x4x1xf32> to vector<4x1xf32>
    %476 = vector.shape_cast %473 : vector<4x1xf32> to vector<1x4x1xf32>
    tpu.vector_store %arg5[%c2_323, %c0_324, %c31_325], %476 {strides = array<i32>} : memref<3x4x288xf32, #tpu.memory_space<vmem>>, vector<1x4x1xf32>,
    %477 = vector.extract_strided_slice %436 {offsets = [0, 16], sizes = [4, 16], strides = [1, 1]} : vector<4x256xf32> to vector<4x16xf32>
    %c1_326 = arith.constant 1 : index
    %c0_327 = arith.constant 0 : index
    %c32_328 = arith.constant 32 : index
    %478 = vector.load %arg5[%c1_326, %c0_327, %c32_328] : memref<3x4x288xf32, #tpu.memory_space<vmem>>, vector<1x4x16xf32>
    %479 = vector.shape_cast %478 : vector<1x4x16xf32> to vector<4x16xf32>
    %480 = vector.shape_cast %477 : vector<4x16xf32> to vector<1x4x16xf32>
    tpu.vector_store %arg5[%c1_326, %c0_327, %c32_328], %480 {strides = array<i32>} : memref<3x4x288xf32, #tpu.memory_space<vmem>>, vector<1x4x16xf32>,
    %481 = vector.extract_strided_slice %477 {offsets = [0, 1], sizes = [4, 1], strides = [1, 1]} : vector<4x16xf32> to vector<4x1xf32>
    %c0_329 = arith.constant 0 : index
    %c0_330 = arith.constant 0 : index
    %c32_331 = arith.constant 32 : index
    %482 = vector.load %arg5[%c0_329, %c0_330, %c32_331] : memref<3x4x288xf32, #tpu.memory_space<vmem>>, vector<1x4x1xf32>
    %483 = vector.shape_cast %482 : vector<1x4x1xf32> to vector<4x1xf32>
    %484 = vector.shape_cast %481 : vector<4x1xf32> to vector<1x4x1xf32>
    tpu.vector_store %arg5[%c0_329, %c0_330, %c32_331], %484 {strides = array<i32>} : memref<3x4x288xf32, #tpu.memory_space<vmem>>, vector<1x4x1xf32>,
    %485 = vector.extract_strided_slice %477 {offsets = [0, 0], sizes = [4, 15], strides = [1, 1]} : vector<4x16xf32> to vector<4x15xf32>
    %c0_332 = arith.constant 0 : index
    %c0_333 = arith.constant 0 : index
    %c33_334 = arith.constant 33 : index
    %486 = vector.load %arg5[%c0_332, %c0_333, %c33_334] : memref<3x4x288xf32, #tpu.memory_space<vmem>>, vector<1x4x15xf32>
    %487 = vector.shape_cast %486 : vector<1x4x15xf32> to vector<4x15xf32>
    %488 = vector.shape_cast %485 : vector<4x15xf32> to vector<1x4x15xf32>
    tpu.vector_store %arg5[%c0_332, %c0_333, %c33_334], %488 {strides = array<i32>} : memref<3x4x288xf32, #tpu.memory_space<vmem>>, vector<1x4x15xf32>,
    %489 = vector.extract_strided_slice %477 {offsets = [0, 1], sizes = [4, 15], strides = [1, 1]} : vector<4x16xf32> to vector<4x15xf32>
    %c2_335 = arith.constant 2 : index
    %c0_336 = arith.constant 0 : index
    %c32_337 = arith.constant 32 : index
    %490 = vector.load %arg5[%c2_335, %c0_336, %c32_337] : memref<3x4x288xf32, #tpu.memory_space<vmem>>, vector<1x4x15xf32>
    %491 = vector.shape_cast %490 : vector<1x4x15xf32> to vector<4x15xf32>
    %492 = vector.shape_cast %489 : vector<4x15xf32> to vector<1x4x15xf32>
    tpu.vector_store %arg5[%c2_335, %c0_336, %c32_337], %492 {strides = array<i32>} : memref<3x4x288xf32, #tpu.memory_space<vmem>>, vector<1x4x15xf32>,
    %493 = vector.extract_strided_slice %477 {offsets = [0, 14], sizes = [4, 1], strides = [1, 1]} : vector<4x16xf32> to vector<4x1xf32>
    %c2_338 = arith.constant 2 : index
    %c0_339 = arith.constant 0 : index
    %c47_340 = arith.constant 47 : index
    %494 = vector.load %arg5[%c2_338, %c0_339, %c47_340] : memref<3x4x288xf32, #tpu.memory_space<vmem>>, vector<1x4x1xf32>
    %495 = vector.shape_cast %494 : vector<1x4x1xf32> to vector<4x1xf32>
    %496 = vector.shape_cast %493 : vector<4x1xf32> to vector<1x4x1xf32>
    tpu.vector_store %arg5[%c2_338, %c0_339, %c47_340], %496 {strides = array<i32>} : memref<3x4x288xf32, #tpu.memory_space<vmem>>, vector<1x4x1xf32>,
    %497 = vector.extract_strided_slice %436 {offsets = [0, 32], sizes = [4, 16], strides = [1, 1]} : vector<4x256xf32> to vector<4x16xf32>
    %c1_341 = arith.constant 1 : index
    %c0_342 = arith.constant 0 : index
    %c48_343 = arith.constant 48 : index
    %498 = vector.load %arg5[%c1_341, %c0_342, %c48_343] : memref<3x4x288xf32, #tpu.memory_space<vmem>>, vector<1x4x16xf32>
    %499 = vector.shape_cast %498 : vector<1x4x16xf32> to vector<4x16xf32>
    %500 = vector.shape_cast %497 : vector<4x16xf32> to vector<1x4x16xf32>
    tpu.vector_store %arg5[%c1_341, %c0_342, %c48_343], %500 {strides = array<i32>} : memref<3x4x288xf32, #tpu.memory_space<vmem>>, vector<1x4x16xf32>,
    %501 = vector.extract_strided_slice %497 {offsets = [0, 1], sizes = [4, 1], strides = [1, 1]} : vector<4x16xf32> to vector<4x1xf32>
    %c0_344 = arith.constant 0 : index
    %c0_345 = arith.constant 0 : index
    %c48_346 = arith.constant 48 : index
    %502 = vector.load %arg5[%c0_344, %c0_345, %c48_346] : memref<3x4x288xf32, #tpu.memory_space<vmem>>, vector<1x4x1xf32>
    %503 = vector.shape_cast %502 : vector<1x4x1xf32> to vector<4x1xf32>
    %504 = vector.shape_cast %501 : vector<4x1xf32> to vector<1x4x1xf32>
    tpu.vector_store %arg5[%c0_344, %c0_345, %c48_346], %504 {strides = array<i32>} : memref<3x4x288xf32, #tpu.memory_space<vmem>>, vector<1x4x1xf32>,
    %505 = vector.extract_strided_slice %497 {offsets = [0, 0], sizes = [4, 15], strides = [1, 1]} : vector<4x16xf32> to vector<4x15xf32>
    %c0_347 = arith.constant 0 : index
    %c0_348 = arith.constant 0 : index
    %c49_349 = arith.constant 49 : index
    %506 = vector.load %arg5[%c0_347, %c0_348, %c49_349] : memref<3x4x288xf32, #tpu.memory_space<vmem>>, vector<1x4x15xf32>
    %507 = vector.shape_cast %506 : vector<1x4x15xf32> to vector<4x15xf32>
    %508 = vector.shape_cast %505 : vector<4x15xf32> to vector<1x4x15xf32>
    tpu.vector_store %arg5[%c0_347, %c0_348, %c49_349], %508 {strides = array<i32>} : memref<3x4x288xf32, #tpu.memory_space<vmem>>, vector<1x4x15xf32>,
    %509 = vector.extract_strided_slice %497 {offsets = [0, 1], sizes = [4, 15], strides = [1, 1]} : vector<4x16xf32> to vector<4x15xf32>
    %c2_350 = arith.constant 2 : index
    %c0_351 = arith.constant 0 : index
    %c48_352 = arith.constant 48 : index
    %510 = vector.load %arg5[%c2_350, %c0_351, %c48_352] : memref<3x4x288xf32, #tpu.memory_space<vmem>>, vector<1x4x15xf32>
    %511 = vector.shape_cast %510 : vector<1x4x15xf32> to vector<4x15xf32>
    %512 = vector.shape_cast %509 : vector<4x15xf32> to vector<1x4x15xf32>
    tpu.vector_store %arg5[%c2_350, %c0_351, %c48_352], %512 {strides = array<i32>} : memref<3x4x288xf32, #tpu.memory_space<vmem>>, vector<1x4x15xf32>,
    %513 = vector.extract_strided_slice %497 {offsets = [0, 14], sizes = [4, 1], strides = [1, 1]} : vector<4x16xf32> to vector<4x1xf32>
    %c2_353 = arith.constant 2 : index
    %c0_354 = arith.constant 0 : index
    %c63_355 = arith.constant 63 : index
    %514 = vector.load %arg5[%c2_353, %c0_354, %c63_355] : memref<3x4x288xf32, #tpu.memory_space<vmem>>, vector<1x4x1xf32>
    %515 = vector.shape_cast %514 : vector<1x4x1xf32> to vector<4x1xf32>
    %516 = vector.shape_cast %513 : vector<4x1xf32> to vector<1x4x1xf32>
    tpu.vector_store %arg5[%c2_353, %c0_354, %c63_355], %516 {strides = array<i32>} : memref<3x4x288xf32, #tpu.memory_space<vmem>>, vector<1x4x1xf32>,
    %517 = vector.extract_strided_slice %436 {offsets = [0, 48], sizes = [4, 16], strides = [1, 1]} : vector<4x256xf32> to vector<4x16xf32>
    %c1_356 = arith.constant 1 : index
    %c0_357 = arith.constant 0 : index
    %c64_358 = arith.constant 64 : index
    %518 = vector.load %arg5[%c1_356, %c0_357, %c64_358] : memref<3x4x288xf32, #tpu.memory_space<vmem>>, vector<1x4x16xf32>
    %519 = vector.shape_cast %518 : vector<1x4x16xf32> to vector<4x16xf32>
    %520 = vector.shape_cast %517 : vector<4x16xf32> to vector<1x4x16xf32>
    tpu.vector_store %arg5[%c1_356, %c0_357, %c64_358], %520 {strides = array<i32>} : memref<3x4x288xf32, #tpu.memory_space<vmem>>, vector<1x4x16xf32>,
    %521 = vector.extract_strided_slice %517 {offsets = [0, 1], sizes = [4, 1], strides = [1, 1]} : vector<4x16xf32> to vector<4x1xf32>
    %c0_359 = arith.constant 0 : index
    %c0_360 = arith.constant 0 : index
    %c64_361 = arith.constant 64 : index
    %522 = vector.load %arg5[%c0_359, %c0_360, %c64_361] : memref<3x4x288xf32, #tpu.memory_space<vmem>>, vector<1x4x1xf32>
    %523 = vector.shape_cast %522 : vector<1x4x1xf32> to vector<4x1xf32>
    %524 = vector.shape_cast %521 : vector<4x1xf32> to vector<1x4x1xf32>
    tpu.vector_store %arg5[%c0_359, %c0_360, %c64_361], %524 {strides = array<i32>} : memref<3x4x288xf32, #tpu.memory_space<vmem>>, vector<1x4x1xf32>,
    %525 = vector.extract_strided_slice %517 {offsets = [0, 0], sizes = [4, 15], strides = [1, 1]} : vector<4x16xf32> to vector<4x15xf32>
    %c0_362 = arith.constant 0 : index
    %c0_363 = arith.constant 0 : index
    %c65_364 = arith.constant 65 : index
    %526 = vector.load %arg5[%c0_362, %c0_363, %c65_364] : memref<3x4x288xf32, #tpu.memory_space<vmem>>, vector<1x4x15xf32>
    %527 = vector.shape_cast %526 : vector<1x4x15xf32> to vector<4x15xf32>
    %528 = vector.shape_cast %525 : vector<4x15xf32> to vector<1x4x15xf32>
    tpu.vector_store %arg5[%c0_362, %c0_363, %c65_364], %528 {strides = array<i32>} : memref<3x4x288xf32, #tpu.memory_space<vmem>>, vector<1x4x15xf32>,
    %529 = vector.extract_strided_slice %517 {offsets = [0, 1], sizes = [4, 15], strides = [1, 1]} : vector<4x16xf32> to vector<4x15xf32>
    %c2_365 = arith.constant 2 : index
    %c0_366 = arith.constant 0 : index
    %c64_367 = arith.constant 64 : index
    %530 = vector.load %arg5[%c2_365, %c0_366, %c64_367] : memref<3x4x288xf32, #tpu.memory_space<vmem>>, vector<1x4x15xf32>
    %531 = vector.shape_cast %530 : vector<1x4x15xf32> to vector<4x15xf32>
    %532 = vector.shape_cast %529 : vector<4x15xf32> to vector<1x4x15xf32>
    tpu.vector_store %arg5[%c2_365, %c0_366, %c64_367], %532 {strides = array<i32>} : memref<3x4x288xf32, #tpu.memory_space<vmem>>, vector<1x4x15xf32>,
    %533 = vector.extract_strided_slice %517 {offsets = [0, 14], sizes = [4, 1], strides = [1, 1]} : vector<4x16xf32> to vector<4x1xf32>
    %c2_368 = arith.constant 2 : index
    %c0_369 = arith.constant 0 : index
    %c79_370 = arith.constant 79 : index
    %534 = vector.load %arg5[%c2_368, %c0_369, %c79_370] : memref<3x4x288xf32, #tpu.memory_space<vmem>>, vector<1x4x1xf32>
    %535 = vector.shape_cast %534 : vector<1x4x1xf32> to vector<4x1xf32>
    %536 = vector.shape_cast %533 : vector<4x1xf32> to vector<1x4x1xf32>
    tpu.vector_store %arg5[%c2_368, %c0_369, %c79_370], %536 {strides = array<i32>} : memref<3x4x288xf32, #tpu.memory_space<vmem>>, vector<1x4x1xf32>,
    %537 = vector.extract_strided_slice %436 {offsets = [0, 64], sizes = [4, 16], strides = [1, 1]} : vector<4x256xf32> to vector<4x16xf32>
    %c1_371 = arith.constant 1 : index
    %c0_372 = arith.constant 0 : index
    %c80_373 = arith.constant 80 : index
    %538 = vector.load %arg5[%c1_371, %c0_372, %c80_373] : memref<3x4x288xf32, #tpu.memory_space<vmem>>, vector<1x4x16xf32>
    %539 = vector.shape_cast %538 : vector<1x4x16xf32> to vector<4x16xf32>
    %540 = vector.shape_cast %537 : vector<4x16xf32> to vector<1x4x16xf32>
    tpu.vector_store %arg5[%c1_371, %c0_372, %c80_373], %540 {strides = array<i32>} : memref<3x4x288xf32, #tpu.memory_space<vmem>>, vector<1x4x16xf32>,
    %541 = vector.extract_strided_slice %537 {offsets = [0, 1], sizes = [4, 1], strides = [1, 1]} : vector<4x16xf32> to vector<4x1xf32>
    %c0_374 = arith.constant 0 : index
    %c0_375 = arith.constant 0 : index
    %c80_376 = arith.constant 80 : index
    %542 = vector.load %arg5[%c0_374, %c0_375, %c80_376] : memref<3x4x288xf32, #tpu.memory_space<vmem>>, vector<1x4x1xf32>
    %543 = vector.shape_cast %542 : vector<1x4x1xf32> to vector<4x1xf32>
    %544 = vector.shape_cast %541 : vector<4x1xf32> to vector<1x4x1xf32>
    tpu.vector_store %arg5[%c0_374, %c0_375, %c80_376], %544 {strides = array<i32>} : memref<3x4x288xf32, #tpu.memory_space<vmem>>, vector<1x4x1xf32>,
    %545 = vector.extract_strided_slice %537 {offsets = [0, 0], sizes = [4, 15], strides = [1, 1]} : vector<4x16xf32> to vector<4x15xf32>
    %c0_377 = arith.constant 0 : index
    %c0_378 = arith.constant 0 : index
    %c81_379 = arith.constant 81 : index
    %546 = vector.load %arg5[%c0_377, %c0_378, %c81_379] : memref<3x4x288xf32, #tpu.memory_space<vmem>>, vector<1x4x15xf32>
    %547 = vector.shape_cast %546 : vector<1x4x15xf32> to vector<4x15xf32>
    %548 = vector.shape_cast %545 : vector<4x15xf32> to vector<1x4x15xf32>
    tpu.vector_store %arg5[%c0_377, %c0_378, %c81_379], %548 {strides = array<i32>} : memref<3x4x288xf32, #tpu.memory_space<vmem>>, vector<1x4x15xf32>,
    %549 = vector.extract_strided_slice %537 {offsets = [0, 1], sizes = [4, 15], strides = [1, 1]} : vector<4x16xf32> to vector<4x15xf32>
    %c2_380 = arith.constant 2 : index
    %c0_381 = arith.constant 0 : index
    %c80_382 = arith.constant 80 : index
    %550 = vector.load %arg5[%c2_380, %c0_381, %c80_382] : memref<3x4x288xf32, #tpu.memory_space<vmem>>, vector<1x4x15xf32>
    %551 = vector.shape_cast %550 : vector<1x4x15xf32> to vector<4x15xf32>
    %552 = vector.shape_cast %549 : vector<4x15xf32> to vector<1x4x15xf32>
    tpu.vector_store %arg5[%c2_380, %c0_381, %c80_382], %552 {strides = array<i32>} : memref<3x4x288xf32, #tpu.memory_space<vmem>>, vector<1x4x15xf32>,
    %553 = vector.extract_strided_slice %537 {offsets = [0, 14], sizes = [4, 1], strides = [1, 1]} : vector<4x16xf32> to vector<4x1xf32>
    %c2_383 = arith.constant 2 : index
    %c0_384 = arith.constant 0 : index
    %c95_385 = arith.constant 95 : index
    %554 = vector.load %arg5[%c2_383, %c0_384, %c95_385] : memref<3x4x288xf32, #tpu.memory_space<vmem>>, vector<1x4x1xf32>
    %555 = vector.shape_cast %554 : vector<1x4x1xf32> to vector<4x1xf32>
    %556 = vector.shape_cast %553 : vector<4x1xf32> to vector<1x4x1xf32>
    tpu.vector_store %arg5[%c2_383, %c0_384, %c95_385], %556 {strides = array<i32>} : memref<3x4x288xf32, #tpu.memory_space<vmem>>, vector<1x4x1xf32>,
    %557 = vector.extract_strided_slice %436 {offsets = [0, 80], sizes = [4, 16], strides = [1, 1]} : vector<4x256xf32> to vector<4x16xf32>
    %c1_386 = arith.constant 1 : index
    %c0_387 = arith.constant 0 : index
    %c96_388 = arith.constant 96 : index
    %558 = vector.load %arg5[%c1_386, %c0_387, %c96_388] : memref<3x4x288xf32, #tpu.memory_space<vmem>>, vector<1x4x16xf32>
    %559 = vector.shape_cast %558 : vector<1x4x16xf32> to vector<4x16xf32>
    %560 = vector.shape_cast %557 : vector<4x16xf32> to vector<1x4x16xf32>
    tpu.vector_store %arg5[%c1_386, %c0_387, %c96_388], %560 {strides = array<i32>} : memref<3x4x288xf32, #tpu.memory_space<vmem>>, vector<1x4x16xf32>,
    %561 = vector.extract_strided_slice %557 {offsets = [0, 1], sizes = [4, 1], strides = [1, 1]} : vector<4x16xf32> to vector<4x1xf32>
    %c0_389 = arith.constant 0 : index
    %c0_390 = arith.constant 0 : index
    %c96_391 = arith.constant 96 : index
    %562 = vector.load %arg5[%c0_389, %c0_390, %c96_391] : memref<3x4x288xf32, #tpu.memory_space<vmem>>, vector<1x4x1xf32>
    %563 = vector.shape_cast %562 : vector<1x4x1xf32> to vector<4x1xf32>
    %564 = vector.shape_cast %561 : vector<4x1xf32> to vector<1x4x1xf32>
    tpu.vector_store %arg5[%c0_389, %c0_390, %c96_391], %564 {strides = array<i32>} : memref<3x4x288xf32, #tpu.memory_space<vmem>>, vector<1x4x1xf32>,
    %565 = vector.extract_strided_slice %557 {offsets = [0, 0], sizes = [4, 15], strides = [1, 1]} : vector<4x16xf32> to vector<4x15xf32>
    %c0_392 = arith.constant 0 : index
    %c0_393 = arith.constant 0 : index
    %c97_394 = arith.constant 97 : index
    %566 = vector.load %arg5[%c0_392, %c0_393, %c97_394] : memref<3x4x288xf32, #tpu.memory_space<vmem>>, vector<1x4x15xf32>
    %567 = vector.shape_cast %566 : vector<1x4x15xf32> to vector<4x15xf32>
    %568 = vector.shape_cast %565 : vector<4x15xf32> to vector<1x4x15xf32>
    tpu.vector_store %arg5[%c0_392, %c0_393, %c97_394], %568 {strides = array<i32>} : memref<3x4x288xf32, #tpu.memory_space<vmem>>, vector<1x4x15xf32>,
    %569 = vector.extract_strided_slice %557 {offsets = [0, 1], sizes = [4, 15], strides = [1, 1]} : vector<4x16xf32> to vector<4x15xf32>
    %c2_395 = arith.constant 2 : index
    %c0_396 = arith.constant 0 : index
    %c96_397 = arith.constant 96 : index
    %570 = vector.load %arg5[%c2_395, %c0_396, %c96_397] : memref<3x4x288xf32, #tpu.memory_space<vmem>>, vector<1x4x15xf32>
    %571 = vector.shape_cast %570 : vector<1x4x15xf32> to vector<4x15xf32>
    %572 = vector.shape_cast %569 : vector<4x15xf32> to vector<1x4x15xf32>
    tpu.vector_store %arg5[%c2_395, %c0_396, %c96_397], %572 {strides = array<i32>} : memref<3x4x288xf32, #tpu.memory_space<vmem>>, vector<1x4x15xf32>,
    %573 = vector.extract_strided_slice %557 {offsets = [0, 14], sizes = [4, 1], strides = [1, 1]} : vector<4x16xf32> to vector<4x1xf32>
    %c2_398 = arith.constant 2 : index
    %c0_399 = arith.constant 0 : index
    %c111_400 = arith.constant 111 : index
    %574 = vector.load %arg5[%c2_398, %c0_399, %c111_400] : memref<3x4x288xf32, #tpu.memory_space<vmem>>, vector<1x4x1xf32>
    %575 = vector.shape_cast %574 : vector<1x4x1xf32> to vector<4x1xf32>
    %576 = vector.shape_cast %573 : vector<4x1xf32> to vector<1x4x1xf32>
    tpu.vector_store %arg5[%c2_398, %c0_399, %c111_400], %576 {strides = array<i32>} : memref<3x4x288xf32, #tpu.memory_space<vmem>>, vector<1x4x1xf32>,
    %577 = vector.extract_strided_slice %436 {offsets = [0, 96], sizes = [4, 16], strides = [1, 1]} : vector<4x256xf32> to vector<4x16xf32>
    %c1_401 = arith.constant 1 : index
    %c0_402 = arith.constant 0 : index
    %c112_403 = arith.constant 112 : index
    %578 = vector.load %arg5[%c1_401, %c0_402, %c112_403] : memref<3x4x288xf32, #tpu.memory_space<vmem>>, vector<1x4x16xf32>
    %579 = vector.shape_cast %578 : vector<1x4x16xf32> to vector<4x16xf32>
    %580 = vector.shape_cast %577 : vector<4x16xf32> to vector<1x4x16xf32>
    tpu.vector_store %arg5[%c1_401, %c0_402, %c112_403], %580 {strides = array<i32>} : memref<3x4x288xf32, #tpu.memory_space<vmem>>, vector<1x4x16xf32>,
    %581 = vector.extract_strided_slice %577 {offsets = [0, 1], sizes = [4, 1], strides = [1, 1]} : vector<4x16xf32> to vector<4x1xf32>
    %c0_404 = arith.constant 0 : index
    %c0_405 = arith.constant 0 : index
    %c112_406 = arith.constant 112 : index
    %582 = vector.load %arg5[%c0_404, %c0_405, %c112_406] : memref<3x4x288xf32, #tpu.memory_space<vmem>>, vector<1x4x1xf32>
    %583 = vector.shape_cast %582 : vector<1x4x1xf32> to vector<4x1xf32>
    %584 = vector.shape_cast %581 : vector<4x1xf32> to vector<1x4x1xf32>
    tpu.vector_store %arg5[%c0_404, %c0_405, %c112_406], %584 {strides = array<i32>} : memref<3x4x288xf32, #tpu.memory_space<vmem>>, vector<1x4x1xf32>,
    %585 = vector.extract_strided_slice %577 {offsets = [0, 0], sizes = [4, 15], strides = [1, 1]} : vector<4x16xf32> to vector<4x15xf32>
    %c0_407 = arith.constant 0 : index
    %c0_408 = arith.constant 0 : index
    %c113_409 = arith.constant 113 : index
    %586 = vector.load %arg5[%c0_407, %c0_408, %c113_409] : memref<3x4x288xf32, #tpu.memory_space<vmem>>, vector<1x4x15xf32>
    %587 = vector.shape_cast %586 : vector<1x4x15xf32> to vector<4x15xf32>
    %588 = vector.shape_cast %585 : vector<4x15xf32> to vector<1x4x15xf32>
    tpu.vector_store %arg5[%c0_407, %c0_408, %c113_409], %588 {strides = array<i32>} : memref<3x4x288xf32, #tpu.memory_space<vmem>>, vector<1x4x15xf32>,
    %589 = vector.extract_strided_slice %577 {offsets = [0, 1], sizes = [4, 15], strides = [1, 1]} : vector<4x16xf32> to vector<4x15xf32>
    %c2_410 = arith.constant 2 : index
    %c0_411 = arith.constant 0 : index
    %c112_412 = arith.constant 112 : index
    %590 = vector.load %arg5[%c2_410, %c0_411, %c112_412] : memref<3x4x288xf32, #tpu.memory_space<vmem>>, vector<1x4x15xf32>
    %591 = vector.shape_cast %590 : vector<1x4x15xf32> to vector<4x15xf32>
    %592 = vector.shape_cast %589 : vector<4x15xf32> to vector<1x4x15xf32>
    tpu.vector_store %arg5[%c2_410, %c0_411, %c112_412], %592 {strides = array<i32>} : memref<3x4x288xf32, #tpu.memory_space<vmem>>, vector<1x4x15xf32>,
    %593 = vector.extract_strided_slice %577 {offsets = [0, 14], sizes = [4, 1], strides = [1, 1]} : vector<4x16xf32> to vector<4x1xf32>
    %c2_413 = arith.constant 2 : index
    %c0_414 = arith.constant 0 : index
    %c127_415 = arith.constant 127 : index
    %594 = vector.load %arg5[%c2_413, %c0_414, %c127_415] : memref<3x4x288xf32, #tpu.memory_space<vmem>>, vector<1x4x1xf32>
    %595 = vector.shape_cast %594 : vector<1x4x1xf32> to vector<4x1xf32>
    %596 = vector.shape_cast %593 : vector<4x1xf32> to vector<1x4x1xf32>
    tpu.vector_store %arg5[%c2_413, %c0_414, %c127_415], %596 {strides = array<i32>} : memref<3x4x288xf32, #tpu.memory_space<vmem>>, vector<1x4x1xf32>,
    %597 = vector.extract_strided_slice %436 {offsets = [0, 112], sizes = [4, 16], strides = [1, 1]} : vector<4x256xf32> to vector<4x16xf32>
    %c1_416 = arith.constant 1 : index
    %c0_417 = arith.constant 0 : index
    %c128_418 = arith.constant 128 : index
    %598 = vector.load %arg5[%c1_416, %c0_417, %c128_418] : memref<3x4x288xf32, #tpu.memory_space<vmem>>, vector<1x4x16xf32>
    %599 = vector.shape_cast %598 : vector<1x4x16xf32> to vector<4x16xf32>
    %600 = vector.shape_cast %597 : vector<4x16xf32> to vector<1x4x16xf32>
    tpu.vector_store %arg5[%c1_416, %c0_417, %c128_418], %600 {strides = array<i32>} : memref<3x4x288xf32, #tpu.memory_space<vmem>>, vector<1x4x16xf32>,
    %601 = vector.extract_strided_slice %597 {offsets = [0, 1], sizes = [4, 1], strides = [1, 1]} : vector<4x16xf32> to vector<4x1xf32>
    %c0_419 = arith.constant 0 : index
    %c0_420 = arith.constant 0 : index
    %c128_421 = arith.constant 128 : index
    %602 = vector.load %arg5[%c0_419, %c0_420, %c128_421] : memref<3x4x288xf32, #tpu.memory_space<vmem>>, vector<1x4x1xf32>
    %603 = vector.shape_cast %602 : vector<1x4x1xf32> to vector<4x1xf32>
    %604 = vector.shape_cast %601 : vector<4x1xf32> to vector<1x4x1xf32>
    tpu.vector_store %arg5[%c0_419, %c0_420, %c128_421], %604 {strides = array<i32>} : memref<3x4x288xf32, #tpu.memory_space<vmem>>, vector<1x4x1xf32>,
    %605 = vector.extract_strided_slice %597 {offsets = [0, 0], sizes = [4, 15], strides = [1, 1]} : vector<4x16xf32> to vector<4x15xf32>
    %c0_422 = arith.constant 0 : index
    %c0_423 = arith.constant 0 : index
    %c129_424 = arith.constant 129 : index
    %606 = vector.load %arg5[%c0_422, %c0_423, %c129_424] : memref<3x4x288xf32, #tpu.memory_space<vmem>>, vector<1x4x15xf32>
    %607 = vector.shape_cast %606 : vector<1x4x15xf32> to vector<4x15xf32>
    %608 = vector.shape_cast %605 : vector<4x15xf32> to vector<1x4x15xf32>
    tpu.vector_store %arg5[%c0_422, %c0_423, %c129_424], %608 {strides = array<i32>} : memref<3x4x288xf32, #tpu.memory_space<vmem>>, vector<1x4x15xf32>,
    %609 = vector.extract_strided_slice %597 {offsets = [0, 1], sizes = [4, 15], strides = [1, 1]} : vector<4x16xf32> to vector<4x15xf32>
    %c2_425 = arith.constant 2 : index
    %c0_426 = arith.constant 0 : index
    %c128_427 = arith.constant 128 : index
    %610 = vector.load %arg5[%c2_425, %c0_426, %c128_427] : memref<3x4x288xf32, #tpu.memory_space<vmem>>, vector<1x4x15xf32>
    %611 = vector.shape_cast %610 : vector<1x4x15xf32> to vector<4x15xf32>
    %612 = vector.shape_cast %609 : vector<4x15xf32> to vector<1x4x15xf32>
    tpu.vector_store %arg5[%c2_425, %c0_426, %c128_427], %612 {strides = array<i32>} : memref<3x4x288xf32, #tpu.memory_space<vmem>>, vector<1x4x15xf32>,
    %613 = vector.extract_strided_slice %597 {offsets = [0, 14], sizes = [4, 1], strides = [1, 1]} : vector<4x16xf32> to vector<4x1xf32>
    %c2_428 = arith.constant 2 : index
    %c0_429 = arith.constant 0 : index
    %c143_430 = arith.constant 143 : index
    %614 = vector.load %arg5[%c2_428, %c0_429, %c143_430] : memref<3x4x288xf32, #tpu.memory_space<vmem>>, vector<1x4x1xf32>
    %615 = vector.shape_cast %614 : vector<1x4x1xf32> to vector<4x1xf32>
    %616 = vector.shape_cast %613 : vector<4x1xf32> to vector<1x4x1xf32>
    tpu.vector_store %arg5[%c2_428, %c0_429, %c143_430], %616 {strides = array<i32>} : memref<3x4x288xf32, #tpu.memory_space<vmem>>, vector<1x4x1xf32>,
    %617 = vector.extract_strided_slice %436 {offsets = [0, 128], sizes = [4, 16], strides = [1, 1]} : vector<4x256xf32> to vector<4x16xf32>
    %c1_431 = arith.constant 1 : index
    %c0_432 = arith.constant 0 : index
    %c144_433 = arith.constant 144 : index
    %618 = vector.load %arg5[%c1_431, %c0_432, %c144_433] : memref<3x4x288xf32, #tpu.memory_space<vmem>>, vector<1x4x16xf32>
    %619 = vector.shape_cast %618 : vector<1x4x16xf32> to vector<4x16xf32>
    %620 = vector.shape_cast %617 : vector<4x16xf32> to vector<1x4x16xf32>
    tpu.vector_store %arg5[%c1_431, %c0_432, %c144_433], %620 {strides = array<i32>} : memref<3x4x288xf32, #tpu.memory_space<vmem>>, vector<1x4x16xf32>,
    %621 = vector.extract_strided_slice %617 {offsets = [0, 1], sizes = [4, 1], strides = [1, 1]} : vector<4x16xf32> to vector<4x1xf32>
    %c0_434 = arith.constant 0 : index
    %c0_435 = arith.constant 0 : index
    %c144_436 = arith.constant 144 : index
    %622 = vector.load %arg5[%c0_434, %c0_435, %c144_436] : memref<3x4x288xf32, #tpu.memory_space<vmem>>, vector<1x4x1xf32>
    %623 = vector.shape_cast %622 : vector<1x4x1xf32> to vector<4x1xf32>
    %624 = vector.shape_cast %621 : vector<4x1xf32> to vector<1x4x1xf32>
    tpu.vector_store %arg5[%c0_434, %c0_435, %c144_436], %624 {strides = array<i32>} : memref<3x4x288xf32, #tpu.memory_space<vmem>>, vector<1x4x1xf32>,
    %625 = vector.extract_strided_slice %617 {offsets = [0, 0], sizes = [4, 15], strides = [1, 1]} : vector<4x16xf32> to vector<4x15xf32>
    %c0_437 = arith.constant 0 : index
    %c0_438 = arith.constant 0 : index
    %c145_439 = arith.constant 145 : index
    %626 = vector.load %arg5[%c0_437, %c0_438, %c145_439] : memref<3x4x288xf32, #tpu.memory_space<vmem>>, vector<1x4x15xf32>
    %627 = vector.shape_cast %626 : vector<1x4x15xf32> to vector<4x15xf32>
    %628 = vector.shape_cast %625 : vector<4x15xf32> to vector<1x4x15xf32>
    tpu.vector_store %arg5[%c0_437, %c0_438, %c145_439], %628 {strides = array<i32>} : memref<3x4x288xf32, #tpu.memory_space<vmem>>, vector<1x4x15xf32>,
    %629 = vector.extract_strided_slice %617 {offsets = [0, 1], sizes = [4, 15], strides = [1, 1]} : vector<4x16xf32> to vector<4x15xf32>
    %c2_440 = arith.constant 2 : index
    %c0_441 = arith.constant 0 : index
    %c144_442 = arith.constant 144 : index
    %630 = vector.load %arg5[%c2_440, %c0_441, %c144_442] : memref<3x4x288xf32, #tpu.memory_space<vmem>>, vector<1x4x15xf32>
    %631 = vector.shape_cast %630 : vector<1x4x15xf32> to vector<4x15xf32>
    %632 = vector.shape_cast %629 : vector<4x15xf32> to vector<1x4x15xf32>
    tpu.vector_store %arg5[%c2_440, %c0_441, %c144_442], %632 {strides = array<i32>} : memref<3x4x288xf32, #tpu.memory_space<vmem>>, vector<1x4x15xf32>,
    %633 = vector.extract_strided_slice %617 {offsets = [0, 14], sizes = [4, 1], strides = [1, 1]} : vector<4x16xf32> to vector<4x1xf32>
    %c2_443 = arith.constant 2 : index
    %c0_444 = arith.constant 0 : index
    %c159_445 = arith.constant 159 : index
    %634 = vector.load %arg5[%c2_443, %c0_444, %c159_445] : memref<3x4x288xf32, #tpu.memory_space<vmem>>, vector<1x4x1xf32>
    %635 = vector.shape_cast %634 : vector<1x4x1xf32> to vector<4x1xf32>
    %636 = vector.shape_cast %633 : vector<4x1xf32> to vector<1x4x1xf32>
    tpu.vector_store %arg5[%c2_443, %c0_444, %c159_445], %636 {strides = array<i32>} : memref<3x4x288xf32, #tpu.memory_space<vmem>>, vector<1x4x1xf32>,
    %637 = vector.extract_strided_slice %436 {offsets = [0, 144], sizes = [4, 16], strides = [1, 1]} : vector<4x256xf32> to vector<4x16xf32>
    %c1_446 = arith.constant 1 : index
    %c0_447 = arith.constant 0 : index
    %c160_448 = arith.constant 160 : index
    %638 = vector.load %arg5[%c1_446, %c0_447, %c160_448] : memref<3x4x288xf32, #tpu.memory_space<vmem>>, vector<1x4x16xf32>
    %639 = vector.shape_cast %638 : vector<1x4x16xf32> to vector<4x16xf32>
    %640 = vector.shape_cast %637 : vector<4x16xf32> to vector<1x4x16xf32>
    tpu.vector_store %arg5[%c1_446, %c0_447, %c160_448], %640 {strides = array<i32>} : memref<3x4x288xf32, #tpu.memory_space<vmem>>, vector<1x4x16xf32>,
    %641 = vector.extract_strided_slice %637 {offsets = [0, 1], sizes = [4, 1], strides = [1, 1]} : vector<4x16xf32> to vector<4x1xf32>
    %c0_449 = arith.constant 0 : index
    %c0_450 = arith.constant 0 : index
    %c160_451 = arith.constant 160 : index
    %642 = vector.load %arg5[%c0_449, %c0_450, %c160_451] : memref<3x4x288xf32, #tpu.memory_space<vmem>>, vector<1x4x1xf32>
    %643 = vector.shape_cast %642 : vector<1x4x1xf32> to vector<4x1xf32>
    %644 = vector.shape_cast %641 : vector<4x1xf32> to vector<1x4x1xf32>
    tpu.vector_store %arg5[%c0_449, %c0_450, %c160_451], %644 {strides = array<i32>} : memref<3x4x288xf32, #tpu.memory_space<vmem>>, vector<1x4x1xf32>,
    %645 = vector.extract_strided_slice %637 {offsets = [0, 0], sizes = [4, 15], strides = [1, 1]} : vector<4x16xf32> to vector<4x15xf32>
    %c0_452 = arith.constant 0 : index
    %c0_453 = arith.constant 0 : index
    %c161_454 = arith.constant 161 : index
    %646 = vector.load %arg5[%c0_452, %c0_453, %c161_454] : memref<3x4x288xf32, #tpu.memory_space<vmem>>, vector<1x4x15xf32>
    %647 = vector.shape_cast %646 : vector<1x4x15xf32> to vector<4x15xf32>
    %648 = vector.shape_cast %645 : vector<4x15xf32> to vector<1x4x15xf32>
    tpu.vector_store %arg5[%c0_452, %c0_453, %c161_454], %648 {strides = array<i32>} : memref<3x4x288xf32, #tpu.memory_space<vmem>>, vector<1x4x15xf32>,
    %649 = vector.extract_strided_slice %637 {offsets = [0, 1], sizes = [4, 15], strides = [1, 1]} : vector<4x16xf32> to vector<4x15xf32>
    %c2_455 = arith.constant 2 : index
    %c0_456 = arith.constant 0 : index
    %c160_457 = arith.constant 160 : index
    %650 = vector.load %arg5[%c2_455, %c0_456, %c160_457] : memref<3x4x288xf32, #tpu.memory_space<vmem>>, vector<1x4x15xf32>
    %651 = vector.shape_cast %650 : vector<1x4x15xf32> to vector<4x15xf32>
    %652 = vector.shape_cast %649 : vector<4x15xf32> to vector<1x4x15xf32>
    tpu.vector_store %arg5[%c2_455, %c0_456, %c160_457], %652 {strides = array<i32>} : memref<3x4x288xf32, #tpu.memory_space<vmem>>, vector<1x4x15xf32>,
    %653 = vector.extract_strided_slice %637 {offsets = [0, 14], sizes = [4, 1], strides = [1, 1]} : vector<4x16xf32> to vector<4x1xf32>
    %c2_458 = arith.constant 2 : index
    %c0_459 = arith.constant 0 : index
    %c175_460 = arith.constant 175 : index
    %654 = vector.load %arg5[%c2_458, %c0_459, %c175_460] : memref<3x4x288xf32, #tpu.memory_space<vmem>>, vector<1x4x1xf32>
    %655 = vector.shape_cast %654 : vector<1x4x1xf32> to vector<4x1xf32>
    %656 = vector.shape_cast %653 : vector<4x1xf32> to vector<1x4x1xf32>
    tpu.vector_store %arg5[%c2_458, %c0_459, %c175_460], %656 {strides = array<i32>} : memref<3x4x288xf32, #tpu.memory_space<vmem>>, vector<1x4x1xf32>,
    %657 = vector.extract_strided_slice %436 {offsets = [0, 160], sizes = [4, 16], strides = [1, 1]} : vector<4x256xf32> to vector<4x16xf32>
    %c1_461 = arith.constant 1 : index
    %c0_462 = arith.constant 0 : index
    %c176_463 = arith.constant 176 : index
    %658 = vector.load %arg5[%c1_461, %c0_462, %c176_463] : memref<3x4x288xf32, #tpu.memory_space<vmem>>, vector<1x4x16xf32>
    %659 = vector.shape_cast %658 : vector<1x4x16xf32> to vector<4x16xf32>
    %660 = vector.shape_cast %657 : vector<4x16xf32> to vector<1x4x16xf32>
    tpu.vector_store %arg5[%c1_461, %c0_462, %c176_463], %660 {strides = array<i32>} : memref<3x4x288xf32, #tpu.memory_space<vmem>>, vector<1x4x16xf32>,
    %661 = vector.extract_strided_slice %657 {offsets = [0, 1], sizes = [4, 1], strides = [1, 1]} : vector<4x16xf32> to vector<4x1xf32>
    %c0_464 = arith.constant 0 : index
    %c0_465 = arith.constant 0 : index
    %c176_466 = arith.constant 176 : index
    %662 = vector.load %arg5[%c0_464, %c0_465, %c176_466] : memref<3x4x288xf32, #tpu.memory_space<vmem>>, vector<1x4x1xf32>
    %663 = vector.shape_cast %662 : vector<1x4x1xf32> to vector<4x1xf32>
    %664 = vector.shape_cast %661 : vector<4x1xf32> to vector<1x4x1xf32>
    tpu.vector_store %arg5[%c0_464, %c0_465, %c176_466], %664 {strides = array<i32>} : memref<3x4x288xf32, #tpu.memory_space<vmem>>, vector<1x4x1xf32>,
    %665 = vector.extract_strided_slice %657 {offsets = [0, 0], sizes = [4, 15], strides = [1, 1]} : vector<4x16xf32> to vector<4x15xf32>
    %c0_467 = arith.constant 0 : index
    %c0_468 = arith.constant 0 : index
    %c177_469 = arith.constant 177 : index
    %666 = vector.load %arg5[%c0_467, %c0_468, %c177_469] : memref<3x4x288xf32, #tpu.memory_space<vmem>>, vector<1x4x15xf32>
    %667 = vector.shape_cast %666 : vector<1x4x15xf32> to vector<4x15xf32>
    %668 = vector.shape_cast %665 : vector<4x15xf32> to vector<1x4x15xf32>
    tpu.vector_store %arg5[%c0_467, %c0_468, %c177_469], %668 {strides = array<i32>} : memref<3x4x288xf32, #tpu.memory_space<vmem>>, vector<1x4x15xf32>,
    %669 = vector.extract_strided_slice %657 {offsets = [0, 1], sizes = [4, 15], strides = [1, 1]} : vector<4x16xf32> to vector<4x15xf32>
    %c2_470 = arith.constant 2 : index
    %c0_471 = arith.constant 0 : index
    %c176_472 = arith.constant 176 : index
    %670 = vector.load %arg5[%c2_470, %c0_471, %c176_472] : memref<3x4x288xf32, #tpu.memory_space<vmem>>, vector<1x4x15xf32>
    %671 = vector.shape_cast %670 : vector<1x4x15xf32> to vector<4x15xf32>
    %672 = vector.shape_cast %669 : vector<4x15xf32> to vector<1x4x15xf32>
    tpu.vector_store %arg5[%c2_470, %c0_471, %c176_472], %672 {strides = array<i32>} : memref<3x4x288xf32, #tpu.memory_space<vmem>>, vector<1x4x15xf32>,
    %673 = vector.extract_strided_slice %657 {offsets = [0, 14], sizes = [4, 1], strides = [1, 1]} : vector<4x16xf32> to vector<4x1xf32>
    %c2_473 = arith.constant 2 : index
    %c0_474 = arith.constant 0 : index
    %c191_475 = arith.constant 191 : index
    %674 = vector.load %arg5[%c2_473, %c0_474, %c191_475] : memref<3x4x288xf32, #tpu.memory_space<vmem>>, vector<1x4x1xf32>
    %675 = vector.shape_cast %674 : vector<1x4x1xf32> to vector<4x1xf32>
    %676 = vector.shape_cast %673 : vector<4x1xf32> to vector<1x4x1xf32>
    tpu.vector_store %arg5[%c2_473, %c0_474, %c191_475], %676 {strides = array<i32>} : memref<3x4x288xf32, #tpu.memory_space<vmem>>, vector<1x4x1xf32>,
    %677 = vector.extract_strided_slice %436 {offsets = [0, 176], sizes = [4, 16], strides = [1, 1]} : vector<4x256xf32> to vector<4x16xf32>
    %c1_476 = arith.constant 1 : index
    %c0_477 = arith.constant 0 : index
    %c192_478 = arith.constant 192 : index
    %678 = vector.load %arg5[%c1_476, %c0_477, %c192_478] : memref<3x4x288xf32, #tpu.memory_space<vmem>>, vector<1x4x16xf32>
    %679 = vector.shape_cast %678 : vector<1x4x16xf32> to vector<4x16xf32>
    %680 = vector.shape_cast %677 : vector<4x16xf32> to vector<1x4x16xf32>
    tpu.vector_store %arg5[%c1_476, %c0_477, %c192_478], %680 {strides = array<i32>} : memref<3x4x288xf32, #tpu.memory_space<vmem>>, vector<1x4x16xf32>,
    %681 = vector.extract_strided_slice %677 {offsets = [0, 1], sizes = [4, 1], strides = [1, 1]} : vector<4x16xf32> to vector<4x1xf32>
    %c0_479 = arith.constant 0 : index
    %c0_480 = arith.constant 0 : index
    %c192_481 = arith.constant 192 : index
    %682 = vector.load %arg5[%c0_479, %c0_480, %c192_481] : memref<3x4x288xf32, #tpu.memory_space<vmem>>, vector<1x4x1xf32>
    %683 = vector.shape_cast %682 : vector<1x4x1xf32> to vector<4x1xf32>
    %684 = vector.shape_cast %681 : vector<4x1xf32> to vector<1x4x1xf32>
    tpu.vector_store %arg5[%c0_479, %c0_480, %c192_481], %684 {strides = array<i32>} : memref<3x4x288xf32, #tpu.memory_space<vmem>>, vector<1x4x1xf32>,
    %685 = vector.extract_strided_slice %677 {offsets = [0, 0], sizes = [4, 15], strides = [1, 1]} : vector<4x16xf32> to vector<4x15xf32>
    %c0_482 = arith.constant 0 : index
    %c0_483 = arith.constant 0 : index
    %c193_484 = arith.constant 193 : index
    %686 = vector.load %arg5[%c0_482, %c0_483, %c193_484] : memref<3x4x288xf32, #tpu.memory_space<vmem>>, vector<1x4x15xf32>
    %687 = vector.shape_cast %686 : vector<1x4x15xf32> to vector<4x15xf32>
    %688 = vector.shape_cast %685 : vector<4x15xf32> to vector<1x4x15xf32>
    tpu.vector_store %arg5[%c0_482, %c0_483, %c193_484], %688 {strides = array<i32>} : memref<3x4x288xf32, #tpu.memory_space<vmem>>, vector<1x4x15xf32>,
    %689 = vector.extract_strided_slice %677 {offsets = [0, 1], sizes = [4, 15], strides = [1, 1]} : vector<4x16xf32> to vector<4x15xf32>
    %c2_485 = arith.constant 2 : index
    %c0_486 = arith.constant 0 : index
    %c192_487 = arith.constant 192 : index
    %690 = vector.load %arg5[%c2_485, %c0_486, %c192_487] : memref<3x4x288xf32, #tpu.memory_space<vmem>>, vector<1x4x15xf32>
    %691 = vector.shape_cast %690 : vector<1x4x15xf32> to vector<4x15xf32>
    %692 = vector.shape_cast %689 : vector<4x15xf32> to vector<1x4x15xf32>
    tpu.vector_store %arg5[%c2_485, %c0_486, %c192_487], %692 {strides = array<i32>} : memref<3x4x288xf32, #tpu.memory_space<vmem>>, vector<1x4x15xf32>,
    %693 = vector.extract_strided_slice %677 {offsets = [0, 14], sizes = [4, 1], strides = [1, 1]} : vector<4x16xf32> to vector<4x1xf32>
    %c2_488 = arith.constant 2 : index
    %c0_489 = arith.constant 0 : index
    %c207_490 = arith.constant 207 : index
    %694 = vector.load %arg5[%c2_488, %c0_489, %c207_490] : memref<3x4x288xf32, #tpu.memory_space<vmem>>, vector<1x4x1xf32>
    %695 = vector.shape_cast %694 : vector<1x4x1xf32> to vector<4x1xf32>
    %696 = vector.shape_cast %693 : vector<4x1xf32> to vector<1x4x1xf32>
    tpu.vector_store %arg5[%c2_488, %c0_489, %c207_490], %696 {strides = array<i32>} : memref<3x4x288xf32, #tpu.memory_space<vmem>>, vector<1x4x1xf32>,
    %697 = vector.extract_strided_slice %436 {offsets = [0, 192], sizes = [4, 16], strides = [1, 1]} : vector<4x256xf32> to vector<4x16xf32>
    %c1_491 = arith.constant 1 : index
    %c0_492 = arith.constant 0 : index
    %c208_493 = arith.constant 208 : index
    %698 = vector.load %arg5[%c1_491, %c0_492, %c208_493] : memref<3x4x288xf32, #tpu.memory_space<vmem>>, vector<1x4x16xf32>
    %699 = vector.shape_cast %698 : vector<1x4x16xf32> to vector<4x16xf32>
    %700 = vector.shape_cast %697 : vector<4x16xf32> to vector<1x4x16xf32>
    tpu.vector_store %arg5[%c1_491, %c0_492, %c208_493], %700 {strides = array<i32>} : memref<3x4x288xf32, #tpu.memory_space<vmem>>, vector<1x4x16xf32>,
    %701 = vector.extract_strided_slice %697 {offsets = [0, 1], sizes = [4, 1], strides = [1, 1]} : vector<4x16xf32> to vector<4x1xf32>
    %c0_494 = arith.constant 0 : index
    %c0_495 = arith.constant 0 : index
    %c208_496 = arith.constant 208 : index
    %702 = vector.load %arg5[%c0_494, %c0_495, %c208_496] : memref<3x4x288xf32, #tpu.memory_space<vmem>>, vector<1x4x1xf32>
    %703 = vector.shape_cast %702 : vector<1x4x1xf32> to vector<4x1xf32>
    %704 = vector.shape_cast %701 : vector<4x1xf32> to vector<1x4x1xf32>
    tpu.vector_store %arg5[%c0_494, %c0_495, %c208_496], %704 {strides = array<i32>} : memref<3x4x288xf32, #tpu.memory_space<vmem>>, vector<1x4x1xf32>,
    %705 = vector.extract_strided_slice %697 {offsets = [0, 0], sizes = [4, 15], strides = [1, 1]} : vector<4x16xf32> to vector<4x15xf32>
    %c0_497 = arith.constant 0 : index
    %c0_498 = arith.constant 0 : index
    %c209_499 = arith.constant 209 : index
    %706 = vector.load %arg5[%c0_497, %c0_498, %c209_499] : memref<3x4x288xf32, #tpu.memory_space<vmem>>, vector<1x4x15xf32>
    %707 = vector.shape_cast %706 : vector<1x4x15xf32> to vector<4x15xf32>
    %708 = vector.shape_cast %705 : vector<4x15xf32> to vector<1x4x15xf32>
    tpu.vector_store %arg5[%c0_497, %c0_498, %c209_499], %708 {strides = array<i32>} : memref<3x4x288xf32, #tpu.memory_space<vmem>>, vector<1x4x15xf32>,
    %709 = vector.extract_strided_slice %697 {offsets = [0, 1], sizes = [4, 15], strides = [1, 1]} : vector<4x16xf32> to vector<4x15xf32>
    %c2_500 = arith.constant 2 : index
    %c0_501 = arith.constant 0 : index
    %c208_502 = arith.constant 208 : index
    %710 = vector.load %arg5[%c2_500, %c0_501, %c208_502] : memref<3x4x288xf32, #tpu.memory_space<vmem>>, vector<1x4x15xf32>
    %711 = vector.shape_cast %710 : vector<1x4x15xf32> to vector<4x15xf32>
    %712 = vector.shape_cast %709 : vector<4x15xf32> to vector<1x4x15xf32>
    tpu.vector_store %arg5[%c2_500, %c0_501, %c208_502], %712 {strides = array<i32>} : memref<3x4x288xf32, #tpu.memory_space<vmem>>, vector<1x4x15xf32>,
    %713 = vector.extract_strided_slice %697 {offsets = [0, 14], sizes = [4, 1], strides = [1, 1]} : vector<4x16xf32> to vector<4x1xf32>
    %c2_503 = arith.constant 2 : index
    %c0_504 = arith.constant 0 : index
    %c223_505 = arith.constant 223 : index
    %714 = vector.load %arg5[%c2_503, %c0_504, %c223_505] : memref<3x4x288xf32, #tpu.memory_space<vmem>>, vector<1x4x1xf32>
    %715 = vector.shape_cast %714 : vector<1x4x1xf32> to vector<4x1xf32>
    %716 = vector.shape_cast %713 : vector<4x1xf32> to vector<1x4x1xf32>
    tpu.vector_store %arg5[%c2_503, %c0_504, %c223_505], %716 {strides = array<i32>} : memref<3x4x288xf32, #tpu.memory_space<vmem>>, vector<1x4x1xf32>,
    %717 = vector.extract_strided_slice %436 {offsets = [0, 208], sizes = [4, 16], strides = [1, 1]} : vector<4x256xf32> to vector<4x16xf32>
    %c1_506 = arith.constant 1 : index
    %c0_507 = arith.constant 0 : index
    %c224_508 = arith.constant 224 : index
    %718 = vector.load %arg5[%c1_506, %c0_507, %c224_508] : memref<3x4x288xf32, #tpu.memory_space<vmem>>, vector<1x4x16xf32>
    %719 = vector.shape_cast %718 : vector<1x4x16xf32> to vector<4x16xf32>
    %720 = vector.shape_cast %717 : vector<4x16xf32> to vector<1x4x16xf32>
    tpu.vector_store %arg5[%c1_506, %c0_507, %c224_508], %720 {strides = array<i32>} : memref<3x4x288xf32, #tpu.memory_space<vmem>>, vector<1x4x16xf32>,
    %721 = vector.extract_strided_slice %717 {offsets = [0, 1], sizes = [4, 1], strides = [1, 1]} : vector<4x16xf32> to vector<4x1xf32>
    %c0_509 = arith.constant 0 : index
    %c0_510 = arith.constant 0 : index
    %c224_511 = arith.constant 224 : index
    %722 = vector.load %arg5[%c0_509, %c0_510, %c224_511] : memref<3x4x288xf32, #tpu.memory_space<vmem>>, vector<1x4x1xf32>
    %723 = vector.shape_cast %722 : vector<1x4x1xf32> to vector<4x1xf32>
    %724 = vector.shape_cast %721 : vector<4x1xf32> to vector<1x4x1xf32>
    tpu.vector_store %arg5[%c0_509, %c0_510, %c224_511], %724 {strides = array<i32>} : memref<3x4x288xf32, #tpu.memory_space<vmem>>, vector<1x4x1xf32>,
    %725 = vector.extract_strided_slice %717 {offsets = [0, 0], sizes = [4, 15], strides = [1, 1]} : vector<4x16xf32> to vector<4x15xf32>
    %c0_512 = arith.constant 0 : index
    %c0_513 = arith.constant 0 : index
    %c225_514 = arith.constant 225 : index
    %726 = vector.load %arg5[%c0_512, %c0_513, %c225_514] : memref<3x4x288xf32, #tpu.memory_space<vmem>>, vector<1x4x15xf32>
    %727 = vector.shape_cast %726 : vector<1x4x15xf32> to vector<4x15xf32>
    %728 = vector.shape_cast %725 : vector<4x15xf32> to vector<1x4x15xf32>
    tpu.vector_store %arg5[%c0_512, %c0_513, %c225_514], %728 {strides = array<i32>} : memref<3x4x288xf32, #tpu.memory_space<vmem>>, vector<1x4x15xf32>,
    %729 = vector.extract_strided_slice %717 {offsets = [0, 1], sizes = [4, 15], strides = [1, 1]} : vector<4x16xf32> to vector<4x15xf32>
    %c2_515 = arith.constant 2 : index
    %c0_516 = arith.constant 0 : index
    %c224_517 = arith.constant 224 : index
    %730 = vector.load %arg5[%c2_515, %c0_516, %c224_517] : memref<3x4x288xf32, #tpu.memory_space<vmem>>, vector<1x4x15xf32>
    %731 = vector.shape_cast %730 : vector<1x4x15xf32> to vector<4x15xf32>
    %732 = vector.shape_cast %729 : vector<4x15xf32> to vector<1x4x15xf32>
    tpu.vector_store %arg5[%c2_515, %c0_516, %c224_517], %732 {strides = array<i32>} : memref<3x4x288xf32, #tpu.memory_space<vmem>>, vector<1x4x15xf32>,
    %733 = vector.extract_strided_slice %717 {offsets = [0, 14], sizes = [4, 1], strides = [1, 1]} : vector<4x16xf32> to vector<4x1xf32>
    %c2_518 = arith.constant 2 : index
    %c0_519 = arith.constant 0 : index
    %c239_520 = arith.constant 239 : index
    %734 = vector.load %arg5[%c2_518, %c0_519, %c239_520] : memref<3x4x288xf32, #tpu.memory_space<vmem>>, vector<1x4x1xf32>
    %735 = vector.shape_cast %734 : vector<1x4x1xf32> to vector<4x1xf32>
    %736 = vector.shape_cast %733 : vector<4x1xf32> to vector<1x4x1xf32>
    tpu.vector_store %arg5[%c2_518, %c0_519, %c239_520], %736 {strides = array<i32>} : memref<3x4x288xf32, #tpu.memory_space<vmem>>, vector<1x4x1xf32>,
    %737 = vector.extract_strided_slice %436 {offsets = [0, 224], sizes = [4, 16], strides = [1, 1]} : vector<4x256xf32> to vector<4x16xf32>
    %c1_521 = arith.constant 1 : index
    %c0_522 = arith.constant 0 : index
    %c240_523 = arith.constant 240 : index
    %738 = vector.load %arg5[%c1_521, %c0_522, %c240_523] : memref<3x4x288xf32, #tpu.memory_space<vmem>>, vector<1x4x16xf32>
    %739 = vector.shape_cast %738 : vector<1x4x16xf32> to vector<4x16xf32>
    %740 = vector.shape_cast %737 : vector<4x16xf32> to vector<1x4x16xf32>
    tpu.vector_store %arg5[%c1_521, %c0_522, %c240_523], %740 {strides = array<i32>} : memref<3x4x288xf32, #tpu.memory_space<vmem>>, vector<1x4x16xf32>,
    %741 = vector.extract_strided_slice %737 {offsets = [0, 1], sizes = [4, 1], strides = [1, 1]} : vector<4x16xf32> to vector<4x1xf32>
    %c0_524 = arith.constant 0 : index
    %c0_525 = arith.constant 0 : index
    %c240_526 = arith.constant 240 : index
    %742 = vector.load %arg5[%c0_524, %c0_525, %c240_526] : memref<3x4x288xf32, #tpu.memory_space<vmem>>, vector<1x4x1xf32>
    %743 = vector.shape_cast %742 : vector<1x4x1xf32> to vector<4x1xf32>
    %744 = vector.shape_cast %741 : vector<4x1xf32> to vector<1x4x1xf32>
    tpu.vector_store %arg5[%c0_524, %c0_525, %c240_526], %744 {strides = array<i32>} : memref<3x4x288xf32, #tpu.memory_space<vmem>>, vector<1x4x1xf32>,
    %745 = vector.extract_strided_slice %737 {offsets = [0, 0], sizes = [4, 15], strides = [1, 1]} : vector<4x16xf32> to vector<4x15xf32>
    %c0_527 = arith.constant 0 : index
    %c0_528 = arith.constant 0 : index
    %c241_529 = arith.constant 241 : index
    %746 = vector.load %arg5[%c0_527, %c0_528, %c241_529] : memref<3x4x288xf32, #tpu.memory_space<vmem>>, vector<1x4x15xf32>
    %747 = vector.shape_cast %746 : vector<1x4x15xf32> to vector<4x15xf32>
    %748 = vector.shape_cast %745 : vector<4x15xf32> to vector<1x4x15xf32>
    tpu.vector_store %arg5[%c0_527, %c0_528, %c241_529], %748 {strides = array<i32>} : memref<3x4x288xf32, #tpu.memory_space<vmem>>, vector<1x4x15xf32>,
    %749 = vector.extract_strided_slice %737 {offsets = [0, 1], sizes = [4, 15], strides = [1, 1]} : vector<4x16xf32> to vector<4x15xf32>
    %c2_530 = arith.constant 2 : index
    %c0_531 = arith.constant 0 : index
    %c240_532 = arith.constant 240 : index
    %750 = vector.load %arg5[%c2_530, %c0_531, %c240_532] : memref<3x4x288xf32, #tpu.memory_space<vmem>>, vector<1x4x15xf32>
    %751 = vector.shape_cast %750 : vector<1x4x15xf32> to vector<4x15xf32>
    %752 = vector.shape_cast %749 : vector<4x15xf32> to vector<1x4x15xf32>
    tpu.vector_store %arg5[%c2_530, %c0_531, %c240_532], %752 {strides = array<i32>} : memref<3x4x288xf32, #tpu.memory_space<vmem>>, vector<1x4x15xf32>,
    %753 = vector.extract_strided_slice %737 {offsets = [0, 14], sizes = [4, 1], strides = [1, 1]} : vector<4x16xf32> to vector<4x1xf32>
    %c2_533 = arith.constant 2 : index
    %c0_534 = arith.constant 0 : index
    %c255_535 = arith.constant 255 : index
    %754 = vector.load %arg5[%c2_533, %c0_534, %c255_535] : memref<3x4x288xf32, #tpu.memory_space<vmem>>, vector<1x4x1xf32>
    %755 = vector.shape_cast %754 : vector<1x4x1xf32> to vector<4x1xf32>
    %756 = vector.shape_cast %753 : vector<4x1xf32> to vector<1x4x1xf32>
    tpu.vector_store %arg5[%c2_533, %c0_534, %c255_535], %756 {strides = array<i32>} : memref<3x4x288xf32, #tpu.memory_space<vmem>>, vector<1x4x1xf32>,
    %757 = vector.extract_strided_slice %436 {offsets = [0, 240], sizes = [4, 16], strides = [1, 1]} : vector<4x256xf32> to vector<4x16xf32>
    %c1_536 = arith.constant 1 : index
    %c0_537 = arith.constant 0 : index
    %c256_538 = arith.constant 256 : index
    %758 = vector.load %arg5[%c1_536, %c0_537, %c256_538] : memref<3x4x288xf32, #tpu.memory_space<vmem>>, vector<1x4x16xf32>
    %759 = vector.shape_cast %758 : vector<1x4x16xf32> to vector<4x16xf32>
    %760 = vector.shape_cast %757 : vector<4x16xf32> to vector<1x4x16xf32>
    tpu.vector_store %arg5[%c1_536, %c0_537, %c256_538], %760 {strides = array<i32>} : memref<3x4x288xf32, #tpu.memory_space<vmem>>, vector<1x4x16xf32>,
    %761 = vector.extract_strided_slice %757 {offsets = [0, 1], sizes = [4, 1], strides = [1, 1]} : vector<4x16xf32> to vector<4x1xf32>
    %c0_539 = arith.constant 0 : index
    %c0_540 = arith.constant 0 : index
    %c256_541 = arith.constant 256 : index
    %762 = vector.load %arg5[%c0_539, %c0_540, %c256_541] : memref<3x4x288xf32, #tpu.memory_space<vmem>>, vector<1x4x1xf32>
    %763 = vector.shape_cast %762 : vector<1x4x1xf32> to vector<4x1xf32>
    %764 = vector.shape_cast %761 : vector<4x1xf32> to vector<1x4x1xf32>
    tpu.vector_store %arg5[%c0_539, %c0_540, %c256_541], %764 {strides = array<i32>} : memref<3x4x288xf32, #tpu.memory_space<vmem>>, vector<1x4x1xf32>,
    %765 = vector.extract_strided_slice %757 {offsets = [0, 0], sizes = [4, 15], strides = [1, 1]} : vector<4x16xf32> to vector<4x15xf32>
    %c0_542 = arith.constant 0 : index
    %c0_543 = arith.constant 0 : index
    %c257_544 = arith.constant 257 : index
    %766 = vector.load %arg5[%c0_542, %c0_543, %c257_544] : memref<3x4x288xf32, #tpu.memory_space<vmem>>, vector<1x4x15xf32>
    %767 = vector.shape_cast %766 : vector<1x4x15xf32> to vector<4x15xf32>
    %768 = vector.shape_cast %765 : vector<4x15xf32> to vector<1x4x15xf32>
    tpu.vector_store %arg5[%c0_542, %c0_543, %c257_544], %768 {strides = array<i32>} : memref<3x4x288xf32, #tpu.memory_space<vmem>>, vector<1x4x15xf32>,
    %769 = vector.extract_strided_slice %757 {offsets = [0, 1], sizes = [4, 15], strides = [1, 1]} : vector<4x16xf32> to vector<4x15xf32>
    %c2_545 = arith.constant 2 : index
    %c0_546 = arith.constant 0 : index
    %c256_547 = arith.constant 256 : index
    %770 = vector.load %arg5[%c2_545, %c0_546, %c256_547] : memref<3x4x288xf32, #tpu.memory_space<vmem>>, vector<1x4x15xf32>
    %771 = vector.shape_cast %770 : vector<1x4x15xf32> to vector<4x15xf32>
    %772 = vector.shape_cast %769 : vector<4x15xf32> to vector<1x4x15xf32>
    tpu.vector_store %arg5[%c2_545, %c0_546, %c256_547], %772 {strides = array<i32>} : memref<3x4x288xf32, #tpu.memory_space<vmem>>, vector<1x4x15xf32>,
    %773 = vector.extract_strided_slice %757 {offsets = [0, 14], sizes = [4, 1], strides = [1, 1]} : vector<4x16xf32> to vector<4x1xf32>
    %c2_548 = arith.constant 2 : index
    %c0_549 = arith.constant 0 : index
    %c271_550 = arith.constant 271 : index
    %774 = vector.load %arg5[%c2_548, %c0_549, %c271_550] : memref<3x4x288xf32, #tpu.memory_space<vmem>>, vector<1x4x1xf32>
    %775 = vector.shape_cast %774 : vector<1x4x1xf32> to vector<4x1xf32>
    %776 = vector.shape_cast %773 : vector<4x1xf32> to vector<1x4x1xf32>
    tpu.vector_store %arg5[%c2_548, %c0_549, %c271_550], %776 {strides = array<i32>} : memref<3x4x288xf32, #tpu.memory_space<vmem>>, vector<1x4x1xf32>,
    %777 = vector.extract_strided_slice %436 {offsets = [0, 224], sizes = [4, 16], strides = [1, 1]} : vector<4x256xf32> to vector<4x16xf32>
    %c1_551 = arith.constant 1 : index
    %c0_552 = arith.constant 0 : index
    %c272_553 = arith.constant 272 : index
    %778 = vector.load %arg5[%c1_551, %c0_552, %c272_553] : memref<3x4x288xf32, #tpu.memory_space<vmem>>, vector<1x4x16xf32>
    %779 = vector.shape_cast %778 : vector<1x4x16xf32> to vector<4x16xf32>
    %780 = vector.shape_cast %777 : vector<4x16xf32> to vector<1x4x16xf32>
    tpu.vector_store %arg5[%c1_551, %c0_552, %c272_553], %780 {strides = array<i32>} : memref<3x4x288xf32, #tpu.memory_space<vmem>>, vector<1x4x16xf32>,
    %781 = vector.extract_strided_slice %777 {offsets = [0, 1], sizes = [4, 1], strides = [1, 1]} : vector<4x16xf32> to vector<4x1xf32>
    %c0_554 = arith.constant 0 : index
    %c0_555 = arith.constant 0 : index
    %c272_556 = arith.constant 272 : index
    %782 = vector.load %arg5[%c0_554, %c0_555, %c272_556] : memref<3x4x288xf32, #tpu.memory_space<vmem>>, vector<1x4x1xf32>
    %783 = vector.shape_cast %782 : vector<1x4x1xf32> to vector<4x1xf32>
    %784 = vector.shape_cast %781 : vector<4x1xf32> to vector<1x4x1xf32>
    tpu.vector_store %arg5[%c0_554, %c0_555, %c272_556], %784 {strides = array<i32>} : memref<3x4x288xf32, #tpu.memory_space<vmem>>, vector<1x4x1xf32>,
    %785 = vector.extract_strided_slice %777 {offsets = [0, 0], sizes = [4, 15], strides = [1, 1]} : vector<4x16xf32> to vector<4x15xf32>
    %c0_557 = arith.constant 0 : index
    %c0_558 = arith.constant 0 : index
    %c273_559 = arith.constant 273 : index
    %786 = vector.load %arg5[%c0_557, %c0_558, %c273_559] : memref<3x4x288xf32, #tpu.memory_space<vmem>>, vector<1x4x15xf32>
    %787 = vector.shape_cast %786 : vector<1x4x15xf32> to vector<4x15xf32>
    %788 = vector.shape_cast %785 : vector<4x15xf32> to vector<1x4x15xf32>
    tpu.vector_store %arg5[%c0_557, %c0_558, %c273_559], %788 {strides = array<i32>} : memref<3x4x288xf32, #tpu.memory_space<vmem>>, vector<1x4x15xf32>,
    %789 = vector.extract_strided_slice %777 {offsets = [0, 1], sizes = [4, 15], strides = [1, 1]} : vector<4x16xf32> to vector<4x15xf32>
    %c2_560 = arith.constant 2 : index
    %c0_561 = arith.constant 0 : index
    %c272_562 = arith.constant 272 : index
    %790 = vector.load %arg5[%c2_560, %c0_561, %c272_562] : memref<3x4x288xf32, #tpu.memory_space<vmem>>, vector<1x4x15xf32>
    %791 = vector.shape_cast %790 : vector<1x4x15xf32> to vector<4x15xf32>
    %792 = vector.shape_cast %789 : vector<4x15xf32> to vector<1x4x15xf32>
    tpu.vector_store %arg5[%c2_560, %c0_561, %c272_562], %792 {strides = array<i32>} : memref<3x4x288xf32, #tpu.memory_space<vmem>>, vector<1x4x15xf32>,
    %793 = vector.extract_strided_slice %777 {offsets = [0, 14], sizes = [4, 1], strides = [1, 1]} : vector<4x16xf32> to vector<4x1xf32>
    %c2_563 = arith.constant 2 : index
    %c0_564 = arith.constant 0 : index
    %c287_565 = arith.constant 287 : index
    %794 = vector.load %arg5[%c2_563, %c0_564, %c287_565] : memref<3x4x288xf32, #tpu.memory_space<vmem>>, vector<1x4x1xf32>
    %795 = vector.shape_cast %794 : vector<1x4x1xf32> to vector<4x1xf32>
    %796 = vector.shape_cast %793 : vector<4x1xf32> to vector<1x4x1xf32>
    tpu.vector_store %arg5[%c2_563, %c0_564, %c287_565], %796 {strides = array<i32>} : memref<3x4x288xf32, #tpu.memory_space<vmem>>, vector<1x4x1xf32>,
    %cst_566 = arith.constant 0.000000e+00 : f32
    %797 = vector.broadcast %cst_566 : f32 to vector<4x256xf32>
    %c0_567 = arith.constant 0 : index
    %c0_568 = arith.constant 0 : index
    %c0_569 = arith.constant 0 : index
    %798 = vector.load %arg5[%c0_567, %c0_568, %c0_569] : memref<3x4x288xf32, #tpu.memory_space<vmem>>, vector<1x4x256xf32>
    %799 = vector.shape_cast %798 : vector<1x4x256xf32> to vector<4x256xf32>
    %c0_570 = arith.constant 0 : index
    %c0_571 = arith.constant 0 : index
    %c0_572 = arith.constant 0 : index
    %c0_573 = arith.constant 0 : index
    %800 = vector.load %arg3[%c0_570, %c0_571, %c0_572, %c0_573] : memref<3x3x4x4xf32, #tpu.memory_space<vmem>>, vector<1x1x4x4xf32>
    %801 = vector.shape_cast %800 : vector<1x1x4x4xf32> to vector<4x4xf32>
    %cst_574 = arith.constant dense<0.000000e+00> : vector<4x256xf32>
    %802 = tpu.matmul %801, %799, %cst_574 {dimension_numbers = #tpu.dot_dimension_numbers<[1], [0], [0], [1], [0, 0, 1, 1], [], []>} : vector<4x4xf32>, vector<4x256xf32>, vector<4x256xf32> -> vector<4x256xf32>
    %803 = arith.addf %797, %802 : vector<4x256xf32>
    %c1_575 = arith.constant 1 : index
    %c0_576 = arith.constant 0 : index
    %c0_577 = arith.constant 0 : index
    %804 = vector.load %arg5[%c1_575, %c0_576, %c0_577] : memref<3x4x288xf32, #tpu.memory_space<vmem>>, vector<1x4x256xf32>
    %805 = vector.shape_cast %804 : vector<1x4x256xf32> to vector<4x256xf32>
    %c0_578 = arith.constant 0 : index
    %c1_579 = arith.constant 1 : index
    %c0_580 = arith.constant 0 : index
    %c0_581 = arith.constant 0 : index
    %806 = vector.load %arg3[%c0_578, %c1_579, %c0_580, %c0_581] : memref<3x3x4x4xf32, #tpu.memory_space<vmem>>, vector<1x1x4x4xf32>
    %807 = vector.shape_cast %806 : vector<1x1x4x4xf32> to vector<4x4xf32>
    %cst_582 = arith.constant dense<0.000000e+00> : vector<4x256xf32>
    %808 = tpu.matmul %807, %805, %cst_582 {dimension_numbers = #tpu.dot_dimension_numbers<[1], [0], [0], [1], [0, 0, 1, 1], [], []>} : vector<4x4xf32>, vector<4x256xf32>, vector<4x256xf32> -> vector<4x256xf32>
    %809 = arith.addf %803, %808 : vector<4x256xf32>
    %c2_583 = arith.constant 2 : index
    %c0_584 = arith.constant 0 : index
    %c0_585 = arith.constant 0 : index
    %810 = vector.load %arg5[%c2_583, %c0_584, %c0_585] : memref<3x4x288xf32, #tpu.memory_space<vmem>>, vector<1x4x256xf32>
    %811 = vector.shape_cast %810 : vector<1x4x256xf32> to vector<4x256xf32>
    %c0_586 = arith.constant 0 : index
    %c2_587 = arith.constant 2 : index
    %c0_588 = arith.constant 0 : index
    %c0_589 = arith.constant 0 : index
    %812 = vector.load %arg3[%c0_586, %c2_587, %c0_588, %c0_589] : memref<3x3x4x4xf32, #tpu.memory_space<vmem>>, vector<1x1x4x4xf32>
    %813 = vector.shape_cast %812 : vector<1x1x4x4xf32> to vector<4x4xf32>
    %cst_590 = arith.constant dense<0.000000e+00> : vector<4x256xf32>
    %814 = tpu.matmul %813, %811, %cst_590 {dimension_numbers = #tpu.dot_dimension_numbers<[1], [0], [0], [1], [0, 0, 1, 1], [], []>} : vector<4x4xf32>, vector<4x256xf32>, vector<4x256xf32> -> vector<4x256xf32>
    %815 = arith.addf %809, %814 : vector<4x256xf32>
    %c0_591 = arith.constant 0 : index
    %c0_592 = arith.constant 0 : index
    %c16_593 = arith.constant 16 : index
    %816 = vector.load %arg5[%c0_591, %c0_592, %c16_593] : memref<3x4x288xf32, #tpu.memory_space<vmem>>, vector<1x4x256xf32>
    %817 = vector.shape_cast %816 : vector<1x4x256xf32> to vector<4x256xf32>
    %c1_594 = arith.constant 1 : index
    %c0_595 = arith.constant 0 : index
    %c0_596 = arith.constant 0 : index
    %c0_597 = arith.constant 0 : index
    %818 = vector.load %arg3[%c1_594, %c0_595, %c0_596, %c0_597] : memref<3x3x4x4xf32, #tpu.memory_space<vmem>>, vector<1x1x4x4xf32>
    %819 = vector.shape_cast %818 : vector<1x1x4x4xf32> to vector<4x4xf32>
    %cst_598 = arith.constant dense<0.000000e+00> : vector<4x256xf32>
    %820 = tpu.matmul %819, %817, %cst_598 {dimension_numbers = #tpu.dot_dimension_numbers<[1], [0], [0], [1], [0, 0, 1, 1], [], []>} : vector<4x4xf32>, vector<4x256xf32>, vector<4x256xf32> -> vector<4x256xf32>
    %821 = arith.addf %815, %820 : vector<4x256xf32>
    %c1_599 = arith.constant 1 : index
    %c0_600 = arith.constant 0 : index
    %c16_601 = arith.constant 16 : index
    %822 = vector.load %arg5[%c1_599, %c0_600, %c16_601] : memref<3x4x288xf32, #tpu.memory_space<vmem>>, vector<1x4x256xf32>
    %823 = vector.shape_cast %822 : vector<1x4x256xf32> to vector<4x256xf32>
    %c1_602 = arith.constant 1 : index
    %c1_603 = arith.constant 1 : index
    %c0_604 = arith.constant 0 : index
    %c0_605 = arith.constant 0 : index
    %824 = vector.load %arg3[%c1_602, %c1_603, %c0_604, %c0_605] : memref<3x3x4x4xf32, #tpu.memory_space<vmem>>, vector<1x1x4x4xf32>
    %825 = vector.shape_cast %824 : vector<1x1x4x4xf32> to vector<4x4xf32>
    %cst_606 = arith.constant dense<0.000000e+00> : vector<4x256xf32>
    %826 = tpu.matmul %825, %823, %cst_606 {dimension_numbers = #tpu.dot_dimension_numbers<[1], [0], [0], [1], [0, 0, 1, 1], [], []>} : vector<4x4xf32>, vector<4x256xf32>, vector<4x256xf32> -> vector<4x256xf32>
    %827 = arith.addf %821, %826 : vector<4x256xf32>
    %c2_607 = arith.constant 2 : index
    %c0_608 = arith.constant 0 : index
    %c16_609 = arith.constant 16 : index
    %828 = vector.load %arg5[%c2_607, %c0_608, %c16_609] : memref<3x4x288xf32, #tpu.memory_space<vmem>>, vector<1x4x256xf32>
    %829 = vector.shape_cast %828 : vector<1x4x256xf32> to vector<4x256xf32>
    %c1_610 = arith.constant 1 : index
    %c2_611 = arith.constant 2 : index
    %c0_612 = arith.constant 0 : index
    %c0_613 = arith.constant 0 : index
    %830 = vector.load %arg3[%c1_610, %c2_611, %c0_612, %c0_613] : memref<3x3x4x4xf32, #tpu.memory_space<vmem>>, vector<1x1x4x4xf32>
    %831 = vector.shape_cast %830 : vector<1x1x4x4xf32> to vector<4x4xf32>
    %cst_614 = arith.constant dense<0.000000e+00> : vector<4x256xf32>
    %832 = tpu.matmul %831, %829, %cst_614 {dimension_numbers = #tpu.dot_dimension_numbers<[1], [0], [0], [1], [0, 0, 1, 1], [], []>} : vector<4x4xf32>, vector<4x256xf32>, vector<4x256xf32> -> vector<4x256xf32>
    %833 = arith.addf %827, %832 : vector<4x256xf32>
    %c0_615 = arith.constant 0 : index
    %c0_616 = arith.constant 0 : index
    %c32_617 = arith.constant 32 : index
    %834 = vector.load %arg5[%c0_615, %c0_616, %c32_617] : memref<3x4x288xf32, #tpu.memory_space<vmem>>, vector<1x4x256xf32>
    %835 = vector.shape_cast %834 : vector<1x4x256xf32> to vector<4x256xf32>
    %c2_618 = arith.constant 2 : index
    %c0_619 = arith.constant 0 : index
    %c0_620 = arith.constant 0 : index
    %c0_621 = arith.constant 0 : index
    %836 = vector.load %arg3[%c2_618, %c0_619, %c0_620, %c0_621] : memref<3x3x4x4xf32, #tpu.memory_space<vmem>>, vector<1x1x4x4xf32>
    %837 = vector.shape_cast %836 : vector<1x1x4x4xf32> to vector<4x4xf32>
    %cst_622 = arith.constant dense<0.000000e+00> : vector<4x256xf32>
    %838 = tpu.matmul %837, %835, %cst_622 {dimension_numbers = #tpu.dot_dimension_numbers<[1], [0], [0], [1], [0, 0, 1, 1], [], []>} : vector<4x4xf32>, vector<4x256xf32>, vector<4x256xf32> -> vector<4x256xf32>
    %839 = arith.addf %833, %838 : vector<4x256xf32>
    %c1_623 = arith.constant 1 : index
    %c0_624 = arith.constant 0 : index
    %c32_625 = arith.constant 32 : index
    %840 = vector.load %arg5[%c1_623, %c0_624, %c32_625] : memref<3x4x288xf32, #tpu.memory_space<vmem>>, vector<1x4x256xf32>
    %841 = vector.shape_cast %840 : vector<1x4x256xf32> to vector<4x256xf32>
    %c2_626 = arith.constant 2 : index
    %c1_627 = arith.constant 1 : index
    %c0_628 = arith.constant 0 : index
    %c0_629 = arith.constant 0 : index
    %842 = vector.load %arg3[%c2_626, %c1_627, %c0_628, %c0_629] : memref<3x3x4x4xf32, #tpu.memory_space<vmem>>, vector<1x1x4x4xf32>
    %843 = vector.shape_cast %842 : vector<1x1x4x4xf32> to vector<4x4xf32>
    %cst_630 = arith.constant dense<0.000000e+00> : vector<4x256xf32>
    %844 = tpu.matmul %843, %841, %cst_630 {dimension_numbers = #tpu.dot_dimension_numbers<[1], [0], [0], [1], [0, 0, 1, 1], [], []>} : vector<4x4xf32>, vector<4x256xf32>, vector<4x256xf32> -> vector<4x256xf32>
    %845 = arith.addf %839, %844 : vector<4x256xf32>
    %c2_631 = arith.constant 2 : index
    %c0_632 = arith.constant 0 : index
    %c32_633 = arith.constant 32 : index
    %846 = vector.load %arg5[%c2_631, %c0_632, %c32_633] : memref<3x4x288xf32, #tpu.memory_space<vmem>>, vector<1x4x256xf32>
    %847 = vector.shape_cast %846 : vector<1x4x256xf32> to vector<4x256xf32>
    %c2_634 = arith.constant 2 : index
    %c2_635 = arith.constant 2 : index
    %c0_636 = arith.constant 0 : index
    %c0_637 = arith.constant 0 : index
    %848 = vector.load %arg3[%c2_634, %c2_635, %c0_636, %c0_637] : memref<3x3x4x4xf32, #tpu.memory_space<vmem>>, vector<1x1x4x4xf32>
    %849 = vector.shape_cast %848 : vector<1x1x4x4xf32> to vector<4x4xf32>
    %cst_638 = arith.constant dense<0.000000e+00> : vector<4x256xf32>
    %850 = tpu.matmul %849, %847, %cst_638 {dimension_numbers = #tpu.dot_dimension_numbers<[1], [0], [0], [1], [0, 0, 1, 1], [], []>} : vector<4x4xf32>, vector<4x256xf32>, vector<4x256xf32> -> vector<4x256xf32>
    %851 = arith.addf %845, %850 : vector<4x256xf32>
    %cst_639 = arith.constant dense<0.000000e+00> : vector<4xf32>
    %852 = vector.multi_reduction <add>, %851, %cst_639 [1] : vector<4x256xf32> to vector<4xf32>
    %853 = vector.shape_cast %852 : vector<4xf32> to vector<4x1xf32>
    %cst_640 = arith.constant 3.906250e-03 : f32
    %854 = vector.broadcast %cst_640 : f32 to vector<4x1xf32>
    %855 = arith.mulf %853, %854 : vector<4x1xf32>
    %856 = arith.mulf %851, %851 : vector<4x256xf32>
    %cst_641 = arith.constant dense<0.000000e+00> : vector<4xf32>
    %857 = vector.multi_reduction <add>, %856, %cst_641 [1] : vector<4x256xf32> to vector<4xf32>
    %858 = vector.shape_cast %857 : vector<4xf32> to vector<4x1xf32>
    %cst_642 = arith.constant 3.906250e-03 : f32
    %859 = vector.broadcast %cst_642 : f32 to vector<4x1xf32>
    %860 = arith.mulf %858, %859 : vector<4x1xf32>
    %861 = arith.mulf %855, %855 : vector<4x1xf32>
    %862 = arith.subf %860, %861 : vector<4x1xf32>
    %863 = vector.broadcast %855 : vector<4x1xf32> to vector<4x256xf32>
    %864 = arith.subf %851, %863 : vector<4x256xf32>
    %cst_643 = arith.constant 9.99999974E-6 : f32
    %865 = vector.broadcast %cst_643 : f32 to vector<4x1xf32>
    %866 = arith.addf %862, %865 : vector<4x1xf32>
    %867 = math.rsqrt %866 : vector<4x1xf32>
    %868 = vector.broadcast %867 : vector<4x1xf32> to vector<4x256xf32>
    %869 = arith.mulf %864, %868 : vector<4x256xf32>
    %870 = arith.addf %1, %869 : vector<4x256xf32>
    %c0_644 = arith.constant 0 : index
    %c0_645 = arith.constant 0 : index
    %c0_646 = arith.constant 0 : index
    %871 = vector.load %arg4[%c0_644, %c0_645, %c0_646] : memref<1x4x256xf32, #tpu.memory_space<vmem>>, vector<1x4x256xf32>
    %872 = vector.shape_cast %871 : vector<1x4x256xf32> to vector<4x256xf32>
    %873 = vector.shape_cast %870 : vector<4x256xf32> to vector<1x4x256xf32>
    tpu.vector_store %arg4[%c0_644, %c0_645, %c0_646], %873 {strides = array<i32>} : memref<1x4x256xf32, #tpu.memory_space<vmem>>, vector<1x4x256xf32>,
    return
  }
  func.func @transform_0(%arg0: i32) -> (i32, i32, i32) {
    %c0_i32 = arith.constant 0 : i32
    %c0_i32_0 = arith.constant 0 : i32
    %c0_i32_1 = arith.constant 0 : i32
    return %arg0, %c0_i32, %c0_i32_0 : i32, i32, i32
  }
  func.func @transform_1(%arg0: i32) -> (i32, i32, i32, i32) {
    %c0_i32 = arith.constant 0 : i32
    %c0_i32_0 = arith.constant 0 : i32
    %c0_i32_1 = arith.constant 0 : i32
    %c0_i32_2 = arith.constant 0 : i32
    %c0_i32_3 = arith.constant 0 : i32
    return %c0_i32, %c0_i32_0, %c0_i32_1, %c0_i32_2 : i32, i32, i32, i32
  }
  func.func @transform_2(%arg0: i32) -> (i32, i32, i32, i32) {
    %c0_i32 = arith.constant 0 : i32
    %c0_i32_0 = arith.constant 0 : i32
    %c0_i32_1 = arith.constant 0 : i32
    %c0_i32_2 = arith.constant 0 : i32
    %c0_i32_3 = arith.constant 0 : i32
    return %c0_i32, %c0_i32_0, %c0_i32_1, %c0_i32_2 : i32, i32, i32, i32
  }
  func.func @transform_3(%arg0: i32) -> (i32, i32, i32) {
    %c0_i32 = arith.constant 0 : i32
    %c0_i32_0 = arith.constant 0 : i32
    %c0_i32_1 = arith.constant 0 : i32
    return %arg0, %c0_i32, %c0_i32_0 : i32, i32, i32
  }
}

</mosaic_0001>

<llo_original>
// kernel: tpu_custom_call.1
$region0: #{tpu_custom_call.1}
  #allocation0 [shape = 'u32[]', space=smem, size = 0x4, offset = 0x4, fixed_abs, tag = 'smem constant byte address 0x4 - core index']
  #allocation1 [shape = 'u32[144,128]{1,0:T(1,128)}', space=vmem, size = 0x12000, scoped, tag = 'internal scratch']
  #allocation2 [shape = 'f32[3,4,288]{2,1,0:T(4,128)}', space=vmem, size = 0x4800, scoped, tag = 'scratch operand']
  %s0 = inlined_call_operand.hbm [shape: f32[2,4,256], index: 0, kind: input, shape index: {}]
  %s1 = inlined_call_operand.hbm [shape: f32[3,3,4,4], index: 1, kind: input, shape index: {}]
  %s2 = inlined_call_operand.hbm [shape: f32[3,3,4,4], index: 2, kind: input, shape index: {}]
  %s3 = inlined_call_operand.hbm [shape: f32[2,4,256], index: 3, kind: output, shape index: {}]
  %s4 = sld [smem:[#allocation0]]
  $region57: #{tpu_custom_call.1} parent=0
    _
  %s6 = ssub.s32 1, %s4
  %s7 = scalar_select 0, %s6, %s4
  $region1: #{tpu_custom_call.1} parent=0
    #allocation3 [shape = 'u8[8192]{0}', space=vmem, size = 0x2000, scoped, tag = 'input window, operand 0']
    #allocation4 [shape = 's32[2]{0}', space=sflag, size = 0x8, scoped, tag = 'scoped memory for tpu_custom_call.1']
    #allocation5 [shape = 's32[2]{0}', space=sflag, size = 0x8, scoped, tag = 'scoped memory for tpu_custom_call.1']
    #allocation6 [shape = 'u8[18432]{0}', space=vmem, size = 0x4800, scoped, tag = 'input window, operand 1, single buffered']
    #allocation7 [shape = 's32[1]{0}', space=sflag, size = 0x4, scoped, tag = 'scoped memory for tpu_custom_call.1']
    #allocation8 [shape = 'u8[18432]{0}', space=vmem, size = 0x4800, scoped, tag = 'input window, operand 2, single buffered']
    #allocation9 [shape = 'u8[8192]{0}', space=vmem, size = 0x2000, scoped, tag = 'output window, operand 0']
    %8 = vsyncpa [#allocation4], 0
    %s9 = scalar_lea.sflag [#allocation4], 1
    %10 = vsyncpa %s9, 0
    %11 = vsyncpa [#allocation7], 0
    %12 = vsyncpa [#allocation5], 0
    %s13 = scalar_lea.sflag [#allocation5], 1
    %14 = vsyncpa %s13, 0
    loop: start=0, step=1, limit=4
    $region2: #{tpu_custom_call.1} parent=1 // loop_pre_header
      _
    $region3: #{tpu_custom_call.1} parent=1 // loop_header
      %s16 = sphi 0, %s20
      %p17 = scmp.ge.s32.totalorder %s16, 4
      %s26 = sphi 0, %s28
      %s29 = sphi 0, %s26
      %s30 = sphi 0, %s29
      %s46 = sphi 0, %s30
      %s50 = sphi 0, %s50
      %s52 = sphi 0, %s50
      %s53 = sphi 0, %s52
      %s67 = sphi 0, %s53
      %s71 = sphi 0, %s71
      %s73 = sphi 0, %s71
      %s74 = sphi 0, %s73
      %s88 = sphi 0, %s74
      %s94 = sphi 0, %s96
      %s97 = sphi 0, %s94
      %s98 = sphi 0, %s97
      %s114 = sphi 0, %s98
    $region4: #{tpu_custom_call.1} parent=1 // loop_header_branch
      %19 = sbr.rel (%p17) target = $region8
    $region5: #{tpu_custom_call.1} parent=1 // loop_body
      %s21 = ssub.s32 %s16, 1
      %s22 = ssub.s32 %s16, 2
      %s23 = sadd.s32 %s16, 1
      %s24 = ssub.s32 %s16, %s23
      %p25 = scmp.eq.s32.totalorder %s24, 0
      %s27 = sadd.s32 %s26, 1
      %s28 = scalar_select %p25, %s26, %s27
      %p31 = pneg %p25
      %p32 = scmp.eq.s32.totalorder %s16, 1
      %p33 = por %p31, %p32
      %p34 = scmp.ne.s32.totalorder %s26, %s29
      %p35 = scmp.eq.s32.totalorder %s16, 0
      %p36 = por %p34, %p35
      %p37 = scmp.ne.s32.totalorder %s26, %s29
      %p38 = scmp.eq.s32.totalorder %s21, 1
      %p39 = por %p37, %p38
      %p40 = scmp.ne.s32.totalorder %s29, %s30
      %p41 = scmp.eq.s32.totalorder %s21, 0
      %p42 = por %p40, %p41
      %p43 = scmp.ne.s32.totalorder %s29, %s30
      %p44 = scmp.eq.s32.totalorder %s22, 1
      %p45 = por %p43, %p44
      %p47 = scmp.ne.s32.totalorder %s30, %s46
      %p48 = scmp.eq.s32.totalorder %s22, 0
      %p49 = por %p47, %p48
      %s51 = sadd.s32 %s50, 1
      %p54 = scmp.eq.s32.totalorder %s16, 1
      %p55 = scmp.ne.s32.totalorder %s50, %s52
      %p56 = scmp.eq.s32.totalorder %s16, 0
      %p57 = por %p55, %p56
      %p58 = scmp.ne.s32.totalorder %s50, %s52
      %p59 = scmp.eq.s32.totalorder %s21, 1
      %p60 = por %p58, %p59
      %p61 = scmp.ne.s32.totalorder %s52, %s53
      %p62 = scmp.eq.s32.totalorder %s21, 0
      %p63 = por %p61, %p62
      %p64 = scmp.ne.s32.totalorder %s52, %s53
      %p65 = scmp.eq.s32.totalorder %s22, 1
      %p66 = por %p64, %p65
      %p68 = scmp.ne.s32.totalorder %s53, %s67
      %p69 = scmp.eq.s32.totalorder %s22, 0
      %p70 = por %p68, %p69
      %s72 = sadd.s32 %s71, 1
      %p75 = scmp.eq.s32.totalorder %s16, 1
      %p76 = scmp.ne.s32.totalorder %s71, %s73
      %p77 = scmp.eq.s32.totalorder %s16, 0
      %p78 = por %p76, %p77
      %p79 = scmp.ne.s32.totalorder %s71, %s73
      %p80 = scmp.eq.s32.totalorder %s21, 1
      %p81 = por %p79, %p80
      %p82 = scmp.ne.s32.totalorder %s73, %s74
      %p83 = scmp.eq.s32.totalorder %s21, 0
      %p84 = por %p82, %p83
      %p85 = scmp.ne.s32.totalorder %s73, %s74
      %p86 = scmp.eq.s32.totalorder %s22, 1
      %p87 = por %p85, %p86
      %p89 = scmp.ne.s32.totalorder %s74, %s88
      %p90 = scmp.eq.s32.totalorder %s22, 0
      %p91 = por %p89, %p90
      %s92 = ssub.s32 %s16, %s23
      %p93 = scmp.eq.s32.totalorder %s92, 0
      %s95 = sadd.s32 %s94, 1
      %s96 = scalar_select %p93, %s94, %s95
      %p99 = pneg %p93
      %p100 = scmp.eq.s32.totalorder %s16, 1
      %p101 = por %p99, %p100
      %p102 = scmp.ne.s32.totalorder %s94, %s97
      %p103 = scmp.eq.s32.totalorder %s16, 0
      %p104 = por %p102, %p103
      %p105 = scmp.ne.s32.totalorder %s94, %s97
      %p106 = scmp.eq.s32.totalorder %s21, 1
      %p107 = por %p105, %p106
      %p108 = scmp.ne.s32.totalorder %s97, %s98
      %p109 = scmp.eq.s32.totalorder %s21, 0
      %p110 = por %p108, %p109
      %p111 = scmp.ne.s32.totalorder %s97, %s98
      %p112 = scmp.eq.s32.totalorder %s22, 1
      %p113 = por %p111, %p112
      %p115 = scmp.ne.s32.totalorder %s98, %s114
      %p116 = scmp.eq.s32.totalorder %s22, 0
      %p117 = por %p115, %p116
      %p118 = scmp.le.s32.totalorder 1, %s16
      %p119 = scmp.lt.s32.totalorder %s16, 3
      %p120 = pnand %p118, %p119
      %p121 = pneg %p120
      // Predicated region
      $region9: #{tpu_custom_call.1} parent=5 // pred_check
        _
      $region10: #{tpu_custom_call.1} parent=5 // pred_check_branch
        %123 = sbr.rel (%p120) target = $region12
      $region11: #{tpu_custom_call.1} parent=5 // pred_region
        %s124 = ssub.s32 %s16, 1
        // Predicated region
        $region13: #{tpu_custom_call.1} parent=11 // pred_check
          %p125 = pneg %p63
        $region14: #{tpu_custom_call.1} parent=11 // pred_check_branch
          %127 = sbr.rel (%p125) target = $region16
        $region15: #{tpu_custom_call.1} parent=11 // pred_region
          %s129 = ssub.s32 576, 576
          %130 = vsyncadd [#allocation7], %s129
          %s131 = sshll.u32 [#allocation6], 4
          %s132 = int_to_ptr.vmem [resolvable:$true] %s131
          %137 = dma.hbm_to_vmem [thread:$0]  %s1, 576, %s132, [#allocation7], 64, 64, 4
        $region16: #{tpu_custom_call.1} parent=11 // pred_fallthru
          _
        // Predicated region
        $region17: #{tpu_custom_call.1} parent=11 // pred_check
          %p138 = pneg %p84
        $region18: #{tpu_custom_call.1} parent=11 // pred_check_branch
          %140 = sbr.rel (%p138) target = $region20
        $region19: #{tpu_custom_call.1} parent=11 // pred_region
          %s142 = ssub.s32 576, 576
          %143 = vsyncadd [#allocation7], %s142
          %s144 = sshll.u32 [#allocation8], 4
          %s145 = int_to_ptr.vmem [resolvable:$true] %s144
          %150 = dma.hbm_to_vmem [thread:$0]  %s2, 576, %s145, [#allocation7], 64, 64, 4
        $region20: #{tpu_custom_call.1} parent=11 // pred_fallthru
          _
      $region12: #{tpu_custom_call.1} parent=5 // pred_fallthru
        _
      %p151 = scmp.lt.s32.totalorder %s16, 2
      // Predicated region
      $region21: #{tpu_custom_call.1} parent=5 // pred_check
        %p152 = pneg %p151
      $region22: #{tpu_custom_call.1} parent=5 // pred_check_branch
        %154 = sbr.rel (%p152) target = $region24
      $region23: #{tpu_custom_call.1} parent=5 // pred_region
        // Predicated region
        $region25: #{tpu_custom_call.1} parent=23 // pred_check
          %p155 = pneg %p36
        $region26: #{tpu_custom_call.1} parent=23 // pred_check_branch
          %157 = sbr.rel (%p155) target = $region28
        $region27: #{tpu_custom_call.1} parent=23 // pred_region
          %s158 = sand.u32 %s26, 1
          %s159 = scalar_lea.sflag [#allocation4], %s158
          %s160 = sand.u32 %s26, 1
          %s161 = smul.addr %s160, 8
          %s162 = scalar_lea.vmem [#allocation3], %s161
          %s164 = ssub.s32 128, 128
          %165 = vsyncadd %s159, %s164
          %s166 = smul.addr %s16, 2
          %s167 = smul.addr %s166, 64
          %s168 = scalar_lea.hbm %s0, %s167
          %s170 = sshll.u32 %s162, 4
          %s171 = int_to_ptr.vmem [resolvable:$true] %s170
          %173 = dma.hbm_to_vmem [thread:$0]  %s168, 128, %s171, %s159
        $region28: #{tpu_custom_call.1} parent=23 // pred_fallthru
          _
      $region24: #{tpu_custom_call.1} parent=5 // pred_fallthru
        _
      %p174 = scmp.le.s32.totalorder 1, %s16
      %p175 = scmp.lt.s32.totalorder %s16, 3
      %p176 = pnand %p174, %p175
      %p177 = pneg %p176
      // Predicated region
      $region29: #{tpu_custom_call.1} parent=5 // pred_check
        _
      $region30: #{tpu_custom_call.1} parent=5 // pred_check_branch
        %179 = sbr.rel (%p176) target = $region32
      $region31: #{tpu_custom_call.1} parent=5 // pred_region
        %s180 = ssub.s32 %s16, 1
        %s181 = sand.u32 %s29, 1
        %s182 = scalar_lea.sflag [#allocation4], %s181
        %s183 = sand.u32 %s29, 1
        %s184 = smul.addr %s183, 8
        %s185 = scalar_lea.vmem [#allocation3], %s184
        // Predicated region
        $region33: #{tpu_custom_call.1} parent=31 // pred_check
          %p186 = pneg %p42
        $region34: #{tpu_custom_call.1} parent=31 // pred_check_branch
          %188 = sbr.rel (%p186) target = $region36
        $region35: #{tpu_custom_call.1} parent=31 // pred_region
          %189 = dma.done %s182, 128
        $region36: #{tpu_custom_call.1} parent=31 // pred_fallthru
          _
        // Predicated region
        $region37: #{tpu_custom_call.1} parent=31 // pred_check
          %p190 = pneg %p63
        $region38: #{tpu_custom_call.1} parent=31 // pred_check_branch
          %192 = sbr.rel (%p190) target = $region40
        $region39: #{tpu_custom_call.1} parent=31 // pred_region
          %193 = dma.done [#allocation7], 576
        $region40: #{tpu_custom_call.1} parent=31 // pred_fallthru
          _
        // Predicated region
        $region41: #{tpu_custom_call.1} parent=31 // pred_check
          %p194 = pneg %p84
        $region42: #{tpu_custom_call.1} parent=31 // pred_check_branch
          %196 = sbr.rel (%p194) target = $region44
        $region43: #{tpu_custom_call.1} parent=31 // pred_region
          %197 = dma.done [#allocation7], 576
        $region44: #{tpu_custom_call.1} parent=31 // pred_fallthru
          _
        %s198 = sand.u32 %s29, 1
        %s199 = scalar_lea.sflag [#allocation4], %s198
        %s200 = sand.u32 %s29, 1
        %s201 = smul.addr %s200, 8
        %s202 = scalar_lea.vmem [#allocation3], %s201
        %p203 = pneg %p42
        %p204 = pneg %p39
        %p205 = pneg %p63
        %p206 = pneg %p60
        %p207 = pneg %p84
        %p208 = pneg %p81
        %p209 = pneg %p110
        %p210 = pneg %p107
        %s211 = sand.u32 %s97, 1
        %s212 = scalar_lea.sflag [#allocation5], %s211
        %s213 = sand.u32 %s97, 1
        %s214 = smul.addr %s213, 8
        %s215 = scalar_lea.vmem [#allocation9], %s214
        %v216 = vld [vmem:[%s185] sm:$0xff]
        %218 = vrot.lane.b32.xlu0 %v216, 112
        %v219 = vpop.permute.xlu0 %218
        %s221 = scalar_lea.vmem [#allocation2], 12
        %vm222 = vcmask 125952
        %223 = vst.msk [vmem:[%s221] sm:$0xf] %vm222, %v219
        %224 = vrot.lane.b32.xlu0 %v216, 111
        %v225 = vpop.permute.xlu0 %224
        %vm227 = vcmask 3072
        %228 = vst.msk [vmem:[#allocation2] sm:$0xf] %vm227, %v225
        %229 = vrot.lane.b32.xlu0 %v216, 113
        %v230 = vpop.permute.xlu0 %229
        %vm232 = vcmask 125960
        %233 = vst.msk [vmem:[#allocation2] sm:$0xf] %vm232, %v230
        %s234 = scalar_lea.vmem [#allocation2], 24
        %vm235 = vcmask 117760
        %236 = vst.msk [vmem:[%s234] sm:$0xf] %vm235, %v225
        %vm237 = vcmask 126072
        %238 = vst.msk [vmem:[%s234] sm:$0xf] %vm237, %v230
        %239 = vrot.lane.b32.xlu0 %v216, 16
        %v240 = vpop.permute.xlu0 %239
        %vm242 = vcmask 257152
        %243 = vst.msk [vmem:[%s221] sm:$0xf] %vm242, %v240
        %244 = vrot.lane.b32.xlu0 %v216, 15
        %v245 = vpop.permute.xlu0 %244
        %vm247 = vcmask 134272
        %248 = vst.msk [vmem:[#allocation2] sm:$0xf] %vm247, %v245
        %249 = vrot.lane.b32.xlu0 %v216, 17
        %v250 = vpop.permute.xlu0 %249
        %vm252 = vcmask 257160
        %253 = vst.msk [vmem:[#allocation2] sm:$0xf] %vm252, %v250
        %vm254 = vcmask 248960
        %255 = vst.msk [vmem:[%s234] sm:$0xf] %vm254, %v245
        %vm256 = vcmask 257272
        %257 = vst.msk [vmem:[%s234] sm:$0xf] %vm256, %v250
        %vm258 = vcmask 388352
        %259 = vst.msk [vmem:[%s221] sm:$0xf] %vm258, %v240
        %vm260 = vcmask 265472
        %261 = vst.msk [vmem:[#allocation2] sm:$0xf] %vm260, %v245
        %vm262 = vcmask 388360
        %263 = vst.msk [vmem:[#allocation2] sm:$0xf] %vm262, %v250
        %vm264 = vcmask 380160
        %265 = vst.msk [vmem:[%s234] sm:$0xf] %vm264, %v245
        %vm266 = vcmask 388472
        %267 = vst.msk [vmem:[%s234] sm:$0xf] %vm266, %v250
        %vm268 = vcmask 519552
        %269 = vst.msk [vmem:[%s221] sm:$0xf] %vm268, %v240
        %vm270 = vcmask 396672
        %271 = vst.msk [vmem:[#allocation2] sm:$0xf] %vm270, %v245
        %vm272 = vcmask 519560
        %273 = vst.msk [vmem:[#allocation2] sm:$0xf] %vm272, %v250
        %vm274 = vcmask 511360
        %275 = vst.msk [vmem:[%s234] sm:$0xf] %vm274, %v245
        %vm276 = vcmask 519672
        %277 = vst.msk [vmem:[%s234] sm:$0xf] %vm276, %v250
        %vm278 = vcmask 650752
        %279 = vst.msk [vmem:[%s221] sm:$0xf] %vm278, %v240
        %vm280 = vcmask 527872
        %281 = vst.msk [vmem:[#allocation2] sm:$0xf] %vm280, %v245
        %vm282 = vcmask 650760
        %283 = vst.msk [vmem:[#allocation2] sm:$0xf] %vm282, %v250
        %vm284 = vcmask 642560
        %285 = vst.msk [vmem:[%s234] sm:$0xf] %vm284, %v245
        %vm286 = vcmask 650872
        %287 = vst.msk [vmem:[%s234] sm:$0xf] %vm286, %v250
        %vm288 = vcmask 781952
        %289 = vst.msk [vmem:[%s221] sm:$0xf] %vm288, %v240
        %vm290 = vcmask 659072
        %291 = vst.msk [vmem:[#allocation2] sm:$0xf] %vm290, %v245
        %vm292 = vcmask 781960
        %293 = vst.msk [vmem:[#allocation2] sm:$0xf] %vm292, %v250
        %vm294 = vcmask 773760
        %295 = vst.msk [vmem:[%s234] sm:$0xf] %vm294, %v245
        %vm296 = vcmask 782072
        %297 = vst.msk [vmem:[%s234] sm:$0xf] %vm296, %v250
        %vm298 = vcmask 913152
        %299 = vst.msk [vmem:[%s221] sm:$0xf] %vm298, %v240
        %vm300 = vcmask 790272
        %301 = vst.msk [vmem:[#allocation2] sm:$0xf] %vm300, %v245
        %vm302 = vcmask 913160
        %303 = vst.msk [vmem:[#allocation2] sm:$0xf] %vm302, %v250
        %vm304 = vcmask 904960
        %305 = vst.msk [vmem:[%s234] sm:$0xf] %vm304, %v245
        %vm306 = vcmask 913272
        %307 = vst.msk [vmem:[%s234] sm:$0xf] %vm306, %v250
        %vm308 = vcmask 1044352
        %309 = vst.msk [vmem:[%s221] sm:$0xf] %vm308, %v240
        %vm310 = vcmask 921472
        %311 = vst.msk [vmem:[#allocation2] sm:$0xf] %vm310, %v245
        %vm312 = vcmask 1044360
        %313 = vst.msk [vmem:[#allocation2] sm:$0xf] %vm312, %v250
        %vm314 = vcmask 1036160
        %315 = vst.msk [vmem:[%s234] sm:$0xf] %vm314, %v245
        %vm316 = vcmask 1044472
        %317 = vst.msk [vmem:[%s234] sm:$0xf] %vm316, %v250
        %318 = vst.msk [vmem:[%s221 + $0x4] sm:$0xf] %vm222, %v240
        %319 = vst.msk [vmem:[#allocation2 + $0x4] sm:$0xf] %vm227, %v245
        %320 = vst.msk [vmem:[#allocation2 + $0x4] sm:$0xf] %vm232, %v250
        %321 = vst.msk [vmem:[%s234 + $0x4] sm:$0xf] %vm235, %v245
        %322 = vst.msk [vmem:[%s234 + $0x4] sm:$0xf] %vm237, %v250
        %v323 = vrot.slane %v216, 4
        %324 = vrot.lane.b32.xlu0 %v323, 16
        %v325 = vpop.permute.xlu0 %324
        %327 = vst.msk [vmem:[%s221 + $0x4] sm:$0xf] %vm242, %v325
        %328 = vrot.lane.b32.xlu0 %v216, 127
        %v329 = vpop.permute.xlu0 %328
        %v330 = vrot.slane %v329, 4
        %331 = vrot.lane.b32.xlu0 %v330, 16
        %v332 = vpop.permute.xlu0 %331
        %334 = vst.msk [vmem:[#allocation2 + $0x4] sm:$0xf] %vm247, %v332
        %335 = vrot.lane.b32.xlu0 %v323, 17
        %v336 = vpop.permute.xlu0 %335
        %338 = vst.msk [vmem:[#allocation2 + $0x4] sm:$0xf] %vm252, %v336
        %339 = vst.msk [vmem:[%s234 + $0x4] sm:$0xf] %vm254, %v332
        %340 = vrot.lane.b32.xlu0 %v216, 114
        %v341 = vpop.permute.xlu0 %340
        %v342 = vrot.slane %v341, 4
        %343 = vrot.lane.b32.xlu0 %v342, 31
        %v344 = vpop.permute.xlu0 %343
        %346 = vst.msk [vmem:[%s234 + $0x4] sm:$0xf] %vm256, %v344
        %v347 = vrot.slane %v219, 4
        %348 = vrot.lane.b32.xlu0 %v347, 32
        %v349 = vpop.permute.xlu0 %348
        %351 = vst.msk [vmem:[%s221 + $0x4] sm:$0xf] %vm258, %v349
        %v352 = vrot.slane %v225, 4
        %353 = vrot.lane.b32.xlu0 %v352, 32
        %v354 = vpop.permute.xlu0 %353
        %356 = vst.msk [vmem:[#allocation2 + $0x4] sm:$0xf] %vm260, %v354
        %357 = vrot.lane.b32.xlu0 %v347, 33
        %v358 = vpop.permute.xlu0 %357
        %360 = vst.msk [vmem:[#allocation2 + $0x4] sm:$0xf] %vm262, %v358
        %361 = vst.msk [vmem:[%s234 + $0x4] sm:$0xf] %vm264, %v354
        %362 = vrot.lane.b32.xlu0 %v216, 98
        %v363 = vpop.permute.xlu0 %362
        %v364 = vrot.slane %v363, 4
        %365 = vrot.lane.b32.xlu0 %v364, 47
        %v366 = vpop.permute.xlu0 %365
        %368 = vst.msk [vmem:[%s234 + $0x4] sm:$0xf] %vm266, %v366
        %369 = vrot.lane.b32.xlu0 %v216, 96
        %v370 = vpop.permute.xlu0 %369
        %v371 = vrot.slane %v370, 4
        %372 = vrot.lane.b32.xlu0 %v371, 48
        %v373 = vpop.permute.xlu0 %372
        %375 = vst.msk [vmem:[%s221 + $0x4] sm:$0xf] %vm268, %v373
        %376 = vrot.lane.b32.xlu0 %v216, 95
        %v377 = vpop.permute.xlu0 %376
        %v378 = vrot.slane %v377, 4
        %379 = vrot.lane.b32.xlu0 %v378, 48
        %v380 = vpop.permute.xlu0 %379
        %382 = vst.msk [vmem:[#allocation2 + $0x4] sm:$0xf] %vm270, %v380
        %383 = vrot.lane.b32.xlu0 %v371, 49
        %v384 = vpop.permute.xlu0 %383
        %386 = vst.msk [vmem:[#allocation2 + $0x4] sm:$0xf] %vm272, %v384
        %387 = vst.msk [vmem:[%s234 + $0x4] sm:$0xf] %vm274, %v380
        %388 = vrot.lane.b32.xlu0 %v216, 82
        %v389 = vpop.permute.xlu0 %388
        %v390 = vrot.slane %v389, 4
        %391 = vrot.lane.b32.xlu0 %v390, 63
        %v392 = vpop.permute.xlu0 %391
        %394 = vst.msk [vmem:[%s234 + $0x4] sm:$0xf] %vm276, %v392
        %395 = vrot.lane.b32.xlu0 %v216, 80
        %v396 = vpop.permute.xlu0 %395
        %v397 = vrot.slane %v396, 4
        %398 = vrot.lane.b32.xlu0 %v397, 64
        %v399 = vpop.permute.xlu0 %398
        %401 = vst.msk [vmem:[%s221 + $0x4] sm:$0xf] %vm278, %v399
        %402 = vrot.lane.b32.xlu0 %v216, 79
        %v403 = vpop.permute.xlu0 %402
        %v404 = vrot.slane %v403, 4
        %405 = vrot.lane.b32.xlu0 %v404, 64
        %v406 = vpop.permute.xlu0 %405
        %408 = vst.msk [vmem:[#allocation2 + $0x4] sm:$0xf] %vm280, %v406
        %409 = vrot.lane.b32.xlu0 %v397, 65
        %v410 = vpop.permute.xlu0 %409
        %412 = vst.msk [vmem:[#allocation2 + $0x4] sm:$0xf] %vm282, %v410
        %413 = vst.msk [vmem:[%s234 + $0x4] sm:$0xf] %vm284, %v406
        %414 = vrot.lane.b32.xlu0 %v216, 66
        %v415 = vpop.permute.xlu0 %414
        %v416 = vrot.slane %v415, 4
        %417 = vrot.lane.b32.xlu0 %v416, 79
        %v418 = vpop.permute.xlu0 %417
        %420 = vst.msk [vmem:[%s234 + $0x4] sm:$0xf] %vm286, %v418
        %421 = vrot.lane.b32.xlu0 %v216, 64
        %v422 = vpop.permute.xlu0 %421
        %v423 = vrot.slane %v422, 4
        %424 = vrot.lane.b32.xlu0 %v423, 80
        %v425 = vpop.permute.xlu0 %424
        %427 = vst.msk [vmem:[%s221 + $0x4] sm:$0xf] %vm288, %v425
        %428 = vrot.lane.b32.xlu0 %v216, 63
        %v429 = vpop.permute.xlu0 %428
        %v430 = vrot.slane %v429, 4
        %431 = vrot.lane.b32.xlu0 %v430, 80
        %v432 = vpop.permute.xlu0 %431
        %434 = vst.msk [vmem:[#allocation2 + $0x4] sm:$0xf] %vm290, %v432
        %435 = vrot.lane.b32.xlu0 %v423, 81
        %v436 = vpop.permute.xlu0 %435
        %438 = vst.msk [vmem:[#allocation2 + $0x4] sm:$0xf] %vm292, %v436
        %439 = vst.msk [vmem:[%s234 + $0x4] sm:$0xf] %vm294, %v432
        %440 = vrot.lane.b32.xlu0 %v216, 50
        %v441 = vpop.permute.xlu0 %440
        %v442 = vrot.slane %v441, 4
        %443 = vrot.lane.b32.xlu0 %v442, 95
        %v444 = vpop.permute.xlu0 %443
        %446 = vst.msk [vmem:[%s234 + $0x4] sm:$0xf] %vm296, %v444
        %447 = vrot.lane.b32.xlu0 %v216, 48
        %v448 = vpop.permute.xlu0 %447
        %v449 = vrot.slane %v448, 4
        %450 = vrot.lane.b32.xlu0 %v449, 96
        %v451 = vpop.permute.xlu0 %450
        %453 = vst.msk [vmem:[%s221 + $0x4] sm:$0xf] %vm298, %v451
        %454 = vrot.lane.b32.xlu0 %v216, 47
        %v455 = vpop.permute.xlu0 %454
        %v456 = vrot.slane %v455, 4
        %457 = vrot.lane.b32.xlu0 %v456, 96
        %v458 = vpop.permute.xlu0 %457
        %460 = vst.msk [vmem:[#allocation2 + $0x4] sm:$0xf] %vm300, %v458
        %461 = vrot.lane.b32.xlu0 %v449, 97
        %v462 = vpop.permute.xlu0 %461
        %464 = vst.msk [vmem:[#allocation2 + $0x4] sm:$0xf] %vm302, %v462
        %465 = vst.msk [vmem:[%s234 + $0x4] sm:$0xf] %vm304, %v458
        %466 = vrot.lane.b32.xlu0 %v216, 34
        %v467 = vpop.permute.xlu0 %466
        %v468 = vrot.slane %v467, 4
        %469 = vrot.lane.b32.xlu0 %v468, 111
        %v470 = vpop.permute.xlu0 %469
        %472 = vst.msk [vmem:[%s234 + $0x4] sm:$0xf] %vm306, %v470
        %473 = vrot.lane.b32.xlu0 %v216, 32
        %v474 = vpop.permute.xlu0 %473
        %v475 = vrot.slane %v474, 4
        %476 = vrot.lane.b32.xlu0 %v475, 112
        %v477 = vpop.permute.xlu0 %476
        %479 = vst.msk [vmem:[%s221 + $0x4] sm:$0xf] %vm308, %v477
        %480 = vrot.lane.b32.xlu0 %v216, 31
        %v481 = vpop.permute.xlu0 %480
        %v482 = vrot.slane %v481, 4
        %483 = vrot.lane.b32.xlu0 %v482, 112
        %v484 = vpop.permute.xlu0 %483
        %486 = vst.msk [vmem:[#allocation2 + $0x4] sm:$0xf] %vm310, %v484
        %487 = vrot.lane.b32.xlu0 %v475, 113
        %v488 = vpop.permute.xlu0 %487
        %490 = vst.msk [vmem:[#allocation2 + $0x4] sm:$0xf] %vm312, %v488
        %491 = vst.msk [vmem:[%s234 + $0x4] sm:$0xf] %vm314, %v484
        %492 = vrot.lane.b32.xlu0 %v216, 18
        %v493 = vpop.permute.xlu0 %492
        %v494 = vrot.slane %v493, 4
        %495 = vrot.lane.b32.xlu0 %v494, 127
        %v496 = vpop.permute.xlu0 %495
        %498 = vst.msk [vmem:[%s234 + $0x4] sm:$0xf] %vm316, %v496
        %v499 = vrot.slane %v240, 4
        %501 = vst.msk [vmem:[%s221 + $0x8] sm:$0xf] %vm222, %v499
        %v502 = vrot.slane %v245, 4
        %504 = vst.msk [vmem:[#allocation2 + $0x8] sm:$0xf] %vm227, %v502
        %505 = vrot.lane.b32.xlu0 %v499, 1
        %v506 = vpop.permute.xlu0 %505
        %508 = vst.msk [vmem:[#allocation2 + $0x8] sm:$0xf] %vm232, %v506
        %509 = vst.msk [vmem:[%s234 + $0x8] sm:$0xf] %vm235, %v502
        %510 = vrot.lane.b32.xlu0 %v216, 2
        %v511 = vpop.permute.xlu0 %510
        %v512 = vrot.slane %v511, 4
        %513 = vrot.lane.b32.xlu0 %v512, 15
        %v514 = vpop.permute.xlu0 %513
        %516 = vst.msk [vmem:[%s234 + $0x8] sm:$0xf] %vm237, %v514
        %517 = vrot.lane.b32.xlu0 %v475, 16
        %v518 = vpop.permute.xlu0 %517
        %520 = vst.msk [vmem:[%s221 + $0x8] sm:$0xf] %vm242, %v518
        %521 = vrot.lane.b32.xlu0 %v482, 16
        %v522 = vpop.permute.xlu0 %521
        %524 = vst.msk [vmem:[#allocation2 + $0x8] sm:$0xf] %vm247, %v522
        %525 = vrot.lane.b32.xlu0 %v475, 17
        %v526 = vpop.permute.xlu0 %525
        %528 = vst.msk [vmem:[#allocation2 + $0x8] sm:$0xf] %vm252, %v526
        %529 = vst.msk [vmem:[%s234 + $0x8] sm:$0xf] %vm254, %v522
        %530 = vrot.lane.b32.xlu0 %v494, 31
        %v531 = vpop.permute.xlu0 %530
        %533 = vst.msk [vmem:[%s234 + $0x8] sm:$0xf] %vm256, %v531
        %v534 = vld [vmem:[#allocation2] sm:$0xff]
        %v535 = vld [vmem:[#allocation6] sm:$0xf]
        %v536 = vld [vmem:[%s221] sm:$0xff]
        %s537 = scalar_lea.vmem [#allocation6], 4
        %v538 = vld [vmem:[%s537] sm:$0xf]
        %v540 = vcombine.high %v536, %v536
        %vm541 = vcmask 31744
        %v543 = vsel %vm541, %v538, 0
        %vm545 = vcmask 1043456
        %v546 = vsel %vm545, %v536, 0
        %v548 = vsel %vm545, %v540, 0
        %550 = vmatprep.subr.mxu0 %v548
        %551 = vmatpush1.msra.mxu0 %v546
        %552 = vmatprep.subr.mxu0 0.0
        %553 = vmatpush1.msra.mxu0 0.0
        %554 = vmatprep.subr.mxu0 0.0
        %555 = vmatpush1.msra.mxu0 0.0
        %556 = vmatprep.subr.mxu0 0.0
        %557 = vmatpush1.msra.mxu0 0.0
        %558 = vmatprep.subr.mxu0 0.0
        %559 = vmatpush1.msra.mxu0 0.0
        %560 = vmatprep.subr.mxu0 0.0
        %561 = vmatpush1.msra.mxu0 0.0
        %562 = vmatprep.subr.mxu0 0.0
        %563 = vmatpush1.msra.mxu0 0.0
        %564 = vmatprep.subr.mxu0 0.0
        %565 = vmatpush1.msra.mxu0 0.0
        %566 = vmatprep.subr.mxu0 0.0
        %567 = vmatpush1.msra.mxu0 0.0
        %568 = vmatprep.subr.mxu0 0.0
        %569 = vmatpush1.msra.mxu0 0.0
        %570 = vmatprep.subr.mxu0 0.0
        %571 = vmatpush1.msra.mxu0 0.0
        %572 = vmatprep.subr.mxu0 0.0
        %573 = vmatpush1.msra.mxu0 0.0
        %574 = vmatprep.subr.mxu0 0.0
        %575 = vmatpush1.msra.mxu0 0.0
        %576 = vmatprep.subr.mxu0 0.0
        %577 = vmatpush1.msra.mxu0 0.0
        %578 = vmatprep.subr.mxu0 0.0
        %579 = vmatpush1.msra.mxu0 0.0
        %580 = vmatprep.subr.mxu0 0.0
        %581 = vmatpush1.msra.mxu0 0.0
        %582 = vmatprep.subr.mxu0 0.0
        %583 = vmatpush1.msra.mxu0 0.0
        %584 = vmatprep.subr.mxu0 0.0
        %585 = vmatpush1.msra.mxu0 0.0
        %586 = vmatprep.subr.mxu0 0.0
        %587 = vmatpush1.msra.mxu0 0.0
        %588 = vmatprep.subr.mxu0 0.0
        %589 = vmatpush1.msra.mxu0 0.0
        %590 = vmatprep.subr.mxu0 0.0
        %591 = vmatpush1.msra.mxu0 0.0
        %592 = vmatprep.subr.mxu0 0.0
        %593 = vmatpush1.msra.mxu0 0.0
        %594 = vmatprep.subr.mxu0 0.0
        %595 = vmatpush1.msra.mxu0 0.0
        %596 = vmatprep.subr.mxu0 0.0
        %597 = vmatpush1.msra.mxu0 0.0
        %598 = vmatprep.subr.mxu0 0.0
        %599 = vmatpush1.msra.mxu0 0.0
        %600 = vmatprep.subr.mxu0 0.0
        %601 = vmatpush1.msra.mxu0 0.0
        %602 = vmatprep.subr.mxu0 0.0
        %603 = vmatpush1.msra.mxu0 0.0
        %604 = vmatprep.subr.mxu0 0.0
        %605 = vmatpush1.msra.mxu0 0.0
        %606 = vmatprep.subr.mxu0 0.0
        %607 = vmatpush1.msra.mxu0 0.0
        %608 = vmatprep.subr.mxu0 0.0
        %609 = vmatpush1.msra.mxu0 0.0
        %610 = vmatprep.subr.mxu0 0.0
        %611 = vmatpush1.msra.mxu0 0.0
        %612 = vmatprep.subr.mxu0 0.0
        %613 = vmatpush1.msra.mxu0 0.0
        %614 = vmatprep.mubr.f32.mxu0 0.0
        %615 = vmatmul.mubr.f32.gmra.mrb[0].mxu0 %v543
        %v616 = vpop.f32.mrb[0].mxu0
        %v617 = vadd.f32 0.0, %v616
        %v618 = vpop.f32.mrb[0].mxu0
        %v619 = vadd.f32 0.0, %v618
        %620 = vdwg.mxu0
        %v622 = vcombine.high %v534, %v534
        %v624 = vsel %vm541, %v535, 0
        %v626 = vsel %vm545, %v534, 0
        %v628 = vsel %vm545, %v622, 0
        %630 = vmatprep.subr.mxu0 %v628
        %631 = vmatpush1.msra.mxu0 %v626
        %632 = vmatprep.subr.mxu0 0.0
        %633 = vmatpush1.msra.mxu0 0.0
        %634 = vmatprep.subr.mxu0 0.0
        %635 = vmatpush1.msra.mxu0 0.0
        %636 = vmatprep.subr.mxu0 0.0
        %637 = vmatpush1.msra.mxu0 0.0
        %638 = vmatprep.subr.mxu0 0.0
        %639 = vmatpush1.msra.mxu0 0.0
        %640 = vmatprep.subr.mxu0 0.0
        %641 = vmatpush1.msra.mxu0 0.0
        %642 = vmatprep.subr.mxu0 0.0
        %643 = vmatpush1.msra.mxu0 0.0
        %644 = vmatprep.subr.mxu0 0.0
        %645 = vmatpush1.msra.mxu0 0.0
        %646 = vmatprep.subr.mxu0 0.0
        %647 = vmatpush1.msra.mxu0 0.0
        %648 = vmatprep.subr.mxu0 0.0
        %649 = vmatpush1.msra.mxu0 0.0
        %650 = vmatprep.subr.mxu0 0.0
        %651 = vmatpush1.msra.mxu0 0.0
        %652 = vmatprep.subr.mxu0 0.0
        %653 = vmatpush1.msra.mxu0 0.0
        %654 = vmatprep.subr.mxu0 0.0
        %655 = vmatpush1.msra.mxu0 0.0
        %656 = vmatprep.subr.mxu0 0.0
        %657 = vmatpush1.msra.mxu0 0.0
        %658 = vmatprep.subr.mxu0 0.0
        %659 = vmatpush1.msra.mxu0 0.0
        %660 = vmatprep.subr.mxu0 0.0
        %661 = vmatpush1.msra.mxu0 0.0
        %662 = vmatprep.subr.mxu0 0.0
        %663 = vmatpush1.msra.mxu0 0.0
        %664 = vmatprep.subr.mxu0 0.0
        %665 = vmatpush1.msra.mxu0 0.0
        %666 = vmatprep.subr.mxu0 0.0
        %667 = vmatpush1.msra.mxu0 0.0
        %668 = vmatprep.subr.mxu0 0.0
        %669 = vmatpush1.msra.mxu0 0.0
        %670 = vmatprep.subr.mxu0 0.0
        %671 = vmatpush1.msra.mxu0 0.0
        %672 = vmatprep.subr.mxu0 0.0
        %673 = vmatpush1.msra.mxu0 0.0
        %674 = vmatprep.subr.mxu0 0.0
        %675 = vmatpush1.msra.mxu0 0.0
        %676 = vmatprep.subr.mxu0 0.0
        %677 = vmatpush1.msra.mxu0 0.0
        %678 = vmatprep.subr.mxu0 0.0
        %679 = vmatpush1.msra.mxu0 0.0
        %680 = vmatprep.subr.mxu0 0.0
        %681 = vmatpush1.msra.mxu0 0.0
        %682 = vmatprep.subr.mxu0 0.0
        %683 = vmatpush1.msra.mxu0 0.0
        %684 = vmatprep.subr.mxu0 0.0
        %685 = vmatpush1.msra.mxu0 0.0
        %686 = vmatprep.subr.mxu0 0.0
        %687 = vmatpush1.msra.mxu0 0.0
        %688 = vmatprep.subr.mxu0 0.0
        %689 = vmatpush1.msra.mxu0 0.0
        %690 = vmatprep.subr.mxu0 0.0
        %691 = vmatpush1.msra.mxu0 0.0
        %692 = vmatprep.subr.mxu0 0.0
        %693 = vmatpush1.msra.mxu0 0.0
        %694 = vmatprep.mubr.f32.mxu0 0.0
        %695 = vmatmul.mubr.f32.gmra.mrb[0].mxu0 %v624
        %v696 = vpop.f32.mrb[0].mxu0
        %v697 = vadd.f32 %v617, %v696
        %v698 = vpop.f32.mrb[0].mxu0
        %v699 = vadd.f32 %v619, %v698
        %700 = vdwg.mxu0
        %v701 = vld [vmem:[%s234] sm:$0xff]
        %s702 = scalar_lea.vmem [#allocation6], 8
        %v703 = vld [vmem:[%s702] sm:$0xf]
        %v705 = vcombine.high %v701, %v701
        %v707 = vsel %vm541, %v703, 0
        %v709 = vsel %vm545, %v701, 0
        %v711 = vsel %vm545, %v705, 0
        %713 = vmatprep.subr.mxu0 %v711
        %714 = vmatpush1.msra.mxu0 %v709
        %715 = vmatprep.subr.mxu0 0.0
        %716 = vmatpush1.msra.mxu0 0.0
        %717 = vmatprep.subr.mxu0 0.0
        %718 = vmatpush1.msra.mxu0 0.0
        %719 = vmatprep.subr.mxu0 0.0
        %720 = vmatpush1.msra.mxu0 0.0
        %721 = vmatprep.subr.mxu0 0.0
        %722 = vmatpush1.msra.mxu0 0.0
        %723 = vmatprep.subr.mxu0 0.0
        %724 = vmatpush1.msra.mxu0 0.0
        %725 = vmatprep.subr.mxu0 0.0
        %726 = vmatpush1.msra.mxu0 0.0
        %727 = vmatprep.subr.mxu0 0.0
        %728 = vmatpush1.msra.mxu0 0.0
        %729 = vmatprep.subr.mxu0 0.0
        %730 = vmatpush1.msra.mxu0 0.0
        %731 = vmatprep.subr.mxu0 0.0
        %732 = vmatpush1.msra.mxu0 0.0
        %733 = vmatprep.subr.mxu0 0.0
        %734 = vmatpush1.msra.mxu0 0.0
        %735 = vmatprep.subr.mxu0 0.0
        %736 = vmatpush1.msra.mxu0 0.0
        %737 = vmatprep.subr.mxu0 0.0
        %738 = vmatpush1.msra.mxu0 0.0
        %739 = vmatprep.subr.mxu0 0.0
        %740 = vmatpush1.msra.mxu0 0.0
        %741 = vmatprep.subr.mxu0 0.0
        %742 = vmatpush1.msra.mxu0 0.0
        %743 = vmatprep.subr.mxu0 0.0
        %744 = vmatpush1.msra.mxu0 0.0
        %745 = vmatprep.subr.mxu0 0.0
        %746 = vmatpush1.msra.mxu0 0.0
        %747 = vmatprep.subr.mxu0 0.0
        %748 = vmatpush1.msra.mxu0 0.0
        %749 = vmatprep.subr.mxu0 0.0
        %750 = vmatpush1.msra.mxu0 0.0
        %751 = vmatprep.subr.mxu0 0.0
        %752 = vmatpush1.msra.mxu0 0.0
        %753 = vmatprep.subr.mxu0 0.0
        %754 = vmatpush1.msra.mxu0 0.0
        %755 = vmatprep.subr.mxu0 0.0
        %756 = vmatpush1.msra.mxu0 0.0
        %757 = vmatprep.subr.mxu0 0.0
        %758 = vmatpush1.msra.mxu0 0.0
        %759 = vmatprep.subr.mxu0 0.0
        %760 = vmatpush1.msra.mxu0 0.0
        %761 = vmatprep.subr.mxu0 0.0
        %762 = vmatpush1.msra.mxu0 0.0
        %763 = vmatprep.subr.mxu0 0.0
        %764 = vmatpush1.msra.mxu0 0.0
        %765 = vmatprep.subr.mxu0 0.0
        %766 = vmatpush1.msra.mxu0 0.0
        %767 = vmatprep.subr.mxu0 0.0
        %768 = vmatpush1.msra.mxu0 0.0
        %769 = vmatprep.subr.mxu0 0.0
        %770 = vmatpush1.msra.mxu0 0.0
        %771 = vmatprep.subr.mxu0 0.0
        %772 = vmatpush1.msra.mxu0 0.0
        %773 = vmatprep.subr.mxu0 0.0
        %774 = vmatpush1.msra.mxu0 0.0
        %775 = vmatprep.subr.mxu0 0.0
        %776 = vmatpush1.msra.mxu0 0.0
        %777 = vmatprep.mubr.f32.mxu0 0.0
        %778 = vmatmul.mubr.f32.gmra.mrb[0].mxu0 %v707
        %v779 = vpop.f32.mrb[0].mxu0
        %v780 = vadd.f32 0.0, %v779
        %v781 = vpop.f32.mrb[0].mxu0
        %v782 = vadd.f32 0.0, %v781
        %783 = vdwg.mxu0
        %v784 = vadd.f32 %v697, %v780
        %v785 = vadd.f32 %v699, %v782
        %v786 = vld [vmem:[#allocation2] sm:$0xff]
        %v787 = vld [vmem:[#allocation2 + $0x8] sm:$0xf]
        %s788 = scalar_lea.vmem [#allocation6], 12
        %v789 = vld [vmem:[%s788] sm:$0xf]
        %v792 = vcombine.high %v786, %v786
        %793 = vrot.lane.b32.xlu0 %v786, 112
        %v794 = vpop.permute.xlu0 %793
        %795 = vrot.lane.b32.xlu0 %v792, 112
        %v796 = vpop.permute.xlu0 %795
        %797 = vrot.lane.b32.xlu0 %v787, 112
        %v798 = vpop.permute.xlu0 %797
        %vm799 = vcmask 916480
        %v800 = vsel %vm799, %v794, %v796
        %v801 = vsel %vm799, %v796, %v798
        %v803 = vsel %vm541, %v789, 0
        %v805 = vsel %vm545, %v800, 0
        %v807 = vsel %vm545, %v801, 0
        %809 = vmatprep.subr.mxu0 %v807
        %810 = vmatpush1.msra.mxu0 %v805
        %811 = vmatprep.subr.mxu0 0.0
        %812 = vmatpush1.msra.mxu0 0.0
        %813 = vmatprep.subr.mxu0 0.0
        %814 = vmatpush1.msra.mxu0 0.0
        %815 = vmatprep.subr.mxu0 0.0
        %816 = vmatpush1.msra.mxu0 0.0
        %817 = vmatprep.subr.mxu0 0.0
        %818 = vmatpush1.msra.mxu0 0.0
        %819 = vmatprep.subr.mxu0 0.0
        %820 = vmatpush1.msra.mxu0 0.0
        %821 = vmatprep.subr.mxu0 0.0
        %822 = vmatpush1.msra.mxu0 0.0
        %823 = vmatprep.subr.mxu0 0.0
        %824 = vmatpush1.msra.mxu0 0.0
        %825 = vmatprep.subr.mxu0 0.0
        %826 = vmatpush1.msra.mxu0 0.0
        %827 = vmatprep.subr.mxu0 0.0
        %828 = vmatpush1.msra.mxu0 0.0
        %829 = vmatprep.subr.mxu0 0.0
        %830 = vmatpush1.msra.mxu0 0.0
        %831 = vmatprep.subr.mxu0 0.0
        %832 = vmatpush1.msra.mxu0 0.0
        %833 = vmatprep.subr.mxu0 0.0
        %834 = vmatpush1.msra.mxu0 0.0
        %835 = vmatprep.subr.mxu0 0.0
        %836 = vmatpush1.msra.mxu0 0.0
        %837 = vmatprep.subr.mxu0 0.0
        %838 = vmatpush1.msra.mxu0 0.0
        %839 = vmatprep.subr.mxu0 0.0
        %840 = vmatpush1.msra.mxu0 0.0
        %841 = vmatprep.subr.mxu0 0.0
        %842 = vmatpush1.msra.mxu0 0.0
        %843 = vmatprep.subr.mxu0 0.0
        %844 = vmatpush1.msra.mxu0 0.0
        %845 = vmatprep.subr.mxu0 0.0
        %846 = vmatpush1.msra.mxu0 0.0
        %847 = vmatprep.subr.mxu0 0.0
        %848 = vmatpush1.msra.mxu0 0.0
        %849 = vmatprep.subr.mxu0 0.0
        %850 = vmatpush1.msra.mxu0 0.0
        %851 = vmatprep.subr.mxu0 0.0
        %852 = vmatpush1.msra.mxu0 0.0
        %853 = vmatprep.subr.mxu0 0.0
        %854 = vmatpush1.msra.mxu0 0.0
        %855 = vmatprep.subr.mxu0 0.0
        %856 = vmatpush1.msra.mxu0 0.0
        %857 = vmatprep.subr.mxu0 0.0
        %858 = vmatpush1.msra.mxu0 0.0
        %859 = vmatprep.subr.mxu0 0.0
        %860 = vmatpush1.msra.mxu0 0.0
        %861 = vmatprep.subr.mxu0 0.0
        %862 = vmatpush1.msra.mxu0 0.0
        %863 = vmatprep.subr.mxu0 0.0
        %864 = vmatpush1.msra.mxu0 0.0
        %865 = vmatprep.subr.mxu0 0.0
        %866 = vmatpush1.msra.mxu0 0.0
        %867 = vmatprep.subr.mxu0 0.0
        %868 = vmatpush1.msra.mxu0 0.0
        %869 = vmatprep.subr.mxu0 0.0
        %870 = vmatpush1.msra.mxu0 0.0
        %871 = vmatprep.subr.mxu0 0.0
        %872 = vmatpush1.msra.mxu0 0.0
        %873 = vmatprep.mubr.f32.mxu0 0.0
        %874 = vmatmul.mubr.f32.gmra.mrb[0].mxu0 %v803
        %v875 = vpop.f32.mrb[0].mxu0
        %v876 = vadd.f32 0.0, %v875
        %v877 = vpop.f32.mrb[0].mxu0
        %v878 = vadd.f32 0.0, %v877
        %879 = vdwg.mxu0
        %v880 = vadd.f32 %v784, %v876
        %v881 = vadd.f32 %v785, %v878
        %v882 = vld [vmem:[%s221] sm:$0xff]
        %v883 = vld [vmem:[%s221 + $0x8] sm:$0xf]
        %s884 = scalar_lea.vmem [#allocation6], 16
        %v885 = vld [vmem:[%s884] sm:$0xf]
        %v888 = vcombine.high %v882, %v882
        %889 = vrot.lane.b32.xlu0 %v882, 112
        %v890 = vpop.permute.xlu0 %889
        %891 = vrot.lane.b32.xlu0 %v888, 112
        %v892 = vpop.permute.xlu0 %891
        %893 = vrot.lane.b32.xlu0 %v883, 112
        %v894 = vpop.permute.xlu0 %893
        %v895 = vsel %vm799, %v890, %v892
        %v896 = vsel %vm799, %v892, %v894
        %v898 = vsel %vm541, %v885, 0
        %v900 = vsel %vm545, %v895, 0
        %v902 = vsel %vm545, %v896, 0
        %904 = vmatprep.subr.mxu0 %v902
        %905 = vmatpush1.msra.mxu0 %v900
        %906 = vmatprep.subr.mxu0 0.0
        %907 = vmatpush1.msra.mxu0 0.0
        %908 = vmatprep.subr.mxu0 0.0
        %909 = vmatpush1.msra.mxu0 0.0
        %910 = vmatprep.subr.mxu0 0.0
        %911 = vmatpush1.msra.mxu0 0.0
        %912 = vmatprep.subr.mxu0 0.0
        %913 = vmatpush1.msra.mxu0 0.0
        %914 = vmatprep.subr.mxu0 0.0
        %915 = vmatpush1.msra.mxu0 0.0
        %916 = vmatprep.subr.mxu0 0.0
        %917 = vmatpush1.msra.mxu0 0.0
        %918 = vmatprep.subr.mxu0 0.0
        %919 = vmatpush1.msra.mxu0 0.0
        %920 = vmatprep.subr.mxu0 0.0
        %921 = vmatpush1.msra.mxu0 0.0
        %922 = vmatprep.subr.mxu0 0.0
        %923 = vmatpush1.msra.mxu0 0.0
        %924 = vmatprep.subr.mxu0 0.0
        %925 = vmatpush1.msra.mxu0 0.0
        %926 = vmatprep.subr.mxu0 0.0
        %927 = vmatpush1.msra.mxu0 0.0
        %928 = vmatprep.subr.mxu0 0.0
        %929 = vmatpush1.msra.mxu0 0.0
        %930 = vmatprep.subr.mxu0 0.0
        %931 = vmatpush1.msra.mxu0 0.0
        %932 = vmatprep.subr.mxu0 0.0
        %933 = vmatpush1.msra.mxu0 0.0
        %934 = vmatprep.subr.mxu0 0.0
        %935 = vmatpush1.msra.mxu0 0.0
        %936 = vmatprep.subr.mxu0 0.0
        %937 = vmatpush1.msra.mxu0 0.0
        %938 = vmatprep.subr.mxu0 0.0
        %939 = vmatpush1.msra.mxu0 0.0
        %940 = vmatprep.subr.mxu0 0.0
        %941 = vmatpush1.msra.mxu0 0.0
        %942 = vmatprep.subr.mxu0 0.0
        %943 = vmatpush1.msra.mxu0 0.0
        %944 = vmatprep.subr.mxu0 0.0
        %945 = vmatpush1.msra.mxu0 0.0
        %946 = vmatprep.subr.mxu0 0.0
        %947 = vmatpush1.msra.mxu0 0.0
        %948 = vmatprep.subr.mxu0 0.0
        %949 = vmatpush1.msra.mxu0 0.0
        %950 = vmatprep.subr.mxu0 0.0
        %951 = vmatpush1.msra.mxu0 0.0
        %952 = vmatprep.subr.mxu0 0.0
        %953 = vmatpush1.msra.mxu0 0.0
        %954 = vmatprep.subr.mxu0 0.0
        %955 = vmatpush1.msra.mxu0 0.0
        %956 = vmatprep.subr.mxu0 0.0
        %957 = vmatpush1.msra.mxu0 0.0
        %958 = vmatprep.subr.mxu0 0.0
        %959 = vmatpush1.msra.mxu0 0.0
        %960 = vmatprep.subr.mxu0 0.0
        %961 = vmatpush1.msra.mxu0 0.0
        %962 = vmatprep.subr.mxu0 0.0
        %963 = vmatpush1.msra.mxu0 0.0
        %964 = vmatprep.subr.mxu0 0.0
        %965 = vmatpush1.msra.mxu0 0.0
        %966 = vmatprep.subr.mxu0 0.0
        %967 = vmatpush1.msra.mxu0 0.0
        %968 = vmatprep.mubr.f32.mxu0 0.0
        %969 = vmatmul.mubr.f32.gmra.mrb[0].mxu0 %v898
        %v970 = vpop.f32.mrb[0].mxu0
        %v971 = vadd.f32 0.0, %v970
        %v972 = vpop.f32.mrb[0].mxu0
        %v973 = vadd.f32 0.0, %v972
        %974 = vdwg.mxu0
        %v975 = vadd.f32 %v880, %v971
        %v976 = vadd.f32 %v881, %v973
        %v977 = vld [vmem:[%s234] sm:$0xff]
        %v978 = vld [vmem:[%s234 + $0x8] sm:$0xf]
        %s979 = scalar_lea.vmem [#allocation6], 20
        %v980 = vld [vmem:[%s979] sm:$0xf]
        %v983 = vcombine.high %v977, %v977
        %984 = vrot.lane.b32.xlu0 %v977, 112
        %v985 = vpop.permute.xlu0 %984
        %986 = vrot.lane.b32.xlu0 %v983, 112
        %v987 = vpop.permute.xlu0 %986
        %988 = vrot.lane.b32.xlu0 %v978, 112
        %v989 = vpop.permute.xlu0 %988
        %v990 = vsel %vm799, %v985, %v987
        %v991 = vsel %vm799, %v987, %v989
        %v993 = vsel %vm541, %v980, 0
        %v995 = vsel %vm545, %v990, 0
        %v997 = vsel %vm545, %v991, 0
        %999 = vmatprep.subr.mxu0 %v997
        %1000 = vmatpush1.msra.mxu0 %v995
        %1001 = vmatprep.subr.mxu0 0.0
        %1002 = vmatpush1.msra.mxu0 0.0
        %1003 = vmatprep.subr.mxu0 0.0
        %1004 = vmatpush1.msra.mxu0 0.0
        %1005 = vmatprep.subr.mxu0 0.0
        %1006 = vmatpush1.msra.mxu0 0.0
        %1007 = vmatprep.subr.mxu0 0.0
        %1008 = vmatpush1.msra.mxu0 0.0
        %1009 = vmatprep.subr.mxu0 0.0
        %1010 = vmatpush1.msra.mxu0 0.0
        %1011 = vmatprep.subr.mxu0 0.0
        %1012 = vmatpush1.msra.mxu0 0.0
        %1013 = vmatprep.subr.mxu0 0.0
        %1014 = vmatpush1.msra.mxu0 0.0
        %1015 = vmatprep.subr.mxu0 0.0
        %1016 = vmatpush1.msra.mxu0 0.0
        %1017 = vmatprep.subr.mxu0 0.0
        %1018 = vmatpush1.msra.mxu0 0.0
        %1019 = vmatprep.subr.mxu0 0.0
        %1020 = vmatpush1.msra.mxu0 0.0
        %1021 = vmatprep.subr.mxu0 0.0
        %1022 = vmatpush1.msra.mxu0 0.0
        %1023 = vmatprep.subr.mxu0 0.0
        %1024 = vmatpush1.msra.mxu0 0.0
        %1025 = vmatprep.subr.mxu0 0.0
        %1026 = vmatpush1.msra.mxu0 0.0
        %1027 = vmatprep.subr.mxu0 0.0
        %1028 = vmatpush1.msra.mxu0 0.0
        %1029 = vmatprep.subr.mxu0 0.0
        %1030 = vmatpush1.msra.mxu0 0.0
        %1031 = vmatprep.subr.mxu0 0.0
        %1032 = vmatpush1.msra.mxu0 0.0
        %1033 = vmatprep.subr.mxu0 0.0
        %1034 = vmatpush1.msra.mxu0 0.0
        %1035 = vmatprep.subr.mxu0 0.0
        %1036 = vmatpush1.msra.mxu0 0.0
        %1037 = vmatprep.subr.mxu0 0.0
        %1038 = vmatpush1.msra.mxu0 0.0
        %1039 = vmatprep.subr.mxu0 0.0
        %1040 = vmatpush1.msra.mxu0 0.0
        %1041 = vmatprep.subr.mxu0 0.0
        %1042 = vmatpush1.msra.mxu0 0.0
        %1043 = vmatprep.subr.mxu0 0.0
        %1044 = vmatpush1.msra.mxu0 0.0
        %1045 = vmatprep.subr.mxu0 0.0
        %1046 = vmatpush1.msra.mxu0 0.0
        %1047 = vmatprep.subr.mxu0 0.0
        %1048 = vmatpush1.msra.mxu0 0.0
        %1049 = vmatprep.subr.mxu0 0.0
        %1050 = vmatpush1.msra.mxu0 0.0
        %1051 = vmatprep.subr.mxu0 0.0
        %1052 = vmatpush1.msra.mxu0 0.0
        %1053 = vmatprep.subr.mxu0 0.0
        %1054 = vmatpush1.msra.mxu0 0.0
        %1055 = vmatprep.subr.mxu0 0.0
        %1056 = vmatpush1.msra.mxu0 0.0
        %1057 = vmatprep.subr.mxu0 0.0
        %1058 = vmatpush1.msra.mxu0 0.0
        %1059 = vmatprep.subr.mxu0 0.0
        %1060 = vmatpush1.msra.mxu0 0.0
        %1061 = vmatprep.subr.mxu0 0.0
        %1062 = vmatpush1.msra.mxu0 0.0
        %1063 = vmatprep.mubr.f32.mxu0 0.0
        %1064 = vmatmul.mubr.f32.gmra.mrb[0].mxu0 %v993
        %v1065 = vpop.f32.mrb[0].mxu0
        %v1066 = vadd.f32 0.0, %v1065
        %v1067 = vpop.f32.mrb[0].mxu0
        %v1068 = vadd.f32 0.0, %v1067
        %1069 = vdwg.mxu0
        %v1070 = vadd.f32 %v975, %v1066
        %v1071 = vadd.f32 %v976, %v1068
        %v1072 = vld [vmem:[#allocation2] sm:$0xff]
        %v1073 = vld [vmem:[#allocation2 + $0x8] sm:$0xf]
        %s1074 = scalar_lea.vmem [#allocation6], 24
        %v1075 = vld [vmem:[%s1074] sm:$0xf]
        %v1078 = vcombine.high %v1072, %v1072
        %1079 = vrot.lane.b32.xlu0 %v1072, 96
        %v1080 = vpop.permute.xlu0 %1079
        %1081 = vrot.lane.b32.xlu0 %v1078, 96
        %v1082 = vpop.permute.xlu0 %1081
        %1083 = vrot.lane.b32.xlu0 %v1073, 96
        %v1084 = vpop.permute.xlu0 %1083
        %vm1085 = vcmask 785408
        %v1086 = vsel %vm1085, %v1080, %v1082
        %v1087 = vsel %vm1085, %v1082, %v1084
        %v1089 = vsel %vm541, %v1075, 0
        %v1091 = vsel %vm545, %v1086, 0
        %v1093 = vsel %vm545, %v1087, 0
        %1095 = vmatprep.subr.mxu0 %v1093
        %1096 = vmatpush1.msra.mxu0 %v1091
        %1097 = vmatprep.subr.mxu0 0.0
        %1098 = vmatpush1.msra.mxu0 0.0
        %1099 = vmatprep.subr.mxu0 0.0
        %1100 = vmatpush1.msra.mxu0 0.0
        %1101 = vmatprep.subr.mxu0 0.0
        %1102 = vmatpush1.msra.mxu0 0.0
        %1103 = vmatprep.subr.mxu0 0.0
        %1104 = vmatpush1.msra.mxu0 0.0
        %1105 = vmatprep.subr.mxu0 0.0
        %1106 = vmatpush1.msra.mxu0 0.0
        %1107 = vmatprep.subr.mxu0 0.0
        %1108 = vmatpush1.msra.mxu0 0.0
        %1109 = vmatprep.subr.mxu0 0.0
        %1110 = vmatpush1.msra.mxu0 0.0
        %1111 = vmatprep.subr.mxu0 0.0
        %1112 = vmatpush1.msra.mxu0 0.0
        %1113 = vmatprep.subr.mxu0 0.0
        %1114 = vmatpush1.msra.mxu0 0.0
        %1115 = vmatprep.subr.mxu0 0.0
        %1116 = vmatpush1.msra.mxu0 0.0
        %1117 = vmatprep.subr.mxu0 0.0
        %1118 = vmatpush1.msra.mxu0 0.0
        %1119 = vmatprep.subr.mxu0 0.0
        %1120 = vmatpush1.msra.mxu0 0.0
        %1121 = vmatprep.subr.mxu0 0.0
        %1122 = vmatpush1.msra.mxu0 0.0
        %1123 = vmatprep.subr.mxu0 0.0
        %1124 = vmatpush1.msra.mxu0 0.0
        %1125 = vmatprep.subr.mxu0 0.0
        %1126 = vmatpush1.msra.mxu0 0.0
        %1127 = vmatprep.subr.mxu0 0.0
        %1128 = vmatpush1.msra.mxu0 0.0
        %1129 = vmatprep.subr.mxu0 0.0
        %1130 = vmatpush1.msra.mxu0 0.0
        %1131 = vmatprep.subr.mxu0 0.0
        %1132 = vmatpush1.msra.mxu0 0.0
        %1133 = vmatprep.subr.mxu0 0.0
        %1134 = vmatpush1.msra.mxu0 0.0
        %1135 = vmatprep.subr.mxu0 0.0
        %1136 = vmatpush1.msra.mxu0 0.0
        %1137 = vmatprep.subr.mxu0 0.0
        %1138 = vmatpush1.msra.mxu0 0.0
        %1139 = vmatprep.subr.mxu0 0.0
        %1140 = vmatpush1.msra.mxu0 0.0
        %1141 = vmatprep.subr.mxu0 0.0
        %1142 = vmatpush1.msra.mxu0 0.0
        %1143 = vmatprep.subr.mxu0 0.0
        %1144 = vmatpush1.msra.mxu0 0.0
        %1145 = vmatprep.subr.mxu0 0.0
        %1146 = vmatpush1.msra.mxu0 0.0
        %1147 = vmatprep.subr.mxu0 0.0
        %1148 = vmatpush1.msra.mxu0 0.0
        %1149 = vmatprep.subr.mxu0 0.0
        %1150 = vmatpush1.msra.mxu0 0.0
        %1151 = vmatprep.subr.mxu0 0.0
        %1152 = vmatpush1.msra.mxu0 0.0
        %1153 = vmatprep.subr.mxu0 0.0
        %1154 = vmatpush1.msra.mxu0 0.0
        %1155 = vmatprep.subr.mxu0 0.0
        %1156 = vmatpush1.msra.mxu0 0.0
        %1157 = vmatprep.subr.mxu0 0.0
        %1158 = vmatpush1.msra.mxu0 0.0
        %1159 = vmatprep.mubr.f32.mxu0 0.0
        %1160 = vmatmul.mubr.f32.gmra.mrb[0].mxu0 %v1089
        %v1161 = vpop.f32.mrb[0].mxu0
        %v1162 = vadd.f32 0.0, %v1161
        %v1163 = vpop.f32.mrb[0].mxu0
        %v1164 = vadd.f32 0.0, %v1163
        %1165 = vdwg.mxu0
        %v1166 = vadd.f32 %v1070, %v1162
        %v1167 = vadd.f32 %v1071, %v1164
        %v1168 = vld [vmem:[%s221] sm:$0xff]
        %v1169 = vld [vmem:[%s221 + $0x8] sm:$0xf]
        %s1170 = scalar_lea.vmem [#allocation6], 28
        %v1171 = vld [vmem:[%s1170] sm:$0xf]
        %v1174 = vcombine.high %v1168, %v1168
        %1175 = vrot.lane.b32.xlu0 %v1168, 96
        %v1176 = vpop.permute.xlu0 %1175
        %1177 = vrot.lane.b32.xlu0 %v1174, 96
        %v1178 = vpop.permute.xlu0 %1177
        %1179 = vrot.lane.b32.xlu0 %v1169, 96
        %v1180 = vpop.permute.xlu0 %1179
        %v1181 = vsel %vm1085, %v1176, %v1178
        %v1182 = vsel %vm1085, %v1178, %v1180
        %v1184 = vsel %vm541, %v1171, 0
        %v1186 = vsel %vm545, %v1181, 0
        %v1188 = vsel %vm545, %v1182, 0
        %1190 = vmatprep.subr.mxu0 %v1188
        %1191 = vmatpush1.msra.mxu0 %v1186
        %1192 = vmatprep.subr.mxu0 0.0
        %1193 = vmatpush1.msra.mxu0 0.0
        %1194 = vmatprep.subr.mxu0 0.0
        %1195 = vmatpush1.msra.mxu0 0.0
        %1196 = vmatprep.subr.mxu0 0.0
        %1197 = vmatpush1.msra.mxu0 0.0
        %1198 = vmatprep.subr.mxu0 0.0
        %1199 = vmatpush1.msra.mxu0 0.0
        %1200 = vmatprep.subr.mxu0 0.0
        %1201 = vmatpush1.msra.mxu0 0.0
        %1202 = vmatprep.subr.mxu0 0.0
        %1203 = vmatpush1.msra.mxu0 0.0
        %1204 = vmatprep.subr.mxu0 0.0
        %1205 = vmatpush1.msra.mxu0 0.0
        %1206 = vmatprep.subr.mxu0 0.0
        %1207 = vmatpush1.msra.mxu0 0.0
        %1208 = vmatprep.subr.mxu0 0.0
        %1209 = vmatpush1.msra.mxu0 0.0
        %1210 = vmatprep.subr.mxu0 0.0
        %1211 = vmatpush1.msra.mxu0 0.0
        %1212 = vmatprep.subr.mxu0 0.0
        %1213 = vmatpush1.msra.mxu0 0.0
        %1214 = vmatprep.subr.mxu0 0.0
        %1215 = vmatpush1.msra.mxu0 0.0
        %1216 = vmatprep.subr.mxu0 0.0
        %1217 = vmatpush1.msra.mxu0 0.0
        %1218 = vmatprep.subr.mxu0 0.0
        %1219 = vmatpush1.msra.mxu0 0.0
        %1220 = vmatprep.subr.mxu0 0.0
        %1221 = vmatpush1.msra.mxu0 0.0
        %1222 = vmatprep.subr.mxu0 0.0
        %1223 = vmatpush1.msra.mxu0 0.0
        %1224 = vmatprep.subr.mxu0 0.0
        %1225 = vmatpush1.msra.mxu0 0.0
        %1226 = vmatprep.subr.mxu0 0.0
        %1227 = vmatpush1.msra.mxu0 0.0
        %1228 = vmatprep.subr.mxu0 0.0
        %1229 = vmatpush1.msra.mxu0 0.0
        %1230 = vmatprep.subr.mxu0 0.0
        %1231 = vmatpush1.msra.mxu0 0.0
        %1232 = vmatprep.subr.mxu0 0.0
        %1233 = vmatpush1.msra.mxu0 0.0
        %1234 = vmatprep.subr.mxu0 0.0
        %1235 = vmatpush1.msra.mxu0 0.0
        %1236 = vmatprep.subr.mxu0 0.0
        %1237 = vmatpush1.msra.mxu0 0.0
        %1238 = vmatprep.subr.mxu0 0.0
        %1239 = vmatpush1.msra.mxu0 0.0
        %1240 = vmatprep.subr.mxu0 0.0
        %1241 = vmatpush1.msra.mxu0 0.0
        %1242 = vmatprep.subr.mxu0 0.0
        %1243 = vmatpush1.msra.mxu0 0.0
        %1244 = vmatprep.subr.mxu0 0.0
        %1245 = vmatpush1.msra.mxu0 0.0
        %1246 = vmatprep.subr.mxu0 0.0
        %1247 = vmatpush1.msra.mxu0 0.0
        %1248 = vmatprep.subr.mxu0 0.0
        %1249 = vmatpush1.msra.mxu0 0.0
        %1250 = vmatprep.subr.mxu0 0.0
        %1251 = vmatpush1.msra.mxu0 0.0
        %1252 = vmatprep.subr.mxu0 0.0
        %1253 = vmatpush1.msra.mxu0 0.0
        %1254 = vmatprep.mubr.f32.mxu0 0.0
        %1255 = vmatmul.mubr.f32.gmra.mrb[0].mxu0 %v1184
        %v1256 = vpop.f32.mrb[0].mxu0
        %v1257 = vadd.f32 0.0, %v1256
        %v1258 = vpop.f32.mrb[0].mxu0
        %v1259 = vadd.f32 0.0, %v1258
        %1260 = vdwg.mxu0
        %v1261 = vadd.f32 %v1166, %v1257
        %v1262 = vadd.f32 %v1167, %v1259
        %v1263 = vld [vmem:[%s234] sm:$0xff]
        %v1264 = vld [vmem:[%s234 + $0x8] sm:$0xf]
        %s1265 = scalar_lea.vmem [#allocation6], 32
        %v1266 = vld [vmem:[%s1265] sm:$0xf]
        %v1269 = vcombine.high %v1263, %v1263
        %1270 = vrot.lane.b32.xlu0 %v1263, 96
        %v1271 = vpop.permute.xlu0 %1270
        %1272 = vrot.lane.b32.xlu0 %v1269, 96
        %v1273 = vpop.permute.xlu0 %1272
        %1274 = vrot.lane.b32.xlu0 %v1264, 96
        %v1275 = vpop.permute.xlu0 %1274
        %v1276 = vsel %vm1085, %v1271, %v1273
        %v1277 = vsel %vm1085, %v1273, %v1275
        %v1279 = vsel %vm541, %v1266, 0
        %v1281 = vsel %vm545, %v1276, 0
        %v1283 = vsel %vm545, %v1277, 0
        %1285 = vmatprep.subr.mxu0 %v1283
        %1286 = vmatpush1.msra.mxu0 %v1281
        %1287 = vmatprep.subr.mxu0 0.0
        %1288 = vmatpush1.msra.mxu0 0.0
        %1289 = vmatprep.subr.mxu0 0.0
        %1290 = vmatpush1.msra.mxu0 0.0
        %1291 = vmatprep.subr.mxu0 0.0
        %1292 = vmatpush1.msra.mxu0 0.0
        %1293 = vmatprep.subr.mxu0 0.0
        %1294 = vmatpush1.msra.mxu0 0.0
        %1295 = vmatprep.subr.mxu0 0.0
        %1296 = vmatpush1.msra.mxu0 0.0
        %1297 = vmatprep.subr.mxu0 0.0
        %1298 = vmatpush1.msra.mxu0 0.0
        %1299 = vmatprep.subr.mxu0 0.0
        %1300 = vmatpush1.msra.mxu0 0.0
        %1301 = vmatprep.subr.mxu0 0.0
        %1302 = vmatpush1.msra.mxu0 0.0
        %1303 = vmatprep.subr.mxu0 0.0
        %1304 = vmatpush1.msra.mxu0 0.0
        %1305 = vmatprep.subr.mxu0 0.0
        %1306 = vmatpush1.msra.mxu0 0.0
        %1307 = vmatprep.subr.mxu0 0.0
        %1308 = vmatpush1.msra.mxu0 0.0
        %1309 = vmatprep.subr.mxu0 0.0
        %1310 = vmatpush1.msra.mxu0 0.0
        %1311 = vmatprep.subr.mxu0 0.0
        %1312 = vmatpush1.msra.mxu0 0.0
        %1313 = vmatprep.subr.mxu0 0.0
        %1314 = vmatpush1.msra.mxu0 0.0
        %1315 = vmatprep.subr.mxu0 0.0
        %1316 = vmatpush1.msra.mxu0 0.0
        %1317 = vmatprep.subr.mxu0 0.0
        %1318 = vmatpush1.msra.mxu0 0.0
        %1319 = vmatprep.subr.mxu0 0.0
        %1320 = vmatpush1.msra.mxu0 0.0
        %1321 = vmatprep.subr.mxu0 0.0
        %1322 = vmatpush1.msra.mxu0 0.0
        %1323 = vmatprep.subr.mxu0 0.0
        %1324 = vmatpush1.msra.mxu0 0.0
        %1325 = vmatprep.subr.mxu0 0.0
        %1326 = vmatpush1.msra.mxu0 0.0
        %1327 = vmatprep.subr.mxu0 0.0
        %1328 = vmatpush1.msra.mxu0 0.0
        %1329 = vmatprep.subr.mxu0 0.0
        %1330 = vmatpush1.msra.mxu0 0.0
        %1331 = vmatprep.subr.mxu0 0.0
        %1332 = vmatpush1.msra.mxu0 0.0
        %1333 = vmatprep.subr.mxu0 0.0
        %1334 = vmatpush1.msra.mxu0 0.0
        %1335 = vmatprep.subr.mxu0 0.0
        %1336 = vmatpush1.msra.mxu0 0.0
        %1337 = vmatprep.subr.mxu0 0.0
        %1338 = vmatpush1.msra.mxu0 0.0
        %1339 = vmatprep.subr.mxu0 0.0
        %1340 = vmatpush1.msra.mxu0 0.0
        %1341 = vmatprep.subr.mxu0 0.0
        %1342 = vmatpush1.msra.mxu0 0.0
        %1343 = vmatprep.subr.mxu0 0.0
        %1344 = vmatpush1.msra.mxu0 0.0
        %1345 = vmatprep.subr.mxu0 0.0
        %1346 = vmatpush1.msra.mxu0 0.0
        %1347 = vmatprep.subr.mxu0 0.0
        %1348 = vmatpush1.msra.mxu0 0.0
        %1349 = vmatprep.mubr.f32.mxu0 0.0
        %1350 = vmatmul.mubr.f32.gmra.mrb[0].mxu0 %v1279
        %v1351 = vpop.f32.mrb[0].mxu0
        %v1352 = vadd.f32 0.0, %v1351
        %v1353 = vpop.f32.mrb[0].mxu0
        %v1354 = vadd.f32 0.0, %v1353
        %1355 = vdwg.mxu0
        %v1356 = vadd.f32 %v1261, %v1352
        %v1357 = vadd.f32 %v1262, %v1354
        %v1358 = vsel %vm545, %v1356, 0.0
        %v1359 = vsel %vm545, %v1357, 0.0
        %v1360 = vadd.f32 %v1358, %v1359
        %1361 = vadd.xlane.f32.xlu0 %v1360
        %v1362 = vpop.xlane.xlu0 %1361
        %v1363 = vmul.f32 %v1362, 0.00390625
        %v1364 = vmul.f32 %v1356, %v1356
        %v1365 = vmul.f32 %v1357, %v1357
        %v1366 = vsel %vm545, %v1364, 0.0
        %v1367 = vsel %vm545, %v1365, 0.0
        %v1368 = vadd.f32 %v1366, %v1367
        %1369 = vadd.xlane.f32.xlu0 %v1368
        %v1370 = vpop.xlane.xlu0 %1369
        %v1371 = vmul.f32 %v1370, 0.00390625
        %v1372 = vmul.f32 %v1363, %v1363
        %v1373 = vsub.f32 %v1371, %v1372
        %v1374 = vsub.f32 %v1356, %v1363
        %v1375 = vsub.f32 %v1357, %v1363
        %v1376 = vadd.f32 %v1373, 1e-05
        %v1377 = vrsqrt.pop %v1376
        %v1378 = vmul.f32 %v1374, %v1377
        %v1379 = vmul.f32 %v1375, %v1377
        %v1380 = vmax.f32 %v1378, 0.0
        %v1381 = vmax.f32 %v1379, 0.0
        %1383 = vrot.lane.b32.xlu0 %v1380, 112
        %v1384 = vpop.permute.xlu0 %1383
        %1386 = vst.msk [vmem:[%s221] sm:$0xf] %vm222, %v1384
        %1387 = vrot.lane.b32.xlu0 %v1380, 111
        %v1388 = vpop.permute.xlu0 %1387
        %1390 = vst.msk [vmem:[#allocation2] sm:$0xf] %vm227, %v1388
        %1391 = vrot.lane.b32.xlu0 %v1380, 113
        %v1392 = vpop.permute.xlu0 %1391
        %1394 = vst.msk [vmem:[#allocation2] sm:$0xf] %vm232, %v1392
        %1395 = vst.msk [vmem:[%s234] sm:$0xf] %vm235, %v1388
        %1396 = vst.msk [vmem:[%s234] sm:$0xf] %vm237, %v1392
        %1397 = vrot.lane.b32.xlu0 %v1380, 16
        %v1398 = vpop.permute.xlu0 %1397
        %1400 = vst.msk [vmem:[%s221] sm:$0xf] %vm242, %v1398
        %1401 = vrot.lane.b32.xlu0 %v1380, 15
        %v1402 = vpop.permute.xlu0 %1401
        %1404 = vst.msk [vmem:[#allocation2] sm:$0xf] %vm247, %v1402
        %1405 = vrot.lane.b32.xlu0 %v1380, 17
        %v1406 = vpop.permute.xlu0 %1405
        %1408 = vst.msk [vmem:[#allocation2] sm:$0xf] %vm252, %v1406
        %1409 = vst.msk [vmem:[%s234] sm:$0xf] %vm254, %v1402
        %1410 = vst.msk [vmem:[%s234] sm:$0xf] %vm256, %v1406
        %1411 = vst.msk [vmem:[%s221] sm:$0xf] %vm258, %v1398
        %1412 = vst.msk [vmem:[#allocation2] sm:$0xf] %vm260, %v1402
        %1413 = vst.msk [vmem:[#allocation2] sm:$0xf] %vm262, %v1406
        %1414 = vst.msk [vmem:[%s234] sm:$0xf] %vm264, %v1402
        %1415 = vst.msk [vmem:[%s234] sm:$0xf] %vm266, %v1406
        %1416 = vst.msk [vmem:[%s221] sm:$0xf] %vm268, %v1398
        %1417 = vst.msk [vmem:[#allocation2] sm:$0xf] %vm270, %v1402
        %1418 = vst.msk [vmem:[#allocation2] sm:$0xf] %vm272, %v1406
        %1419 = vst.msk [vmem:[%s234] sm:$0xf] %vm274, %v1402
        %1420 = vst.msk [vmem:[%s234] sm:$0xf] %vm276, %v1406
        %1421 = vst.msk [vmem:[%s221] sm:$0xf] %vm278, %v1398
        %1422 = vst.msk [vmem:[#allocation2] sm:$0xf] %vm280, %v1402
        %1423 = vst.msk [vmem:[#allocation2] sm:$0xf] %vm282, %v1406
        %1424 = vst.msk [vmem:[%s234] sm:$0xf] %vm284, %v1402
        %1425 = vst.msk [vmem:[%s234] sm:$0xf] %vm286, %v1406
        %1426 = vst.msk [vmem:[%s221] sm:$0xf] %vm288, %v1398
        %1427 = vst.msk [vmem:[#allocation2] sm:$0xf] %vm290, %v1402
        %1428 = vst.msk [vmem:[#allocation2] sm:$0xf] %vm292, %v1406
        %1429 = vst.msk [vmem:[%s234] sm:$0xf] %vm294, %v1402
        %1430 = vst.msk [vmem:[%s234] sm:$0xf] %vm296, %v1406
        %1431 = vst.msk [vmem:[%s221] sm:$0xf] %vm298, %v1398
        %1432 = vst.msk [vmem:[#allocation2] sm:$0xf] %vm300, %v1402
        %1433 = vst.msk [vmem:[#allocation2] sm:$0xf] %vm302, %v1406
        %1434 = vst.msk [vmem:[%s234] sm:$0xf] %vm304, %v1402
        %1435 = vst.msk [vmem:[%s234] sm:$0xf] %vm306, %v1406
        %1436 = vst.msk [vmem:[%s221] sm:$0xf] %vm308, %v1398
        %1437 = vst.msk [vmem:[#allocation2] sm:$0xf] %vm310, %v1402
        %1438 = vst.msk [vmem:[#allocation2] sm:$0xf] %vm312, %v1406
        %1439 = vst.msk [vmem:[%s234] sm:$0xf] %vm314, %v1402
        %1440 = vst.msk [vmem:[%s234] sm:$0xf] %vm316, %v1406
        %1441 = vst.msk [vmem:[%s221 + $0x4] sm:$0xf] %vm222, %v1398
        %1442 = vst.msk [vmem:[#allocation2 + $0x4] sm:$0xf] %vm227, %v1402
        %1443 = vst.msk [vmem:[#allocation2 + $0x4] sm:$0xf] %vm232, %v1406
        %1444 = vst.msk [vmem:[%s234 + $0x4] sm:$0xf] %vm235, %v1402
        %1445 = vst.msk [vmem:[%s234 + $0x4] sm:$0xf] %vm237, %v1406
        %1447 = vrot.lane.b32.xlu0 %v1381, 16
        %v1448 = vpop.permute.xlu0 %1447
        %1450 = vst.msk [vmem:[%s221 + $0x4] sm:$0xf] %vm242, %v1448
        %1451 = vrot.lane.b32.xlu0 %v1381, 15
        %v1452 = vpop.permute.xlu0 %1451
        %1454 = vst.msk [vmem:[#allocation2 + $0x4] sm:$0xf] %vm247, %v1452
        %1455 = vrot.lane.b32.xlu0 %v1381, 17
        %v1456 = vpop.permute.xlu0 %1455
        %1458 = vst.msk [vmem:[#allocation2 + $0x4] sm:$0xf] %vm252, %v1456
        %1459 = vst.msk [vmem:[%s234 + $0x4] sm:$0xf] %vm254, %v1452
        %1460 = vst.msk [vmem:[%s234 + $0x4] sm:$0xf] %vm256, %v1456
        %1461 = vst.msk [vmem:[%s221 + $0x4] sm:$0xf] %vm258, %v1448
        %1462 = vst.msk [vmem:[#allocation2 + $0x4] sm:$0xf] %vm260, %v1452
        %1463 = vst.msk [vmem:[#allocation2 + $0x4] sm:$0xf] %vm262, %v1456
        %1464 = vst.msk [vmem:[%s234 + $0x4] sm:$0xf] %vm264, %v1452
        %1465 = vst.msk [vmem:[%s234 + $0x4] sm:$0xf] %vm266, %v1456
        %1466 = vst.msk [vmem:[%s221 + $0x4] sm:$0xf] %vm268, %v1448
        %1467 = vst.msk [vmem:[#allocation2 + $0x4] sm:$0xf] %vm270, %v1452
        %1468 = vst.msk [vmem:[#allocation2 + $0x4] sm:$0xf] %vm272, %v1456
        %1469 = vst.msk [vmem:[%s234 + $0x4] sm:$0xf] %vm274, %v1452
        %1470 = vst.msk [vmem:[%s234 + $0x4] sm:$0xf] %vm276, %v1456
        %1471 = vst.msk [vmem:[%s221 + $0x4] sm:$0xf] %vm278, %v1448
        %1472 = vst.msk [vmem:[#allocation2 + $0x4] sm:$0xf] %vm280, %v1452
        %1473 = vst.msk [vmem:[#allocation2 + $0x4] sm:$0xf] %vm282, %v1456
        %1474 = vst.msk [vmem:[%s234 + $0x4] sm:$0xf] %vm284, %v1452
        %1475 = vst.msk [vmem:[%s234 + $0x4] sm:$0xf] %vm286, %v1456
        %1476 = vst.msk [vmem:[%s221 + $0x4] sm:$0xf] %vm288, %v1448
        %1477 = vst.msk [vmem:[#allocation2 + $0x4] sm:$0xf] %vm290, %v1452
        %1478 = vst.msk [vmem:[#allocation2 + $0x4] sm:$0xf] %vm292, %v1456
        %1479 = vst.msk [vmem:[%s234 + $0x4] sm:$0xf] %vm294, %v1452
        %1480 = vst.msk [vmem:[%s234 + $0x4] sm:$0xf] %vm296, %v1456
        %1481 = vst.msk [vmem:[%s221 + $0x4] sm:$0xf] %vm298, %v1448
        %1482 = vst.msk [vmem:[#allocation2 + $0x4] sm:$0xf] %vm300, %v1452
        %1483 = vst.msk [vmem:[#allocation2 + $0x4] sm:$0xf] %vm302, %v1456
        %1484 = vst.msk [vmem:[%s234 + $0x4] sm:$0xf] %vm304, %v1452
        %1485 = vst.msk [vmem:[%s234 + $0x4] sm:$0xf] %vm306, %v1456
        %1486 = vst.msk [vmem:[%s221 + $0x4] sm:$0xf] %vm308, %v1448
        %1487 = vst.msk [vmem:[#allocation2 + $0x4] sm:$0xf] %vm310, %v1452
        %1488 = vst.msk [vmem:[#allocation2 + $0x4] sm:$0xf] %vm312, %v1456
        %1489 = vst.msk [vmem:[%s234 + $0x4] sm:$0xf] %vm314, %v1452
        %1490 = vst.msk [vmem:[%s234 + $0x4] sm:$0xf] %vm316, %v1456
        %1491 = vst.msk [vmem:[%s221 + $0x8] sm:$0xf] %vm222, %v1448
        %1492 = vst.msk [vmem:[#allocation2 + $0x8] sm:$0xf] %vm227, %v1452
        %1493 = vst.msk [vmem:[#allocation2 + $0x8] sm:$0xf] %vm232, %v1456
        %1494 = vst.msk [vmem:[%s234 + $0x8] sm:$0xf] %vm235, %v1452
        %1495 = vst.msk [vmem:[%s234 + $0x8] sm:$0xf] %vm237, %v1456
        %1496 = vrot.lane.b32.xlu0 %v1381, 48
        %v1497 = vpop.permute.xlu0 %1496
        %1499 = vst.msk [vmem:[%s221 + $0x8] sm:$0xf] %vm242, %v1497
        %1500 = vrot.lane.b32.xlu0 %v1381, 47
        %v1501 = vpop.permute.xlu0 %1500
        %1503 = vst.msk [vmem:[#allocation2 + $0x8] sm:$0xf] %vm247, %v1501
        %1504 = vrot.lane.b32.xlu0 %v1381, 49
        %v1505 = vpop.permute.xlu0 %1504
        %1507 = vst.msk [vmem:[#allocation2 + $0x8] sm:$0xf] %vm252, %v1505
        %1508 = vst.msk [vmem:[%s234 + $0x8] sm:$0xf] %vm254, %v1501
        %1509 = vst.msk [vmem:[%s234 + $0x8] sm:$0xf] %vm256, %v1505
        %v1510 = vld [vmem:[#allocation2] sm:$0xff]
        %v1511 = vld [vmem:[#allocation8] sm:$0xf]
        %v1512 = vld [vmem:[%s221] sm:$0xff]
        %s1513 = scalar_lea.vmem [#allocation8], 4
        %v1514 = vld [vmem:[%s1513] sm:$0xf]
        %v1516 = vcombine.high %v1512, %v1512
        %v1518 = vsel %vm541, %v1514, 0
        %v1520 = vsel %vm545, %v1512, 0
        %v1522 = vsel %vm545, %v1516, 0
        %1524 = vmatprep.subr.mxu0 %v1522
        %1525 = vmatpush1.msra.mxu0 %v1520
        %1526 = vmatprep.subr.mxu0 0.0
        %1527 = vmatpush1.msra.mxu0 0.0
        %1528 = vmatprep.subr.mxu0 0.0
        %1529 = vmatpush1.msra.mxu0 0.0
        %1530 = vmatprep.subr.mxu0 0.0
        %1531 = vmatpush1.msra.mxu0 0.0
        %1532 = vmatprep.subr.mxu0 0.0
        %1533 = vmatpush1.msra.mxu0 0.0
        %1534 = vmatprep.subr.mxu0 0.0
        %1535 = vmatpush1.msra.mxu0 0.0
        %1536 = vmatprep.subr.mxu0 0.0
        %1537 = vmatpush1.msra.mxu0 0.0
        %1538 = vmatprep.subr.mxu0 0.0
        %1539 = vmatpush1.msra.mxu0 0.0
        %1540 = vmatprep.subr.mxu0 0.0
        %1541 = vmatpush1.msra.mxu0 0.0
        %1542 = vmatprep.subr.mxu0 0.0
        %1543 = vmatpush1.msra.mxu0 0.0
        %1544 = vmatprep.subr.mxu0 0.0
        %1545 = vmatpush1.msra.mxu0 0.0
        %1546 = vmatprep.subr.mxu0 0.0
        %1547 = vmatpush1.msra.mxu0 0.0
        %1548 = vmatprep.subr.mxu0 0.0
        %1549 = vmatpush1.msra.mxu0 0.0
        %1550 = vmatprep.subr.mxu0 0.0
        %1551 = vmatpush1.msra.mxu0 0.0
        %1552 = vmatprep.subr.mxu0 0.0
        %1553 = vmatpush1.msra.mxu0 0.0
        %1554 = vmatprep.subr.mxu0 0.0
        %1555 = vmatpush1.msra.mxu0 0.0
        %1556 = vmatprep.subr.mxu0 0.0
        %1557 = vmatpush1.msra.mxu0 0.0
        %1558 = vmatprep.subr.mxu0 0.0
        %1559 = vmatpush1.msra.mxu0 0.0
        %1560 = vmatprep.subr.mxu0 0.0
        %1561 = vmatpush1.msra.mxu0 0.0
        %1562 = vmatprep.subr.mxu0 0.0
        %1563 = vmatpush1.msra.mxu0 0.0
        %1564 = vmatprep.subr.mxu0 0.0
        %1565 = vmatpush1.msra.mxu0 0.0
        %1566 = vmatprep.subr.mxu0 0.0
        %1567 = vmatpush1.msra.mxu0 0.0
        %1568 = vmatprep.subr.mxu0 0.0
        %1569 = vmatpush1.msra.mxu0 0.0
        %1570 = vmatprep.subr.mxu0 0.0
        %1571 = vmatpush1.msra.mxu0 0.0
        %1572 = vmatprep.subr.mxu0 0.0
        %1573 = vmatpush1.msra.mxu0 0.0
        %1574 = vmatprep.subr.mxu0 0.0
        %1575 = vmatpush1.msra.mxu0 0.0
        %1576 = vmatprep.subr.mxu0 0.0
        %1577 = vmatpush1.msra.mxu0 0.0
        %1578 = vmatprep.subr.mxu0 0.0
        %1579 = vmatpush1.msra.mxu0 0.0
        %1580 = vmatprep.subr.mxu0 0.0
        %1581 = vmatpush1.msra.mxu0 0.0
        %1582 = vmatprep.subr.mxu0 0.0
        %1583 = vmatpush1.msra.mxu0 0.0
        %1584 = vmatprep.subr.mxu0 0.0
        %1585 = vmatpush1.msra.mxu0 0.0
        %1586 = vmatprep.subr.mxu0 0.0
        %1587 = vmatpush1.msra.mxu0 0.0
        %1588 = vmatprep.mubr.f32.mxu0 0.0
        %1589 = vmatmul.mubr.f32.gmra.mrb[0].mxu0 %v1518
        %v1590 = vpop.f32.mrb[0].mxu0
        %v1591 = vadd.f32 0.0, %v1590
        %v1592 = vpop.f32.mrb[0].mxu0
        %v1593 = vadd.f32 0.0, %v1592
        %1594 = vdwg.mxu0
        %v1596 = vcombine.high %v1510, %v1510
        %v1598 = vsel %vm541, %v1511, 0
        %v1600 = vsel %vm545, %v1510, 0
        %v1602 = vsel %vm545, %v1596, 0
        %1604 = vmatprep.subr.mxu0 %v1602
        %1605 = vmatpush1.msra.mxu0 %v1600
        %1606 = vmatprep.subr.mxu0 0.0
        %1607 = vmatpush1.msra.mxu0 0.0
        %1608 = vmatprep.subr.mxu0 0.0
        %1609 = vmatpush1.msra.mxu0 0.0
        %1610 = vmatprep.subr.mxu0 0.0
        %1611 = vmatpush1.msra.mxu0 0.0
        %1612 = vmatprep.subr.mxu0 0.0
        %1613 = vmatpush1.msra.mxu0 0.0
        %1614 = vmatprep.subr.mxu0 0.0
        %1615 = vmatpush1.msra.mxu0 0.0
        %1616 = vmatprep.subr.mxu0 0.0
        %1617 = vmatpush1.msra.mxu0 0.0
        %1618 = vmatprep.subr.mxu0 0.0
        %1619 = vmatpush1.msra.mxu0 0.0
        %1620 = vmatprep.subr.mxu0 0.0
        %1621 = vmatpush1.msra.mxu0 0.0
        %1622 = vmatprep.subr.mxu0 0.0
        %1623 = vmatpush1.msra.mxu0 0.0
        %1624 = vmatprep.subr.mxu0 0.0
        %1625 = vmatpush1.msra.mxu0 0.0
        %1626 = vmatprep.subr.mxu0 0.0
        %1627 = vmatpush1.msra.mxu0 0.0
        %1628 = vmatprep.subr.mxu0 0.0
        %1629 = vmatpush1.msra.mxu0 0.0
        %1630 = vmatprep.subr.mxu0 0.0
        %1631 = vmatpush1.msra.mxu0 0.0
        %1632 = vmatprep.subr.mxu0 0.0
        %1633 = vmatpush1.msra.mxu0 0.0
        %1634 = vmatprep.subr.mxu0 0.0
        %1635 = vmatpush1.msra.mxu0 0.0
        %1636 = vmatprep.subr.mxu0 0.0
        %1637 = vmatpush1.msra.mxu0 0.0
        %1638 = vmatprep.subr.mxu0 0.0
        %1639 = vmatpush1.msra.mxu0 0.0
        %1640 = vmatprep.subr.mxu0 0.0
        %1641 = vmatpush1.msra.mxu0 0.0
        %1642 = vmatprep.subr.mxu0 0.0
        %1643 = vmatpush1.msra.mxu0 0.0
        %1644 = vmatprep.subr.mxu0 0.0
        %1645 = vmatpush1.msra.mxu0 0.0
        %1646 = vmatprep.subr.mxu0 0.0
        %1647 = vmatpush1.msra.mxu0 0.0
        %1648 = vmatprep.subr.mxu0 0.0
        %1649 = vmatpush1.msra.mxu0 0.0
        %1650 = vmatprep.subr.mxu0 0.0
        %1651 = vmatpush1.msra.mxu0 0.0
        %1652 = vmatprep.subr.mxu0 0.0
        %1653 = vmatpush1.msra.mxu0 0.0
        %1654 = vmatprep.subr.mxu0 0.0
        %1655 = vmatpush1.msra.mxu0 0.0
        %1656 = vmatprep.subr.mxu0 0.0
        %1657 = vmatpush1.msra.mxu0 0.0
        %1658 = vmatprep.subr.mxu0 0.0
        %1659 = vmatpush1.msra.mxu0 0.0
        %1660 = vmatprep.subr.mxu0 0.0
        %1661 = vmatpush1.msra.mxu0 0.0
        %1662 = vmatprep.subr.mxu0 0.0
        %1663 = vmatpush1.msra.mxu0 0.0
        %1664 = vmatprep.subr.mxu0 0.0
        %1665 = vmatpush1.msra.mxu0 0.0
        %1666 = vmatprep.subr.mxu0 0.0
        %1667 = vmatpush1.msra.mxu0 0.0
        %1668 = vmatprep.mubr.f32.mxu0 0.0
        %1669 = vmatmul.mubr.f32.gmra.mrb[0].mxu0 %v1598
        %v1670 = vpop.f32.mrb[0].mxu0
        %v1671 = vadd.f32 %v1591, %v1670
        %v1672 = vpop.f32.mrb[0].mxu0
        %v1673 = vadd.f32 %v1593, %v1672
        %1674 = vdwg.mxu0
        %v1675 = vld [vmem:[%s234] sm:$0xff]
        %s1676 = scalar_lea.vmem [#allocation8], 8
        %v1677 = vld [vmem:[%s1676] sm:$0xf]
        %v1679 = vcombine.high %v1675, %v1675
        %v1681 = vsel %vm541, %v1677, 0
        %v1683 = vsel %vm545, %v1675, 0
        %v1685 = vsel %vm545, %v1679, 0
        %1687 = vmatprep.subr.mxu0 %v1685
        %1688 = vmatpush1.msra.mxu0 %v1683
        %1689 = vmatprep.subr.mxu0 0.0
        %1690 = vmatpush1.msra.mxu0 0.0
        %1691 = vmatprep.subr.mxu0 0.0
        %1692 = vmatpush1.msra.mxu0 0.0
        %1693 = vmatprep.subr.mxu0 0.0
        %1694 = vmatpush1.msra.mxu0 0.0
        %1695 = vmatprep.subr.mxu0 0.0
        %1696 = vmatpush1.msra.mxu0 0.0
        %1697 = vmatprep.subr.mxu0 0.0
        %1698 = vmatpush1.msra.mxu0 0.0
        %1699 = vmatprep.subr.mxu0 0.0
        %1700 = vmatpush1.msra.mxu0 0.0
        %1701 = vmatprep.subr.mxu0 0.0
        %1702 = vmatpush1.msra.mxu0 0.0
        %1703 = vmatprep.subr.mxu0 0.0
        %1704 = vmatpush1.msra.mxu0 0.0
        %1705 = vmatprep.subr.mxu0 0.0
        %1706 = vmatpush1.msra.mxu0 0.0
        %1707 = vmatprep.subr.mxu0 0.0
        %1708 = vmatpush1.msra.mxu0 0.0
        %1709 = vmatprep.subr.mxu0 0.0
        %1710 = vmatpush1.msra.mxu0 0.0
        %1711 = vmatprep.subr.mxu0 0.0
        %1712 = vmatpush1.msra.mxu0 0.0
        %1713 = vmatprep.subr.mxu0 0.0
        %1714 = vmatpush1.msra.mxu0 0.0
        %1715 = vmatprep.subr.mxu0 0.0
        %1716 = vmatpush1.msra.mxu0 0.0
        %1717 = vmatprep.subr.mxu0 0.0
        %1718 = vmatpush1.msra.mxu0 0.0
        %1719 = vmatprep.subr.mxu0 0.0
        %1720 = vmatpush1.msra.mxu0 0.0
        %1721 = vmatprep.subr.mxu0 0.0
        %1722 = vmatpush1.msra.mxu0 0.0
        %1723 = vmatprep.subr.mxu0 0.0
        %1724 = vmatpush1.msra.mxu0 0.0
        %1725 = vmatprep.subr.mxu0 0.0
        %1726 = vmatpush1.msra.mxu0 0.0
        %1727 = vmatprep.subr.mxu0 0.0
        %1728 = vmatpush1.msra.mxu0 0.0
        %1729 = vmatprep.subr.mxu0 0.0
        %1730 = vmatpush1.msra.mxu0 0.0
        %1731 = vmatprep.subr.mxu0 0.0
        %1732 = vmatpush1.msra.mxu0 0.0
        %1733 = vmatprep.subr.mxu0 0.0
        %1734 = vmatpush1.msra.mxu0 0.0
        %1735 = vmatprep.subr.mxu0 0.0
        %1736 = vmatpush1.msra.mxu0 0.0
        %1737 = vmatprep.subr.mxu0 0.0
        %1738 = vmatpush1.msra.mxu0 0.0
        %1739 = vmatprep.subr.mxu0 0.0
        %1740 = vmatpush1.msra.mxu0 0.0
        %1741 = vmatprep.subr.mxu0 0.0
        %1742 = vmatpush1.msra.mxu0 0.0
        %1743 = vmatprep.subr.mxu0 0.0
        %1744 = vmatpush1.msra.mxu0 0.0
        %1745 = vmatprep.subr.mxu0 0.0
        %1746 = vmatpush1.msra.mxu0 0.0
        %1747 = vmatprep.subr.mxu0 0.0
        %1748 = vmatpush1.msra.mxu0 0.0
        %1749 = vmatprep.subr.mxu0 0.0
        %1750 = vmatpush1.msra.mxu0 0.0
        %1751 = vmatprep.mubr.f32.mxu0 0.0
        %1752 = vmatmul.mubr.f32.gmra.mrb[0].mxu0 %v1681
        %v1753 = vpop.f32.mrb[0].mxu0
        %v1754 = vadd.f32 0.0, %v1753
        %v1755 = vpop.f32.mrb[0].mxu0
        %v1756 = vadd.f32 0.0, %v1755
        %1757 = vdwg.mxu0
        %v1758 = vadd.f32 %v1671, %v1754
        %v1759 = vadd.f32 %v1673, %v1756
        %v1760 = vld [vmem:[#allocation2] sm:$0xff]
        %v1761 = vld [vmem:[#allocation2 + $0x8] sm:$0xf]
        %s1762 = scalar_lea.vmem [#allocation8], 12
        %v1763 = vld [vmem:[%s1762] sm:$0xf]
        %v1766 = vcombine.high %v1760, %v1760
        %1767 = vrot.lane.b32.xlu0 %v1760, 112
        %v1768 = vpop.permute.xlu0 %1767
        %1769 = vrot.lane.b32.xlu0 %v1766, 112
        %v1770 = vpop.permute.xlu0 %1769
        %1771 = vrot.lane.b32.xlu0 %v1761, 112
        %v1772 = vpop.permute.xlu0 %1771
        %v1773 = vsel %vm799, %v1768, %v1770
        %v1774 = vsel %vm799, %v1770, %v1772
        %v1776 = vsel %vm541, %v1763, 0
        %v1778 = vsel %vm545, %v1773, 0
        %v1780 = vsel %vm545, %v1774, 0
        %1782 = vmatprep.subr.mxu0 %v1780
        %1783 = vmatpush1.msra.mxu0 %v1778
        %1784 = vmatprep.subr.mxu0 0.0
        %1785 = vmatpush1.msra.mxu0 0.0
        %1786 = vmatprep.subr.mxu0 0.0
        %1787 = vmatpush1.msra.mxu0 0.0
        %1788 = vmatprep.subr.mxu0 0.0
        %1789 = vmatpush1.msra.mxu0 0.0
        %1790 = vmatprep.subr.mxu0 0.0
        %1791 = vmatpush1.msra.mxu0 0.0
        %1792 = vmatprep.subr.mxu0 0.0
        %1793 = vmatpush1.msra.mxu0 0.0
        %1794 = vmatprep.subr.mxu0 0.0
        %1795 = vmatpush1.msra.mxu0 0.0
        %1796 = vmatprep.subr.mxu0 0.0
        %1797 = vmatpush1.msra.mxu0 0.0
        %1798 = vmatprep.subr.mxu0 0.0
        %1799 = vmatpush1.msra.mxu0 0.0
        %1800 = vmatprep.subr.mxu0 0.0
        %1801 = vmatpush1.msra.mxu0 0.0
        %1802 = vmatprep.subr.mxu0 0.0
        %1803 = vmatpush1.msra.mxu0 0.0
        %1804 = vmatprep.subr.mxu0 0.0
        %1805 = vmatpush1.msra.mxu0 0.0
        %1806 = vmatprep.subr.mxu0 0.0
        %1807 = vmatpush1.msra.mxu0 0.0
        %1808 = vmatprep.subr.mxu0 0.0
        %1809 = vmatpush1.msra.mxu0 0.0
        %1810 = vmatprep.subr.mxu0 0.0
        %1811 = vmatpush1.msra.mxu0 0.0
        %1812 = vmatprep.subr.mxu0 0.0
        %1813 = vmatpush1.msra.mxu0 0.0
        %1814 = vmatprep.subr.mxu0 0.0
        %1815 = vmatpush1.msra.mxu0 0.0
        %1816 = vmatprep.subr.mxu0 0.0
        %1817 = vmatpush1.msra.mxu0 0.0
        %1818 = vmatprep.subr.mxu0 0.0
        %1819 = vmatpush1.msra.mxu0 0.0
        %1820 = vmatprep.subr.mxu0 0.0
        %1821 = vmatpush1.msra.mxu0 0.0
        %1822 = vmatprep.subr.mxu0 0.0
        %1823 = vmatpush1.msra.mxu0 0.0
        %1824 = vmatprep.subr.mxu0 0.0
        %1825 = vmatpush1.msra.mxu0 0.0
        %1826 = vmatprep.subr.mxu0 0.0
        %1827 = vmatpush1.msra.mxu0 0.0
        %1828 = vmatprep.subr.mxu0 0.0
        %1829 = vmatpush1.msra.mxu0 0.0
        %1830 = vmatprep.subr.mxu0 0.0
        %1831 = vmatpush1.msra.mxu0 0.0
        %1832 = vmatprep.subr.mxu0 0.0
        %1833 = vmatpush1.msra.mxu0 0.0
        %1834 = vmatprep.subr.mxu0 0.0
        %1835 = vmatpush1.msra.mxu0 0.0
        %1836 = vmatprep.subr.mxu0 0.0
        %1837 = vmatpush1.msra.mxu0 0.0
        %1838 = vmatprep.subr.mxu0 0.0
        %1839 = vmatpush1.msra.mxu0 0.0
        %1840 = vmatprep.subr.mxu0 0.0
        %1841 = vmatpush1.msra.mxu0 0.0
        %1842 = vmatprep.subr.mxu0 0.0
        %1843 = vmatpush1.msra.mxu0 0.0
        %1844 = vmatprep.subr.mxu0 0.0
        %1845 = vmatpush1.msra.mxu0 0.0
        %1846 = vmatprep.mubr.f32.mxu0 0.0
        %1847 = vmatmul.mubr.f32.gmra.mrb[0].mxu0 %v1776
        %v1848 = vpop.f32.mrb[0].mxu0
        %v1849 = vadd.f32 0.0, %v1848
        %v1850 = vpop.f32.mrb[0].mxu0
        %v1851 = vadd.f32 0.0, %v1850
        %1852 = vdwg.mxu0
        %v1853 = vadd.f32 %v1758, %v1849
        %v1854 = vadd.f32 %v1759, %v1851
        %v1855 = vld [vmem:[%s221] sm:$0xff]
        %v1856 = vld [vmem:[%s221 + $0x8] sm:$0xf]
        %s1857 = scalar_lea.vmem [#allocation8], 16
        %v1858 = vld [vmem:[%s1857] sm:$0xf]
        %v1861 = vcombine.high %v1855, %v1855
        %1862 = vrot.lane.b32.xlu0 %v1855, 112
        %v1863 = vpop.permute.xlu0 %1862
        %1864 = vrot.lane.b32.xlu0 %v1861, 112
        %v1865 = vpop.permute.xlu0 %1864
        %1866 = vrot.lane.b32.xlu0 %v1856, 112
        %v1867 = vpop.permute.xlu0 %1866
        %v1868 = vsel %vm799, %v1863, %v1865
        %v1869 = vsel %vm799, %v1865, %v1867
        %v1871 = vsel %vm541, %v1858, 0
        %v1873 = vsel %vm545, %v1868, 0
        %v1875 = vsel %vm545, %v1869, 0
        %1877 = vmatprep.subr.mxu0 %v1875
        %1878 = vmatpush1.msra.mxu0 %v1873
        %1879 = vmatprep.subr.mxu0 0.0
        %1880 = vmatpush1.msra.mxu0 0.0
        %1881 = vmatprep.subr.mxu0 0.0
        %1882 = vmatpush1.msra.mxu0 0.0
        %1883 = vmatprep.subr.mxu0 0.0
        %1884 = vmatpush1.msra.mxu0 0.0
        %1885 = vmatprep.subr.mxu0 0.0
        %1886 = vmatpush1.msra.mxu0 0.0
        %1887 = vmatprep.subr.mxu0 0.0
        %1888 = vmatpush1.msra.mxu0 0.0
        %1889 = vmatprep.subr.mxu0 0.0
        %1890 = vmatpush1.msra.mxu0 0.0
        %1891 = vmatprep.subr.mxu0 0.0
        %1892 = vmatpush1.msra.mxu0 0.0
        %1893 = vmatprep.subr.mxu0 0.0
        %1894 = vmatpush1.msra.mxu0 0.0
        %1895 = vmatprep.subr.mxu0 0.0
        %1896 = vmatpush1.msra.mxu0 0.0
        %1897 = vmatprep.subr.mxu0 0.0
        %1898 = vmatpush1.msra.mxu0 0.0
        %1899 = vmatprep.subr.mxu0 0.0
        %1900 = vmatpush1.msra.mxu0 0.0
        %1901 = vmatprep.subr.mxu0 0.0
        %1902 = vmatpush1.msra.mxu0 0.0
        %1903 = vmatprep.subr.mxu0 0.0
        %1904 = vmatpush1.msra.mxu0 0.0
        %1905 = vmatprep.subr.mxu0 0.0
        %1906 = vmatpush1.msra.mxu0 0.0
        %1907 = vmatprep.subr.mxu0 0.0
        %1908 = vmatpush1.msra.mxu0 0.0
        %1909 = vmatprep.subr.mxu0 0.0
        %1910 = vmatpush1.msra.mxu0 0.0
        %1911 = vmatprep.subr.mxu0 0.0
        %1912 = vmatpush1.msra.mxu0 0.0
        %1913 = vmatprep.subr.mxu0 0.0
        %1914 = vmatpush1.msra.mxu0 0.0
        %1915 = vmatprep.subr.mxu0 0.0
        %1916 = vmatpush1.msra.mxu0 0.0
        %1917 = vmatprep.subr.mxu0 0.0
        %1918 = vmatpush1.msra.mxu0 0.0
        %1919 = vmatprep.subr.mxu0 0.0
        %1920 = vmatpush1.msra.mxu0 0.0
        %1921 = vmatprep.subr.mxu0 0.0
        %1922 = vmatpush1.msra.mxu0 0.0
        %1923 = vmatprep.subr.mxu0 0.0
        %1924 = vmatpush1.msra.mxu0 0.0
        %1925 = vmatprep.subr.mxu0 0.0
        %1926 = vmatpush1.msra.mxu0 0.0
        %1927 = vmatprep.subr.mxu0 0.0
        %1928 = vmatpush1.msra.mxu0 0.0
        %1929 = vmatprep.subr.mxu0 0.0
        %1930 = vmatpush1.msra.mxu0 0.0
        %1931 = vmatprep.subr.mxu0 0.0
        %1932 = vmatpush1.msra.mxu0 0.0
        %1933 = vmatprep.subr.mxu0 0.0
        %1934 = vmatpush1.msra.mxu0 0.0
        %1935 = vmatprep.subr.mxu0 0.0
        %1936 = vmatpush1.msra.mxu0 0.0
        %1937 = vmatprep.subr.mxu0 0.0
        %1938 = vmatpush1.msra.mxu0 0.0
        %1939 = vmatprep.subr.mxu0 0.0
        %1940 = vmatpush1.msra.mxu0 0.0
        %1941 = vmatprep.mubr.f32.mxu0 0.0
        %1942 = vmatmul.mubr.f32.gmra.mrb[0].mxu0 %v1871
        %v1943 = vpop.f32.mrb[0].mxu0
        %v1944 = vadd.f32 0.0, %v1943
        %v1945 = vpop.f32.mrb[0].mxu0
        %v1946 = vadd.f32 0.0, %v1945
        %1947 = vdwg.mxu0
        %v1948 = vadd.f32 %v1853, %v1944
        %v1949 = vadd.f32 %v1854, %v1946
        %v1950 = vld [vmem:[%s234] sm:$0xff]
        %v1951 = vld [vmem:[%s234 + $0x8] sm:$0xf]
        %s1952 = scalar_lea.vmem [#allocation8], 20
        %v1953 = vld [vmem:[%s1952] sm:$0xf]
        %v1956 = vcombine.high %v1950, %v1950
        %1957 = vrot.lane.b32.xlu0 %v1950, 112
        %v1958 = vpop.permute.xlu0 %1957
        %1959 = vrot.lane.b32.xlu0 %v1956, 112
        %v1960 = vpop.permute.xlu0 %1959
        %1961 = vrot.lane.b32.xlu0 %v1951, 112
        %v1962 = vpop.permute.xlu0 %1961
        %v1963 = vsel %vm799, %v1958, %v1960
        %v1964 = vsel %vm799, %v1960, %v1962
        %v1966 = vsel %vm541, %v1953, 0
        %v1968 = vsel %vm545, %v1963, 0
        %v1970 = vsel %vm545, %v1964, 0
        %1972 = vmatprep.subr.mxu0 %v1970
        %1973 = vmatpush1.msra.mxu0 %v1968
        %1974 = vmatprep.subr.mxu0 0.0
        %1975 = vmatpush1.msra.mxu0 0.0
        %1976 = vmatprep.subr.mxu0 0.0
        %1977 = vmatpush1.msra.mxu0 0.0
        %1978 = vmatprep.subr.mxu0 0.0
        %1979 = vmatpush1.msra.mxu0 0.0
        %1980 = vmatprep.subr.mxu0 0.0
        %1981 = vmatpush1.msra.mxu0 0.0
        %1982 = vmatprep.subr.mxu0 0.0
        %1983 = vmatpush1.msra.mxu0 0.0
        %1984 = vmatprep.subr.mxu0 0.0
        %1985 = vmatpush1.msra.mxu0 0.0
        %1986 = vmatprep.subr.mxu0 0.0
        %1987 = vmatpush1.msra.mxu0 0.0
        %1988 = vmatprep.subr.mxu0 0.0
        %1989 = vmatpush1.msra.mxu0 0.0
        %1990 = vmatprep.subr.mxu0 0.0
        %1991 = vmatpush1.msra.mxu0 0.0
        %1992 = vmatprep.subr.mxu0 0.0
        %1993 = vmatpush1.msra.mxu0 0.0
        %1994 = vmatprep.subr.mxu0 0.0
        %1995 = vmatpush1.msra.mxu0 0.0
        %1996 = vmatprep.subr.mxu0 0.0
        %1997 = vmatpush1.msra.mxu0 0.0
        %1998 = vmatprep.subr.mxu0 0.0
        %1999 = vmatpush1.msra.mxu0 0.0
        %2000 = vmatprep.subr.mxu0 0.0
        %2001 = vmatpush1.msra.mxu0 0.0
        %2002 = vmatprep.subr.mxu0 0.0
        %2003 = vmatpush1.msra.mxu0 0.0
        %2004 = vmatprep.subr.mxu0 0.0
        %2005 = vmatpush1.msra.mxu0 0.0
        %2006 = vmatprep.subr.mxu0 0.0
        %2007 = vmatpush1.msra.mxu0 0.0
        %2008 = vmatprep.subr.mxu0 0.0
        %2009 = vmatpush1.msra.mxu0 0.0
        %2010 = vmatprep.subr.mxu0 0.0
        %2011 = vmatpush1.msra.mxu0 0.0
        %2012 = vmatprep.subr.mxu0 0.0
        %2013 = vmatpush1.msra.mxu0 0.0
        %2014 = vmatprep.subr.mxu0 0.0
        %2015 = vmatpush1.msra.mxu0 0.0
        %2016 = vmatprep.subr.mxu0 0.0
        %2017 = vmatpush1.msra.mxu0 0.0
        %2018 = vmatprep.subr.mxu0 0.0
        %2019 = vmatpush1.msra.mxu0 0.0
        %2020 = vmatprep.subr.mxu0 0.0
        %2021 = vmatpush1.msra.mxu0 0.0
        %2022 = vmatprep.subr.mxu0 0.0
        %2023 = vmatpush1.msra.mxu0 0.0
        %2024 = vmatprep.subr.mxu0 0.0
        %2025 = vmatpush1.msra.mxu0 0.0
        %2026 = vmatprep.subr.mxu0 0.0
        %2027 = vmatpush1.msra.mxu0 0.0
        %2028 = vmatprep.subr.mxu0 0.0
        %2029 = vmatpush1.msra.mxu0 0.0
        %2030 = vmatprep.subr.mxu0 0.0
        %2031 = vmatpush1.msra.mxu0 0.0
        %2032 = vmatprep.subr.mxu0 0.0
        %2033 = vmatpush1.msra.mxu0 0.0
        %2034 = vmatprep.subr.mxu0 0.0
        %2035 = vmatpush1.msra.mxu0 0.0
        %2036 = vmatprep.mubr.f32.mxu0 0.0
        %2037 = vmatmul.mubr.f32.gmra.mrb[0].mxu0 %v1966
        %v2038 = vpop.f32.mrb[0].mxu0
        %v2039 = vadd.f32 0.0, %v2038
        %v2040 = vpop.f32.mrb[0].mxu0
        %v2041 = vadd.f32 0.0, %v2040
        %2042 = vdwg.mxu0
        %v2043 = vadd.f32 %v1948, %v2039
        %v2044 = vadd.f32 %v1949, %v2041
        %v2045 = vld [vmem:[#allocation2] sm:$0xff]
        %v2046 = vld [vmem:[#allocation2 + $0x8] sm:$0xf]
        %s2047 = scalar_lea.vmem [#allocation8], 24
        %v2048 = vld [vmem:[%s2047] sm:$0xf]
        %v2051 = vcombine.high %v2045, %v2045
        %2052 = vrot.lane.b32.xlu0 %v2045, 96
        %v2053 = vpop.permute.xlu0 %2052
        %2054 = vrot.lane.b32.xlu0 %v2051, 96
        %v2055 = vpop.permute.xlu0 %2054
        %2056 = vrot.lane.b32.xlu0 %v2046, 96
        %v2057 = vpop.permute.xlu0 %2056
        %v2058 = vsel %vm1085, %v2053, %v2055
        %v2059 = vsel %vm1085, %v2055, %v2057
        %v2061 = vsel %vm541, %v2048, 0
        %v2063 = vsel %vm545, %v2058, 0
        %v2065 = vsel %vm545, %v2059, 0
        %2067 = vmatprep.subr.mxu0 %v2065
        %2068 = vmatpush1.msra.mxu0 %v2063
        %2069 = vmatprep.subr.mxu0 0.0
        %2070 = vmatpush1.msra.mxu0 0.0
        %2071 = vmatprep.subr.mxu0 0.0
        %2072 = vmatpush1.msra.mxu0 0.0
        %2073 = vmatprep.subr.mxu0 0.0
        %2074 = vmatpush1.msra.mxu0 0.0
        %2075 = vmatprep.subr.mxu0 0.0
        %2076 = vmatpush1.msra.mxu0 0.0
        %2077 = vmatprep.subr.mxu0 0.0
        %2078 = vmatpush1.msra.mxu0 0.0
        %2079 = vmatprep.subr.mxu0 0.0
        %2080 = vmatpush1.msra.mxu0 0.0
        %2081 = vmatprep.subr.mxu0 0.0
        %2082 = vmatpush1.msra.mxu0 0.0
        %2083 = vmatprep.subr.mxu0 0.0
        %2084 = vmatpush1.msra.mxu0 0.0
        %2085 = vmatprep.subr.mxu0 0.0
        %2086 = vmatpush1.msra.mxu0 0.0
        %2087 = vmatprep.subr.mxu0 0.0
        %2088 = vmatpush1.msra.mxu0 0.0
        %2089 = vmatprep.subr.mxu0 0.0
        %2090 = vmatpush1.msra.mxu0 0.0
        %2091 = vmatprep.subr.mxu0 0.0
        %2092 = vmatpush1.msra.mxu0 0.0
        %2093 = vmatprep.subr.mxu0 0.0
        %2094 = vmatpush1.msra.mxu0 0.0
        %2095 = vmatprep.subr.mxu0 0.0
        %2096 = vmatpush1.msra.mxu0 0.0
        %2097 = vmatprep.subr.mxu0 0.0
        %2098 = vmatpush1.msra.mxu0 0.0
        %2099 = vmatprep.subr.mxu0 0.0
        %2100 = vmatpush1.msra.mxu0 0.0
        %2101 = vmatprep.subr.mxu0 0.0
        %2102 = vmatpush1.msra.mxu0 0.0
        %2103 = vmatprep.subr.mxu0 0.0
        %2104 = vmatpush1.msra.mxu0 0.0
        %2105 = vmatprep.subr.mxu0 0.0
        %2106 = vmatpush1.msra.mxu0 0.0
        %2107 = vmatprep.subr.mxu0 0.0
        %2108 = vmatpush1.msra.mxu0 0.0
        %2109 = vmatprep.subr.mxu0 0.0
        %2110 = vmatpush1.msra.mxu0 0.0
        %2111 = vmatprep.subr.mxu0 0.0
        %2112 = vmatpush1.msra.mxu0 0.0
        %2113 = vmatprep.subr.mxu0 0.0
        %2114 = vmatpush1.msra.mxu0 0.0
        %2115 = vmatprep.subr.mxu0 0.0
        %2116 = vmatpush1.msra.mxu0 0.0
        %2117 = vmatprep.subr.mxu0 0.0
        %2118 = vmatpush1.msra.mxu0 0.0
        %2119 = vmatprep.subr.mxu0 0.0
        %2120 = vmatpush1.msra.mxu0 0.0
        %2121 = vmatprep.subr.mxu0 0.0
        %2122 = vmatpush1.msra.mxu0 0.0
        %2123 = vmatprep.subr.mxu0 0.0
        %2124 = vmatpush1.msra.mxu0 0.0
        %2125 = vmatprep.subr.mxu0 0.0
        %2126 = vmatpush1.msra.mxu0 0.0
        %2127 = vmatprep.subr.mxu0 0.0
        %2128 = vmatpush1.msra.mxu0 0.0
        %2129 = vmatprep.subr.mxu0 0.0
        %2130 = vmatpush1.msra.mxu0 0.0
        %2131 = vmatprep.mubr.f32.mxu0 0.0
        %2132 = vmatmul.mubr.f32.gmra.mrb[0].mxu0 %v2061
        %v2133 = vpop.f32.mrb[0].mxu0
        %v2134 = vadd.f32 0.0, %v2133
        %v2135 = vpop.f32.mrb[0].mxu0
        %v2136 = vadd.f32 0.0, %v2135
        %2137 = vdwg.mxu0
        %v2138 = vadd.f32 %v2043, %v2134
        %v2139 = vadd.f32 %v2044, %v2136
        %v2140 = vld [vmem:[%s221] sm:$0xff]
        %v2141 = vld [vmem:[%s221 + $0x8] sm:$0xf]
        %s2142 = scalar_lea.vmem [#allocation8], 28
        %v2143 = vld [vmem:[%s2142] sm:$0xf]
        %v2146 = vcombine.high %v2140, %v2140
        %2147 = vrot.lane.b32.xlu0 %v2140, 96
        %v2148 = vpop.permute.xlu0 %2147
        %2149 = vrot.lane.b32.xlu0 %v2146, 96
        %v2150 = vpop.permute.xlu0 %2149
        %2151 = vrot.lane.b32.xlu0 %v2141, 96
        %v2152 = vpop.permute.xlu0 %2151
        %v2153 = vsel %vm1085, %v2148, %v2150
        %v2154 = vsel %vm1085, %v2150, %v2152
        %v2156 = vsel %vm541, %v2143, 0
        %v2158 = vsel %vm545, %v2153, 0
        %v2160 = vsel %vm545, %v2154, 0
        %2162 = vmatprep.subr.mxu0 %v2160
        %2163 = vmatpush1.msra.mxu0 %v2158
        %2164 = vmatprep.subr.mxu0 0.0
        %2165 = vmatpush1.msra.mxu0 0.0
        %2166 = vmatprep.subr.mxu0 0.0
        %2167 = vmatpush1.msra.mxu0 0.0
        %2168 = vmatprep.subr.mxu0 0.0
        %2169 = vmatpush1.msra.mxu0 0.0
        %2170 = vmatprep.subr.mxu0 0.0
        %2171 = vmatpush1.msra.mxu0 0.0
        %2172 = vmatprep.subr.mxu0 0.0
        %2173 = vmatpush1.msra.mxu0 0.0
        %2174 = vmatprep.subr.mxu0 0.0
        %2175 = vmatpush1.msra.mxu0 0.0
        %2176 = vmatprep.subr.mxu0 0.0
        %2177 = vmatpush1.msra.mxu0 0.0
        %2178 = vmatprep.subr.mxu0 0.0
        %2179 = vmatpush1.msra.mxu0 0.0
        %2180 = vmatprep.subr.mxu0 0.0
        %2181 = vmatpush1.msra.mxu0 0.0
        %2182 = vmatprep.subr.mxu0 0.0
        %2183 = vmatpush1.msra.mxu0 0.0
        %2184 = vmatprep.subr.mxu0 0.0
        %2185 = vmatpush1.msra.mxu0 0.0
        %2186 = vmatprep.subr.mxu0 0.0
        %2187 = vmatpush1.msra.mxu0 0.0
        %2188 = vmatprep.subr.mxu0 0.0
        %2189 = vmatpush1.msra.mxu0 0.0
        %2190 = vmatprep.subr.mxu0 0.0
        %2191 = vmatpush1.msra.mxu0 0.0
        %2192 = vmatprep.subr.mxu0 0.0
        %2193 = vmatpush1.msra.mxu0 0.0
        %2194 = vmatprep.subr.mxu0 0.0
        %2195 = vmatpush1.msra.mxu0 0.0
        %2196 = vmatprep.subr.mxu0 0.0
        %2197 = vmatpush1.msra.mxu0 0.0
        %2198 = vmatprep.subr.mxu0 0.0
        %2199 = vmatpush1.msra.mxu0 0.0
        %2200 = vmatprep.subr.mxu0 0.0
        %2201 = vmatpush1.msra.mxu0 0.0
        %2202 = vmatprep.subr.mxu0 0.0
        %2203 = vmatpush1.msra.mxu0 0.0
        %2204 = vmatprep.subr.mxu0 0.0
        %2205 = vmatpush1.msra.mxu0 0.0
        %2206 = vmatprep.subr.mxu0 0.0
        %2207 = vmatpush1.msra.mxu0 0.0
        %2208 = vmatprep.subr.mxu0 0.0
        %2209 = vmatpush1.msra.mxu0 0.0
        %2210 = vmatprep.subr.mxu0 0.0
        %2211 = vmatpush1.msra.mxu0 0.0
        %2212 = vmatprep.subr.mxu0 0.0
        %2213 = vmatpush1.msra.mxu0 0.0
        %2214 = vmatprep.subr.mxu0 0.0
        %2215 = vmatpush1.msra.mxu0 0.0
        %2216 = vmatprep.subr.mxu0 0.0
        %2217 = vmatpush1.msra.mxu0 0.0
        %2218 = vmatprep.subr.mxu0 0.0
        %2219 = vmatpush1.msra.mxu0 0.0
        %2220 = vmatprep.subr.mxu0 0.0
        %2221 = vmatpush1.msra.mxu0 0.0
        %2222 = vmatprep.subr.mxu0 0.0
        %2223 = vmatpush1.msra.mxu0 0.0
        %2224 = vmatprep.subr.mxu0 0.0
        %2225 = vmatpush1.msra.mxu0 0.0
        %2226 = vmatprep.mubr.f32.mxu0 0.0
        %2227 = vmatmul.mubr.f32.gmra.mrb[0].mxu0 %v2156
        %v2228 = vpop.f32.mrb[0].mxu0
        %v2229 = vadd.f32 0.0, %v2228
        %v2230 = vpop.f32.mrb[0].mxu0
        %v2231 = vadd.f32 0.0, %v2230
        %2232 = vdwg.mxu0
        %v2233 = vadd.f32 %v2138, %v2229
        %v2234 = vadd.f32 %v2139, %v2231
        %v2235 = vld [vmem:[%s234] sm:$0xff]
        %v2236 = vld [vmem:[%s234 + $0x8] sm:$0xf]
        %s2237 = scalar_lea.vmem [#allocation8], 32
        %v2238 = vld [vmem:[%s2237] sm:$0xf]
        %v2241 = vcombine.high %v2235, %v2235
        %2242 = vrot.lane.b32.xlu0 %v2235, 96
        %v2243 = vpop.permute.xlu0 %2242
        %2244 = vrot.lane.b32.xlu0 %v2241, 96
        %v2245 = vpop.permute.xlu0 %2244
        %2246 = vrot.lane.b32.xlu0 %v2236, 96
        %v2247 = vpop.permute.xlu0 %2246
        %v2248 = vsel %vm1085, %v2243, %v2245
        %v2249 = vsel %vm1085, %v2245, %v2247
        %v2251 = vsel %vm541, %v2238, 0
        %v2253 = vsel %vm545, %v2248, 0
        %v2255 = vsel %vm545, %v2249, 0
        %2257 = vmatprep.subr.mxu0 %v2255
        %2258 = vmatpush1.msra.mxu0 %v2253
        %2259 = vmatprep.subr.mxu0 0.0
        %2260 = vmatpush1.msra.mxu0 0.0
        %2261 = vmatprep.subr.mxu0 0.0
        %2262 = vmatpush1.msra.mxu0 0.0
        %2263 = vmatprep.subr.mxu0 0.0
        %2264 = vmatpush1.msra.mxu0 0.0
        %2265 = vmatprep.subr.mxu0 0.0
        %2266 = vmatpush1.msra.mxu0 0.0
        %2267 = vmatprep.subr.mxu0 0.0
        %2268 = vmatpush1.msra.mxu0 0.0
        %2269 = vmatprep.subr.mxu0 0.0
        %2270 = vmatpush1.msra.mxu0 0.0
        %2271 = vmatprep.subr.mxu0 0.0
        %2272 = vmatpush1.msra.mxu0 0.0
        %2273 = vmatprep.subr.mxu0 0.0
        %2274 = vmatpush1.msra.mxu0 0.0
        %2275 = vmatprep.subr.mxu0 0.0
        %2276 = vmatpush1.msra.mxu0 0.0
        %2277 = vmatprep.subr.mxu0 0.0
        %2278 = vmatpush1.msra.mxu0 0.0
        %2279 = vmatprep.subr.mxu0 0.0
        %2280 = vmatpush1.msra.mxu0 0.0
        %2281 = vmatprep.subr.mxu0 0.0
        %2282 = vmatpush1.msra.mxu0 0.0
        %2283 = vmatprep.subr.mxu0 0.0
        %2284 = vmatpush1.msra.mxu0 0.0
        %2285 = vmatprep.subr.mxu0 0.0
        %2286 = vmatpush1.msra.mxu0 0.0
        %2287 = vmatprep.subr.mxu0 0.0
        %2288 = vmatpush1.msra.mxu0 0.0
        %2289 = vmatprep.subr.mxu0 0.0
        %2290 = vmatpush1.msra.mxu0 0.0
        %2291 = vmatprep.subr.mxu0 0.0
        %2292 = vmatpush1.msra.mxu0 0.0
        %2293 = vmatprep.subr.mxu0 0.0
        %2294 = vmatpush1.msra.mxu0 0.0
        %2295 = vmatprep.subr.mxu0 0.0
        %2296 = vmatpush1.msra.mxu0 0.0
        %2297 = vmatprep.subr.mxu0 0.0
        %2298 = vmatpush1.msra.mxu0 0.0
        %2299 = vmatprep.subr.mxu0 0.0
        %2300 = vmatpush1.msra.mxu0 0.0
        %2301 = vmatprep.subr.mxu0 0.0
        %2302 = vmatpush1.msra.mxu0 0.0
        %2303 = vmatprep.subr.mxu0 0.0
        %2304 = vmatpush1.msra.mxu0 0.0
        %2305 = vmatprep.subr.mxu0 0.0
        %2306 = vmatpush1.msra.mxu0 0.0
        %2307 = vmatprep.subr.mxu0 0.0
        %2308 = vmatpush1.msra.mxu0 0.0
        %2309 = vmatprep.subr.mxu0 0.0
        %2310 = vmatpush1.msra.mxu0 0.0
        %2311 = vmatprep.subr.mxu0 0.0
        %2312 = vmatpush1.msra.mxu0 0.0
        %2313 = vmatprep.subr.mxu0 0.0
        %2314 = vmatpush1.msra.mxu0 0.0
        %2315 = vmatprep.subr.mxu0 0.0
        %2316 = vmatpush1.msra.mxu0 0.0
        %2317 = vmatprep.subr.mxu0 0.0
        %2318 = vmatpush1.msra.mxu0 0.0
        %2319 = vmatprep.subr.mxu0 0.0
        %2320 = vmatpush1.msra.mxu0 0.0
        %2321 = vmatprep.mubr.f32.mxu0 0.0
        %2322 = vmatmul.mubr.f32.gmra.mrb[0].mxu0 %v2251
        %v2323 = vpop.f32.mrb[0].mxu0
        %v2324 = vadd.f32 0.0, %v2323
        %v2325 = vpop.f32.mrb[0].mxu0
        %v2326 = vadd.f32 0.0, %v2325
        %2327 = vdwg.mxu0
        %v2328 = vadd.f32 %v2233, %v2324
        %v2329 = vadd.f32 %v2234, %v2326
        %v2330 = vsel %vm545, %v2328, 0.0
        %v2331 = vsel %vm545, %v2329, 0.0
        %v2332 = vadd.f32 %v2330, %v2331
        %2333 = vadd.xlane.f32.xlu0 %v2332
        %v2334 = vpop.xlane.xlu0 %2333
        %v2335 = vmul.f32 %v2334, 0.00390625
        %v2336 = vmul.f32 %v2328, %v2328
        %v2337 = vmul.f32 %v2329, %v2329
        %v2338 = vsel %vm545, %v2336, 0.0
        %v2339 = vsel %vm545, %v2337, 0.0
        %v2340 = vadd.f32 %v2338, %v2339
        %2341 = vadd.xlane.f32.xlu0 %v2340
        %v2342 = vpop.xlane.xlu0 %2341
        %v2343 = vmul.f32 %v2342, 0.00390625
        %v2344 = vmul.f32 %v2335, %v2335
        %v2345 = vsub.f32 %v2343, %v2344
        %v2346 = vsub.f32 %v2328, %v2335
        %v2347 = vsub.f32 %v2329, %v2335
        %v2348 = vadd.f32 %v2345, 1e-05
        %v2349 = vrsqrt.pop %v2348
        %v2350 = vmul.f32 %v2346, %v2349
        %v2351 = vmul.f32 %v2347, %v2349
        %v2354 = vcombine.low %v2350, %v2351
        %v2356 = vadd.f32 %v216, %v2354
        %2357 = vst [vmem:[%s215] sm:$0xff] %v2356
        %s2358 = sand.u32 %s97, 1
        %s2359 = scalar_lea.sflag [#allocation5], %s2358
        %s2360 = sand.u32 %s97, 1
        %s2361 = smul.addr %s2360, 8
        %s2362 = scalar_lea.vmem [#allocation9], %s2361
        // Predicated region
        $region45: #{tpu_custom_call.1} parent=31 // pred_check
          %p2363 = pneg %p107
        $region46: #{tpu_custom_call.1} parent=31 // pred_check_branch
          %2365 = sbr.rel (%p2363) target = $region48
        $region47: #{tpu_custom_call.1} parent=31 // pred_region
          %s2367 = ssub.s32 128, 128
          %2368 = vsyncadd %s2359, %s2367
          %s2369 = smul.addr %s21, 2
          %s2370 = smul.addr %s2369, 64
          %s2371 = scalar_lea.hbm %s3, %s2370
          %s2373 = sshll.u32 %s2362, 4
          %s2374 = int_to_ptr.vmem [resolvable:$true] %s2373
          %2376 = dma.vmem_to_hbm [thread:$0]  %s2374, 128, %s2371, %s2359
        $region48: #{tpu_custom_call.1} parent=31 // pred_fallthru
          _
      $region32: #{tpu_custom_call.1} parent=5 // pred_fallthru
        _
      %p2377 = scmp.le.s32.totalorder 2, %s16
      // Predicated region
      $region49: #{tpu_custom_call.1} parent=5 // pred_check
        %p2378 = pneg %p2377
      $region50: #{tpu_custom_call.1} parent=5 // pred_check_branch
        %2380 = sbr.rel (%p2378) target = $region52
      $region51: #{tpu_custom_call.1} parent=5 // pred_region
        %s2381 = ssub.s32 %s16, 2
        // Predicated region
        $region53: #{tpu_custom_call.1} parent=51 // pred_check
          %p2382 = pneg %p113
        $region54: #{tpu_custom_call.1} parent=51 // pred_check_branch
          %2384 = sbr.rel (%p2382) target = $region56
        $region55: #{tpu_custom_call.1} parent=51 // pred_region
          %s2385 = sand.u32 %s98, 1
          %s2386 = scalar_lea.sflag [#allocation5], %s2385
          %s2387 = sand.u32 %s98, 1
          %s2388 = smul.addr %s2387, 8
          %s2389 = scalar_lea.vmem [#allocation9], %s2388
          %2390 = dma.done %s2386, 128
        $region56: #{tpu_custom_call.1} parent=51 // pred_fallthru
          _
      $region52: #{tpu_custom_call.1} parent=5 // pred_fallthru
        _
    $region6: #{tpu_custom_call.1} parent=1 // loop_footer
      %s20 = sadd.s32 1, %s16
    $region7: #{tpu_custom_call.1} parent=1 // loop_footer_branch
      %15 = sbr.rel target = $region3
    $region8: #{tpu_custom_call.1} parent=1 // loop_exit
      _
    %2391 = vsyncpa [#allocation4], 1
    %s2392 = scalar_lea.sflag [#allocation4], 1
    %2393 = vsyncpa %s2392, 1
    %2394 = vsyncpa [#allocation7], 1
    %2395 = vsyncpa [#allocation5], 1
    %s2396 = scalar_lea.sflag [#allocation5], 1
    %2397 = vsyncpa %s2396, 1

</llo_original>
